<compile_context>
chip_gen: v7x
topology: tpu7x:2x2x1
jax: 0.10.0
libtpu: 0.0.40
codegen_flags: <defaults>
</compile_context>

<pallas_src>
import jax
import jax.numpy as jnp
import numpy as np
from jax.experimental import pallas as pl
from jax.experimental.pallas import tpu as pltpu


def _round_up(x, m):
    return (x + m - 1) // m * m


# ---------------------------------------------------------------------------
# Fused kernel:
#   out[i-block, :] = dis[i] * sum_k A_count[i-block, k-block]
#                                  @ ((x[k-block, :] @ W) * dis[k]) + bias
# grid = (Np/T rows, Np/T reduction); reduction axis last ("arbitrary").
# Output block index is constant over k -> f32 tile stays resident in VMEM and
# is accumulated into directly (no scratch).
# ---------------------------------------------------------------------------
def _fused_gcn_kernel(a_ref, x_ref, w_ref, dis_src_ref, dis_tgt_ref, b_ref,
                      o_ref):
    k = pl.program_id(1)

    @pl.when(k == 0)
    def _():
        o_ref[...] = jnp.zeros_like(o_ref)

    # Tiny per-block projection + source-degree scale (C_in << Cp, f32 acc),
    # then round to bf16 so the big matmul is a single-pass bf16 x bf16 MXU op.
    xw = jnp.dot(x_ref[...], w_ref[...], preferred_element_type=jnp.float32)
    xw = (xw * dis_src_ref[...]).astype(jnp.bfloat16)

    # A holds small exact integer edge counts in bf16 (exact for counts <= 256);
    # feed it to the MXU directly -- no f32 upcast of the tile.
    o_ref[...] += jnp.dot(a_ref[...], xw, preferred_element_type=jnp.float32)

    @pl.when(k == pl.num_programs(1) - 1)
    def _():
        o_ref[...] = o_ref[...] * dis_tgt_ref[...] + b_ref[...]


def node_model_additive(x, edge_index, weight_node, bias, *, tile=512):
    """JAX/Pallas equivalent of NodeModelAdditive.forward with defaults."""
    N, C_in = x.shape
    C_out = weight_node.shape[1]
    row = edge_index[0].astype(jnp.int32)   # source nodes
    col = edge_index[1].astype(jnp.int32)   # target nodes
    E = row.shape[0]

    # ---- padded sizes: lane-dense output, MXU/tile-aligned node axis ----
    Cp = _round_up(C_out, 128)                       # lane-dense output width
    T = min(_round_up(tile, 128), _round_up(N, 128)) # tile, multiple of 128
    Np = _round_up(N, T)                             # padded node count

    # ---- glue: 'sm' degree normalization (out-degree of sources) ----
    ones = jnp.ones((E,), jnp.float32)
    deg = jax.ops.segment_sum(ones, row, num_segments=Np)          # (Np,)
    dis = jnp.power(deg, -0.5)
    dis = jnp.where(jnp.isinf(dis), 0.0, dis).astype(jnp.float32)
    dis = dis.reshape(Np, 1)

    # ---- glue: adjacency as raw edge counts (normalization factored out) ----
    # Counts are small exact integers -> exact in bf16 for multiplicity <= 256,
    # halving the dominant HBM stream of the aggregation matmul.
    # TODO(synk): for realistically sparse graphs (E << N^2) replace this
    # densification with a CSR / scalar-prefetch gather + segment-accumulate
    # kernel (PrefetchScalarGridSpec); the dense path is only sensible when
    # E ~ N^2 and Np^2 fits HBM.
    a = (jnp.zeros((Np, Np), jnp.float32)
            .at[col, row].add(1.0)
            .astype(jnp.bfloat16))                                  # (Np, Np)

    # ---- padded operands ----
    x_p = jnp.zeros((Np, C_in), jnp.float32).at[:N, :].set(
        x.astype(jnp.float32))
    w_p = jnp.zeros((C_in, Cp), jnp.float32).at[:, :C_out].set(
        weight_node.astype(jnp.float32))
    b_p = jnp.zeros((1, Cp), jnp.float32).at[0, :C_out].set(
        bias.astype(jnp.float32))

    grid = (Np // T, Np // T)
    out = pl.pallas_call(
        _fused_gcn_kernel,
        out_shape=jax.ShapeDtypeStruct((Np, Cp), jnp.float32),
        grid=grid,
        in_specs=[
            pl.BlockSpec((T, T), lambda i, k: (i, k)),      # A tile (bf16 counts)
            pl.BlockSpec((T, C_in), lambda i, k: (k, 0)),   # X rows of source block
            pl.BlockSpec((C_in, Cp), lambda i, k: (0, 0)),  # W (resident)
            pl.BlockSpec((T, 1), lambda i, k: (k, 0)),      # dis for source rows
            pl.BlockSpec((T, 1), lambda i, k: (i, 0)),      # dis for target rows
            pl.BlockSpec((1, Cp), lambda i, k: (0, 0)),     # bias (resident)
        ],
        out_specs=pl.BlockSpec((T, Cp), lambda i, k: (i, 0)),   # resident f32 acc
        compiler_params=pltpu.CompilerParams(
            dimension_semantics=("parallel", "arbitrary")),
    )(a, x_p, w_p, dis, dis, b_p)

    return out[:N, :C_out].astype(x.dtype)


def _reference(x, edge_index, weight_node, bias):
    """Pure-JAX reference mirroring the PyTorch forward literally."""
    N = x.shape[0]
    row, col = edge_index[0], edge_index[1]
    xw = x @ weight_node
    ones = jnp.ones((row.shape[0],), dtype=x.dtype)
    deg = jax.ops.segment_sum(ones, row, num_segments=N)
    dis = jnp.power(deg, -0.5)
    dis = jnp.where(jnp.isinf(dis), jnp.zeros_like(dis), dis)
    norm = dis[row] * dis[col]
    x_j = xw[row] * norm[:, None]
    out = jax.ops.segment_sum(x_j, col, num_segments=N) + bias
    return out


if __name__ == "__main__":
    key = jax.random.PRNGKey(0)
    k_x, k_w, k_b, k_src, k_tgt = jax.random.split(key, 5)

    # Small graph: N nodes, E edges, C_in -> C_out features.
    # N=640 pads to 1024 with tile=512 -> a real (2, 2) grid is exercised
    # (and both TensorCores get a row tile on v7x).
    N, E, C_in, C_out = 640, 2560, 8, 32

    x = jax.random.normal(k_x, (N, C_in), dtype=jnp.float32)
    edge_index = jnp.stack([
        jax.random.randint(k_src, (E,), 0, N, dtype=jnp.int32),
        jax.random.randint(k_tgt, (E,), 0, N, dtype=jnp.int32),
    ], axis=0)  # (2, E)

    # Deterministic parameters matching the PyTorch module shapes:
    #   weight_node: (C_in, C_out) glorot-uniform, bias: (C_out,).
    limit = float(np.sqrt(6.0 / (C_in + C_out)))
    weight_node = jax.random.uniform(k_w, (C_in, C_out), jnp.float32,
                                     minval=-limit, maxval=limit)
    bias = jax.random.uniform(k_b, (C_out,), jnp.float32,
                              minval=-0.1, maxval=0.1)

    out = node_model_additive(x, edge_index, weight_node, bias)
    out = jax.block_until_ready(out)

    ref = _reference(x, edge_index, weight_node, bias)
    # XW is rounded to bf16 before the aggregation matmul (per perf review);
    # accumulation is f32, so the error is ~bf16 rounding of the messages.
    np.testing.assert_allclose(np.asarray(out), np.asarray(ref),
                               rtol=2e-2, atol=2e-2)
    print("KERNEL_OK")
</pallas_src>

<mosaic_0001>
module attributes {stable_mosaic.version = 11 : i64} {
  func.func @_fused_gcn_kernel(%arg0: i32, %arg1: i32, %arg2: memref<512x512xbf16, #tpu.memory_space<vmem>>, %arg3: memref<512x8xf32, #tpu.memory_space<vmem>>, %arg4: memref<8x128xf32, #tpu.memory_space<vmem>>, %arg5: memref<512x1xf32, #tpu.memory_space<vmem>>, %arg6: memref<512x1xf32, #tpu.memory_space<vmem>>, %arg7: memref<1x128xf32, #tpu.memory_space<vmem>>, %arg8: memref<512x128xf32, #tpu.memory_space<vmem>>) attributes {dimension_semantics = [#tpu.dimension_semantics<parallel>, #tpu.dimension_semantics<arbitrary>], iteration_bounds = array<i64: 2, 2>, scalar_prefetch = 0 : i64, scratch_operands = 0 : i64, tpu.core_type = #tpu.core_type<tc>, window_params = [{transform_indices = @transform_0, window_bounds = array<i64: 512, 512>}, {transform_indices = @transform_1, window_bounds = array<i64: 512, 8>}, {pipeline_mode = #tpu.pipeline_mode<synchronous>, transform_indices = @transform_2, window_bounds = array<i64: 8, 128>}, {transform_indices = @transform_3, window_bounds = array<i64: 512, 1>}, {transform_indices = @transform_4, window_bounds = array<i64: 512, 1>}, {pipeline_mode = #tpu.pipeline_mode<synchronous>, transform_indices = @transform_5, window_bounds = array<i64: 1, 128>}, {transform_indices = @transform_6, window_bounds = array<i64: 512, 128>}]} {
    %c0_i32 = arith.constant 0 : i32
    %0 = arith.cmpi eq, %arg1, %c0_i32 : i32
    %1 = arith.extui %0 : i1 to i32
    %c0_i32_0 = arith.constant 0 : i32
    %2 = arith.cmpi ne, %1, %c0_i32_0 : i32
    scf.if %2 {
      %cst_14 = arith.constant 0.000000e+00 : f32
      %18 = vector.broadcast %cst_14 : f32 to vector<512x128xf32>
      %c0_15 = arith.constant 0 : index
      %c0_16 = arith.constant 0 : index
      %19 = vector.load %arg8[%c0_15, %c0_16] : memref<512x128xf32, #tpu.memory_space<vmem>>, vector<512x128xf32>
      tpu.vector_store %arg8[%c0_15, %c0_16], %18 {strides = array<i32>} : memref<512x128xf32, #tpu.memory_space<vmem>>, vector<512x128xf32>,
    } else {
    }
    %c0 = arith.constant 0 : index
    %c0_1 = arith.constant 0 : index
    %3 = vector.load %arg3[%c0, %c0_1] : memref<512x8xf32, #tpu.memory_space<vmem>>, vector<512x8xf32>
    %c0_2 = arith.constant 0 : index
    %c0_3 = arith.constant 0 : index
    %4 = vector.load %arg4[%c0_2, %c0_3] : memref<8x128xf32, #tpu.memory_space<vmem>>, vector<8x128xf32>
    %cst = arith.constant dense<0.000000e+00> : vector<512x128xf32>
    %5 = tpu.matmul %3, %4, %cst {dimension_numbers = #tpu.dot_dimension_numbers<[1], [0], [0], [1], [0, 0, 1, 1], [], []>} : vector<512x8xf32>, vector<8x128xf32>, vector<512x128xf32> -> vector<512x128xf32>
    %c0_4 = arith.constant 0 : index
    %c0_5 = arith.constant 0 : index
    %6 = vector.load %arg5[%c0_4, %c0_5] : memref<512x1xf32, #tpu.memory_space<vmem>>, vector<512x1xf32>
    %7 = vector.broadcast %6 : vector<512x1xf32> to vector<512x128xf32>
    %8 = arith.mulf %5, %7 : vector<512x128xf32>
    %9 = arith.truncf %8 : vector<512x128xf32> to vector<512x128xbf16>
    %c0_6 = arith.constant 0 : index
    %c0_7 = arith.constant 0 : index
    %10 = vector.load %arg8[%c0_6, %c0_7] : memref<512x128xf32, #tpu.memory_space<vmem>>, vector<512x128xf32>
    %c0_8 = arith.constant 0 : index
    %c0_9 = arith.constant 0 : index
    %11 = vector.load %arg2[%c0_8, %c0_9] : memref<512x512xbf16, #tpu.memory_space<vmem>>, vector<512x512xbf16>
    %cst_10 = arith.constant dense<0.000000e+00> : vector<512x128xf32>
    %12 = tpu.matmul %11, %9, %cst_10 {dimension_numbers = #tpu.dot_dimension_numbers<[1], [0], [0], [1], [0, 0, 1, 1], [], []>} : vector<512x512xbf16>, vector<512x128xbf16>, vector<512x128xf32> -> vector<512x128xf32>
    %13 = arith.addf %10, %12 : vector<512x128xf32>
    %c0_11 = arith.constant 0 : index
    %c0_12 = arith.constant 0 : index
    %14 = vector.load %arg8[%c0_11, %c0_12] : memref<512x128xf32, #tpu.memory_space<vmem>>, vector<512x128xf32>
    tpu.vector_store %arg8[%c0_11, %c0_12], %13 {strides = array<i32>} : memref<512x128xf32, #tpu.memory_space<vmem>>, vector<512x128xf32>,
    %c1_i32 = arith.constant 1 : i32
    %15 = arith.cmpi eq, %arg1, %c1_i32 : i32
    %16 = arith.extui %15 : i1 to i32
    %c0_i32_13 = arith.constant 0 : i32
    %17 = arith.cmpi ne, %16, %c0_i32_13 : i32
    scf.if %17 {
      %c0_14 = arith.constant 0 : index
      %c0_15 = arith.constant 0 : index
      %18 = vector.load %arg8[%c0_14, %c0_15] : memref<512x128xf32, #tpu.memory_space<vmem>>, vector<512x128xf32>
      %c0_16 = arith.constant 0 : index
      %c0_17 = arith.constant 0 : index
      %19 = vector.load %arg6[%c0_16, %c0_17] : memref<512x1xf32, #tpu.memory_space<vmem>>, vector<512x1xf32>
      %20 = vector.broadcast %19 : vector<512x1xf32> to vector<512x128xf32>
      %21 = arith.mulf %18, %20 : vector<512x128xf32>
      %c0_18 = arith.constant 0 : index
      %c0_19 = arith.constant 0 : index
      %22 = vector.load %arg7[%c0_18, %c0_19] : memref<1x128xf32, #tpu.memory_space<vmem>>, vector<1x128xf32>
      %23 = vector.broadcast %22 : vector<1x128xf32> to vector<512x128xf32>
      %24 = arith.addf %21, %23 : vector<512x128xf32>
      %c0_20 = arith.constant 0 : index
      %c0_21 = arith.constant 0 : index
      %25 = vector.load %arg8[%c0_20, %c0_21] : memref<512x128xf32, #tpu.memory_space<vmem>>, vector<512x128xf32>
      tpu.vector_store %arg8[%c0_20, %c0_21], %24 {strides = array<i32>} : memref<512x128xf32, #tpu.memory_space<vmem>>, vector<512x128xf32>,
    } else {
    }
    return
  }
  func.func @transform_0(%arg0: i32, %arg1: i32) -> (i32, i32) {
    %c0_i32 = arith.constant 0 : i32
    return %arg0, %arg1 : i32, i32
  }
  func.func @transform_1(%arg0: i32, %arg1: i32) -> (i32, i32) {
    %c0_i32 = arith.constant 0 : i32
    %c0_i32_0 = arith.constant 0 : i32
    return %arg1, %c0_i32 : i32, i32
  }
  func.func @transform_2(%arg0: i32, %arg1: i32) -> (i32, i32) {
    %c0_i32 = arith.constant 0 : i32
    %c0_i32_0 = arith.constant 0 : i32
    %c0_i32_1 = arith.constant 0 : i32
    return %c0_i32, %c0_i32_0 : i32, i32
  }
  func.func @transform_3(%arg0: i32, %arg1: i32) -> (i32, i32) {
    %c0_i32 = arith.constant 0 : i32
    %c0_i32_0 = arith.constant 0 : i32
    return %arg1, %c0_i32 : i32, i32
  }
  func.func @transform_4(%arg0: i32, %arg1: i32) -> (i32, i32) {
    %c0_i32 = arith.constant 0 : i32
    %c0_i32_0 = arith.constant 0 : i32
    return %arg0, %c0_i32 : i32, i32
  }
  func.func @transform_5(%arg0: i32, %arg1: i32) -> (i32, i32) {
    %c0_i32 = arith.constant 0 : i32
    %c0_i32_0 = arith.constant 0 : i32
    %c0_i32_1 = arith.constant 0 : i32
    return %c0_i32, %c0_i32_0 : i32, i32
  }
  func.func @transform_6(%arg0: i32, %arg1: i32) -> (i32, i32) {
    %c0_i32 = arith.constant 0 : i32
    %c0_i32_0 = arith.constant 0 : i32
    return %arg0, %c0_i32 : i32, i32
  }
}

</mosaic_0001>

<llo_original>
// kernel: tpu_custom_call.1
$region0: #{tpu_custom_call.1}
  #allocation0 [shape = 'u32[]', space=smem, size = 0x4, offset = 0x4, fixed_abs, tag = 'smem constant byte address 0x4 - core index']
  #allocation1 [shape = 'u32[144,128]{1,0:T(1,128)}', space=vmem, size = 0x12000, scoped, tag = 'internal scratch']
  %s0 = inlined_call_operand.hbm [shape: bf16[1024,1024], index: 0, kind: input, shape index: {}]
  %s1 = inlined_call_operand.vmem [shape: f32[1024,8], index: 1, kind: input, shape index: {}]
  %s2 = inlined_call_operand.hbm [shape: f32[8,128], index: 2, kind: input, shape index: {}]
  %s3 = inlined_call_operand.vmem [shape: f32[1024,1], index: 3, kind: input, shape index: {}]
  %s4 = inlined_call_operand.vmem [shape: f32[1024,1], index: 4, kind: input, shape index: {}]
  %s5 = inlined_call_operand.hbm [shape: f32[1,128], index: 5, kind: input, shape index: {}]
  %s6 = inlined_call_operand.hbm [shape: f32[1024,128], index: 6, kind: output, shape index: {}]
  %s7 = sld [smem:[#allocation0]]
  $region77: #{tpu_custom_call.1} parent=0
    _
  %s9 = ssub.s32 1, %s7
  %s10 = scalar_select 0, %s9, %s7
  $region1: #{tpu_custom_call.1} parent=0
    #allocation2 [shape = 'u8[1048576]{0}', space=vmem, size = 0x100000, scoped, tag = 'input window, operand 0']
    #allocation3 [shape = 's32[2]{0}', space=sflag, size = 0x8, scoped, tag = 'scoped memory for tpu_custom_call.1']
    #allocation4 [shape = 's32[2]{0}', space=sflag, size = 0x8, scoped, tag = 'scoped memory for tpu_custom_call.1']
    #allocation5 [shape = 'u8[4096]{0}', space=vmem, size = 0x1000, scoped, tag = 'input window, operand 2, single buffered']
    #allocation6 [shape = 's32[1]{0}', space=sflag, size = 0x4, scoped, tag = 'scoped memory for tpu_custom_call.1']
    #allocation7 [shape = 'u8[512]{0}', space=vmem, size = 0x400, scoped, tag = 'input window, operand 5, single buffered']
    #allocation8 [shape = 'u8[524288]{0}', space=vmem, size = 0x80000, scoped, tag = 'output window, operand 0']
    %11 = vsyncpa [#allocation3], 0
    %s12 = scalar_lea.sflag [#allocation3], 1
    %13 = vsyncpa %s12, 0
    %14 = vsyncpa [#allocation6], 0
    %15 = vsyncpa [#allocation4], 0
    %s16 = scalar_lea.sflag [#allocation4], 1
    %17 = vsyncpa %s16, 0
    loop: start=0, step=1, limit=6
    $region2: #{tpu_custom_call.1} parent=1 // loop_pre_header
      _
    $region3: #{tpu_custom_call.1} parent=1 // loop_header
      %s19 = sphi 0, %s23
      %p20 = scmp.ge.s32.totalorder %s19, 6
      %s26 = sphi 0, %s38
      %s27 = sphi 0, %s34
      %s28 = sphi 0, %s26
      %s29 = sphi 0, %s27
      %s30 = sphi 0, %s28
      %s31 = sphi 0, %s29
      %s43 = sphi 0, %s45
      %s46 = sphi 0, %s43
      %s47 = sphi 0, %s46
      %s63 = sphi 0, %s47
      %s69 = sphi 0, %s71
      %s72 = sphi 0, %s69
      %s73 = sphi 0, %s72
      %s89 = sphi 0, %s73
      %s93 = sphi 0, %s93
      %s95 = sphi 0, %s93
      %s96 = sphi 0, %s95
      %s110 = sphi 0, %s96
      %s116 = sphi 0, %s118
      %s119 = sphi 0, %s116
      %s120 = sphi 0, %s119
      %s136 = sphi 0, %s120
      %s142 = sphi 0, %s144
      %s145 = sphi 0, %s142
      %s146 = sphi 0, %s145
      %s162 = sphi 0, %s146
      %s166 = sphi 0, %s166
      %s168 = sphi 0, %s166
      %s169 = sphi 0, %s168
      %s183 = sphi 0, %s169
      %s189 = sphi 0, %s191
      %s192 = sphi 0, %s189
      %s193 = sphi 0, %s192
      %s209 = sphi 0, %s193
    $region4: #{tpu_custom_call.1} parent=1 // loop_header_branch
      %22 = sbr.rel (%p20) target = $region8
    $region5: #{tpu_custom_call.1} parent=1 // loop_body
      %s24 = ssub.s32 %s19, 1
      %s25 = ssub.s32 %s19, 2
      %s32 = sadd.s32 1, %s27
      %p33 = scmp.ge.s32.totalorder %s32, 2
      %s34 = scalar_select %p33, 0, %s32
      %s35 = sadd.s32 1, %s26
      %s36 = scalar_select %p33, %s35, %s26
      %p37 = scmp.ge.s32.totalorder %s36, 2
      %s38 = scalar_select %p37, 0, %s36
      %s39 = ssub.s32 %s26, %s38
      %s40 = ssub.s32 %s27, %s34
      %s41 = sor.u32 %s39, %s40
      %p42 = scmp.eq.s32.totalorder %s41, 0
      %s44 = sadd.s32 %s43, 1
      %s45 = scalar_select %p42, %s43, %s44
      %p48 = pneg %p42
      %p49 = scmp.eq.s32.totalorder %s19, 3
      %p50 = por %p48, %p49
      %p51 = scmp.ne.s32.totalorder %s43, %s46
      %p52 = scmp.eq.s32.totalorder %s19, 0
      %p53 = por %p51, %p52
      %p54 = scmp.ne.s32.totalorder %s43, %s46
      %p55 = scmp.eq.s32.totalorder %s24, 3
      %p56 = por %p54, %p55
      %p57 = scmp.ne.s32.totalorder %s46, %s47
      %p58 = scmp.eq.s32.totalorder %s24, 0
      %p59 = por %p57, %p58
      %p60 = scmp.ne.s32.totalorder %s46, %s47
      %p61 = scmp.eq.s32.totalorder %s25, 3
      %p62 = por %p60, %p61
      %p64 = scmp.ne.s32.totalorder %s47, %s63
      %p65 = scmp.eq.s32.totalorder %s25, 0
      %p66 = por %p64, %p65
      %s67 = ssub.s32 %s27, %s34
      %p68 = scmp.eq.s32.totalorder %s67, 0
      %s70 = sadd.s32 %s69, 1
      %s71 = scalar_select %p68, %s69, %s70
      %p74 = pneg %p68
      %p75 = scmp.eq.s32.totalorder %s19, 3
      %p76 = por %p74, %p75
      %p77 = scmp.ne.s32.totalorder %s69, %s72
      %p78 = scmp.eq.s32.totalorder %s19, 0
      %p79 = por %p77, %p78
      %p80 = scmp.ne.s32.totalorder %s69, %s72
      %p81 = scmp.eq.s32.totalorder %s24, 3
      %p82 = por %p80, %p81
      %p83 = scmp.ne.s32.totalorder %s72, %s73
      %p84 = scmp.eq.s32.totalorder %s24, 0
      %p85 = por %p83, %p84
      %p86 = scmp.ne.s32.totalorder %s72, %s73
      %p87 = scmp.eq.s32.totalorder %s25, 3
      %p88 = por %p86, %p87
      %p90 = scmp.ne.s32.totalorder %s73, %s89
      %p91 = scmp.eq.s32.totalorder %s25, 0
      %p92 = por %p90, %p91
      %s94 = sadd.s32 %s93, 1
      %p97 = scmp.eq.s32.totalorder %s19, 3
      %p98 = scmp.ne.s32.totalorder %s93, %s95
      %p99 = scmp.eq.s32.totalorder %s19, 0
      %p100 = por %p98, %p99
      %p101 = scmp.ne.s32.totalorder %s93, %s95
      %p102 = scmp.eq.s32.totalorder %s24, 3
      %p103 = por %p101, %p102
      %p104 = scmp.ne.s32.totalorder %s95, %s96
      %p105 = scmp.eq.s32.totalorder %s24, 0
      %p106 = por %p104, %p105
      %p107 = scmp.ne.s32.totalorder %s95, %s96
      %p108 = scmp.eq.s32.totalorder %s25, 3
      %p109 = por %p107, %p108
      %p111 = scmp.ne.s32.totalorder %s96, %s110
      %p112 = scmp.eq.s32.totalorder %s25, 0
      %p113 = por %p111, %p112
      %s114 = ssub.s32 %s27, %s34
      %p115 = scmp.eq.s32.totalorder %s114, 0
      %s117 = sadd.s32 %s116, 1
      %s118 = scalar_select %p115, %s116, %s117
      %p121 = pneg %p115
      %p122 = scmp.eq.s32.totalorder %s19, 3
      %p123 = por %p121, %p122
      %p124 = scmp.ne.s32.totalorder %s116, %s119
      %p125 = scmp.eq.s32.totalorder %s19, 0
      %p126 = por %p124, %p125
      %p127 = scmp.ne.s32.totalorder %s116, %s119
      %p128 = scmp.eq.s32.totalorder %s24, 3
      %p129 = por %p127, %p128
      %p130 = scmp.ne.s32.totalorder %s119, %s120
      %p131 = scmp.eq.s32.totalorder %s24, 0
      %p132 = por %p130, %p131
      %p133 = scmp.ne.s32.totalorder %s119, %s120
      %p134 = scmp.eq.s32.totalorder %s25, 3
      %p135 = por %p133, %p134
      %p137 = scmp.ne.s32.totalorder %s120, %s136
      %p138 = scmp.eq.s32.totalorder %s25, 0
      %p139 = por %p137, %p138
      %s140 = ssub.s32 %s26, %s38
      %p141 = scmp.eq.s32.totalorder %s140, 0
      %s143 = sadd.s32 %s142, 1
      %s144 = scalar_select %p141, %s142, %s143
      %p147 = pneg %p141
      %p148 = scmp.eq.s32.totalorder %s19, 3
      %p149 = por %p147, %p148
      %p150 = scmp.ne.s32.totalorder %s142, %s145
      %p151 = scmp.eq.s32.totalorder %s19, 0
      %p152 = por %p150, %p151
      %p153 = scmp.ne.s32.totalorder %s142, %s145
      %p154 = scmp.eq.s32.totalorder %s24, 3
      %p155 = por %p153, %p154
      %p156 = scmp.ne.s32.totalorder %s145, %s146
      %p157 = scmp.eq.s32.totalorder %s24, 0
      %p158 = por %p156, %p157
      %p159 = scmp.ne.s32.totalorder %s145, %s146
      %p160 = scmp.eq.s32.totalorder %s25, 3
      %p161 = por %p159, %p160
      %p163 = scmp.ne.s32.totalorder %s146, %s162
      %p164 = scmp.eq.s32.totalorder %s25, 0
      %p165 = por %p163, %p164
      %s167 = sadd.s32 %s166, 1
      %p170 = scmp.eq.s32.totalorder %s19, 3
      %p171 = scmp.ne.s32.totalorder %s166, %s168
      %p172 = scmp.eq.s32.totalorder %s19, 0
      %p173 = por %p171, %p172
      %p174 = scmp.ne.s32.totalorder %s166, %s168
      %p175 = scmp.eq.s32.totalorder %s24, 3
      %p176 = por %p174, %p175
      %p177 = scmp.ne.s32.totalorder %s168, %s169
      %p178 = scmp.eq.s32.totalorder %s24, 0
      %p179 = por %p177, %p178
      %p180 = scmp.ne.s32.totalorder %s168, %s169
      %p181 = scmp.eq.s32.totalorder %s25, 3
      %p182 = por %p180, %p181
      %p184 = scmp.ne.s32.totalorder %s169, %s183
      %p185 = scmp.eq.s32.totalorder %s25, 0
      %p186 = por %p184, %p185
      %s187 = ssub.s32 %s26, %s38
      %p188 = scmp.eq.s32.totalorder %s187, 0
      %s190 = sadd.s32 %s189, 1
      %s191 = scalar_select %p188, %s189, %s190
      %p194 = pneg %p188
      %p195 = scmp.eq.s32.totalorder %s19, 3
      %p196 = por %p194, %p195
      %p197 = scmp.ne.s32.totalorder %s189, %s192
      %p198 = scmp.eq.s32.totalorder %s19, 0
      %p199 = por %p197, %p198
      %p200 = scmp.ne.s32.totalorder %s189, %s192
      %p201 = scmp.eq.s32.totalorder %s24, 3
      %p202 = por %p200, %p201
      %p203 = scmp.ne.s32.totalorder %s192, %s193
      %p204 = scmp.eq.s32.totalorder %s24, 0
      %p205 = por %p203, %p204
      %p206 = scmp.ne.s32.totalorder %s192, %s193
      %p207 = scmp.eq.s32.totalorder %s25, 3
      %p208 = por %p206, %p207
      %p210 = scmp.ne.s32.totalorder %s193, %s209
      %p211 = scmp.eq.s32.totalorder %s25, 0
      %p212 = por %p210, %p211
      %p213 = scmp.le.s32.totalorder 1, %s19
      %p214 = scmp.lt.s32.totalorder %s19, 5
      %p215 = pnand %p213, %p214
      %p216 = pneg %p215
      // Predicated region
      $region9: #{tpu_custom_call.1} parent=5 // pred_check
        _
      $region10: #{tpu_custom_call.1} parent=5 // pred_check_branch
        %218 = sbr.rel (%p215) target = $region12
      $region11: #{tpu_custom_call.1} parent=5 // pred_region
        %s219 = ssub.s32 %s19, 1
        // Predicated region
        $region13: #{tpu_custom_call.1} parent=11 // pred_check
          %p220 = pneg %p106
        $region14: #{tpu_custom_call.1} parent=11 // pred_check_branch
          %222 = sbr.rel (%p220) target = $region16
        $region15: #{tpu_custom_call.1} parent=11 // pred_region
          %s224 = ssub.s32 128, 128
          %225 = vsyncadd [#allocation6], %s224
          %s227 = sshll.u32 [#allocation5], 4
          %s228 = int_to_ptr.vmem [resolvable:$true] %s227
          %230 = dma.hbm_to_vmem [thread:$0]  %s2, 128, %s228, [#allocation6]
        $region16: #{tpu_custom_call.1} parent=11 // pred_fallthru
          _
        // Predicated region
        $region17: #{tpu_custom_call.1} parent=11 // pred_check
          %p231 = pneg %p179
        $region18: #{tpu_custom_call.1} parent=11 // pred_check_branch
          %233 = sbr.rel (%p231) target = $region20
        $region19: #{tpu_custom_call.1} parent=11 // pred_region
          %s235 = ssub.s32 16, 16
          %236 = vsyncadd [#allocation6], %s235
          %s238 = sshll.u32 [#allocation7], 4
          %s239 = int_to_ptr.vmem [resolvable:$true] %s238
          %241 = dma.hbm_to_vmem [thread:$0]  %s5, 16, %s239, [#allocation6]
        $region20: #{tpu_custom_call.1} parent=11 // pred_fallthru
          _
      $region12: #{tpu_custom_call.1} parent=5 // pred_fallthru
        _
      %p242 = scmp.lt.s32.totalorder %s19, 4
      // Predicated region
      $region21: #{tpu_custom_call.1} parent=5 // pred_check
        %p243 = pneg %p242
      $region22: #{tpu_custom_call.1} parent=5 // pred_check_branch
        %245 = sbr.rel (%p243) target = $region24
      $region23: #{tpu_custom_call.1} parent=5 // pred_region
        // Predicated region
        $region25: #{tpu_custom_call.1} parent=23 // pred_check
          %p246 = pneg %p53
        $region26: #{tpu_custom_call.1} parent=23 // pred_check_branch
          %248 = sbr.rel (%p246) target = $region28
        $region27: #{tpu_custom_call.1} parent=23 // pred_region
          %s249 = sand.u32 %s43, 1
          %s250 = scalar_lea.sflag [#allocation3], %s249
          %s251 = sand.u32 %s43, 1
          %s252 = smul.addr %s251, 1024
          %s253 = scalar_lea.vmem [#allocation2], %s252
          %s254 = smul.u32 64, %s26
          %s255 = smul.u32 4, %s27
          %s257 = ssub.s32 16384, 16384
          %258 = vsyncadd %s250, %s257
          %s259 = smul.addr %s254, 8
          %s260 = sadd.s32 %s255, %s259
          %s261 = smul.addr %s260, 64
          %s262 = scalar_lea.hbm %s0, %s261
          %s263 = sshll.u32 %s253, 4
          %s264 = int_to_ptr.vmem [resolvable:$true] %s263
          %269 = dma.hbm_to_vmem [thread:$0]  %s262, 16384, %s264, %s250, 512, 256, 16
        $region28: #{tpu_custom_call.1} parent=23 // pred_fallthru
          _
        // Predicated region
        $region29: #{tpu_custom_call.1} parent=23 // pred_check
          %p270 = pneg %p79
        $region30: #{tpu_custom_call.1} parent=23 // pred_check_branch
          %272 = sbr.rel (%p270) target = $region32
        $region31: #{tpu_custom_call.1} parent=23 // pred_region
          %s273 = smul.u32 64, %s27
          %p274 = scmp.lt.s32.totalorder %s273, 127
          %s275 = scalar_select %p274, %s273, 127
          %s276 = smul.addr %s275, 8
          %s277 = scalar_lea.vmem %s1, %s276
          %s278 = smul.u32 64, %s27
        $region32: #{tpu_custom_call.1} parent=23 // pred_fallthru
          _
        // Predicated region
        $region33: #{tpu_custom_call.1} parent=23 // pred_check
          %p279 = pneg %p126
        $region34: #{tpu_custom_call.1} parent=23 // pred_check_branch
          %281 = sbr.rel (%p279) target = $region36
        $region35: #{tpu_custom_call.1} parent=23 // pred_region
          %s282 = smul.u32 64, %s27
          %p283 = scmp.lt.s32.totalorder %s282, 127
          %s284 = scalar_select %p283, %s282, 127
          %s285 = smul.addr %s284, 8
          %s286 = scalar_lea.vmem %s3, %s285
          %s287 = smul.u32 64, %s27
        $region36: #{tpu_custom_call.1} parent=23 // pred_fallthru
          _
        // Predicated region
        $region37: #{tpu_custom_call.1} parent=23 // pred_check
          %p288 = pneg %p152
        $region38: #{tpu_custom_call.1} parent=23 // pred_check_branch
          %290 = sbr.rel (%p288) target = $region40
        $region39: #{tpu_custom_call.1} parent=23 // pred_region
          %s291 = smul.u32 64, %s26
          %p292 = scmp.lt.s32.totalorder %s291, 127
          %s293 = scalar_select %p292, %s291, 127
          %s294 = smul.addr %s293, 8
          %s295 = scalar_lea.vmem %s4, %s294
          %s296 = smul.u32 64, %s26
        $region40: #{tpu_custom_call.1} parent=23 // pred_fallthru
          _
      $region24: #{tpu_custom_call.1} parent=5 // pred_fallthru
        _
      %p297 = scmp.le.s32.totalorder 1, %s19
      %p298 = scmp.lt.s32.totalorder %s19, 5
      %p299 = pnand %p297, %p298
      %p300 = pneg %p299
      // Predicated region
      $region41: #{tpu_custom_call.1} parent=5 // pred_check
        _
      $region42: #{tpu_custom_call.1} parent=5 // pred_check_branch
        %302 = sbr.rel (%p299) target = $region44
      $region43: #{tpu_custom_call.1} parent=5 // pred_region
        %s303 = ssub.s32 %s19, 1
        %s304 = sand.u32 %s46, 1
        %s305 = scalar_lea.sflag [#allocation3], %s304
        %s306 = sand.u32 %s46, 1
        %s307 = smul.addr %s306, 1024
        %s308 = scalar_lea.vmem [#allocation2], %s307
        // Predicated region
        $region45: #{tpu_custom_call.1} parent=43 // pred_check
          %p309 = pneg %p59
        $region46: #{tpu_custom_call.1} parent=43 // pred_check_branch
          %311 = sbr.rel (%p309) target = $region48
        $region47: #{tpu_custom_call.1} parent=43 // pred_region
          %312 = dma.done %s305, 16384
        $region48: #{tpu_custom_call.1} parent=43 // pred_fallthru
          _
        // Predicated region
        $region49: #{tpu_custom_call.1} parent=43 // pred_check
          %p313 = pneg %p106
        $region50: #{tpu_custom_call.1} parent=43 // pred_check_branch
          %315 = sbr.rel (%p313) target = $region52
        $region51: #{tpu_custom_call.1} parent=43 // pred_region
          %316 = dma.done [#allocation6], 128
        $region52: #{tpu_custom_call.1} parent=43 // pred_fallthru
          _
        // Predicated region
        $region53: #{tpu_custom_call.1} parent=43 // pred_check
          %p317 = pneg %p179
        $region54: #{tpu_custom_call.1} parent=43 // pred_check_branch
          %319 = sbr.rel (%p317) target = $region56
        $region55: #{tpu_custom_call.1} parent=43 // pred_region
          %320 = dma.done [#allocation6], 16
        $region56: #{tpu_custom_call.1} parent=43 // pred_fallthru
          _
        %s321 = sand.u32 %s46, 1
        %s322 = scalar_lea.sflag [#allocation3], %s321
        %s323 = sand.u32 %s46, 1
        %s324 = smul.addr %s323, 1024
        %s325 = scalar_lea.vmem [#allocation2], %s324
        %p326 = pneg %p59
        %p327 = pneg %p56
        %s328 = smul.u32 64, %s29
        %p329 = scmp.lt.s32.totalorder %s328, 127
        %s330 = scalar_select %p329, %s328, 127
        %s331 = smul.addr %s330, 8
        %s332 = scalar_lea.vmem %s1, %s331
        %p333 = pneg %p85
        %p334 = pneg %p82
        %p335 = pneg %p106
        %p336 = pneg %p103
        %s337 = smul.u32 64, %s29
        %p338 = scmp.lt.s32.totalorder %s337, 127
        %s339 = scalar_select %p338, %s337, 127
        %s340 = smul.addr %s339, 8
        %s341 = scalar_lea.vmem %s3, %s340
        %p342 = pneg %p132
        %p343 = pneg %p129
        %s344 = smul.u32 64, %s28
        %p345 = scmp.lt.s32.totalorder %s344, 127
        %s346 = scalar_select %p345, %s344, 127
        %s347 = smul.addr %s346, 8
        %s348 = scalar_lea.vmem %s4, %s347
        %p349 = pneg %p158
        %p350 = pneg %p155
        %p351 = pneg %p179
        %p352 = pneg %p176
        %p353 = pneg %p205
        %p354 = pneg %p202
        %s355 = sand.u32 %s192, 1
        %s356 = scalar_lea.sflag [#allocation4], %s355
        %s357 = sand.u32 %s192, 1
        %s358 = smul.addr %s357, 512
        %s359 = scalar_lea.vmem [#allocation8], %s358
        %s360 = smul.u32 64, %s28
        %s361 = smul.u32 4, %s29
        %s362 = smul.u32 64, %s29
        %p363 = scmp.lt.s32.totalorder %s362, 127
        %s364 = scalar_select %p363, %s362, 127
        %s365 = smul.addr %s364, 8
        %s366 = scalar_lea.vmem %s1, %s365
        %s367 = smul.u32 64, %s29
        %s368 = smul.u32 64, %s29
        %p369 = scmp.lt.s32.totalorder %s368, 127
        %s370 = scalar_select %p369, %s368, 127
        %s371 = smul.addr %s370, 8
        %s372 = scalar_lea.vmem %s3, %s371
        %s373 = smul.u32 64, %s29
        %s374 = smul.u32 64, %s28
        %p375 = scmp.lt.s32.totalorder %s374, 127
        %s376 = scalar_select %p375, %s374, 127
        %s377 = smul.addr %s376, 8
        %s378 = scalar_lea.vmem %s4, %s377
        %s379 = smul.u32 64, %s28
        %s380 = smul.u32 64, %s28
        %p382 = scmp.eq.s32.totalorder %s29, 0
        // Predicated region
        $region57: #{tpu_custom_call.1} parent=43 // pred_check
          %p383 = pneg %p382
        $region58: #{tpu_custom_call.1} parent=43 // pred_check_branch
          %385 = sbr.rel (%p383) target = $region60
        $region59: #{tpu_custom_call.1} parent=43 // pred_region
          %386 = vst [vmem:[%s359] sm:$0xff] 0.0
          %387 = vst [vmem:[%s359 + $0x8] sm:$0xff] 0.0
          %388 = vst [vmem:[%s359 + $0x10] sm:$0xff] 0.0
          %389 = vst [vmem:[%s359 + $0x18] sm:$0xff] 0.0
          %390 = vst [vmem:[%s359 + $0x20] sm:$0xff] 0.0
          %391 = vst [vmem:[%s359 + $0x28] sm:$0xff] 0.0
          %392 = vst [vmem:[%s359 + $0x30] sm:$0xff] 0.0
          %393 = vst [vmem:[%s359 + $0x38] sm:$0xff] 0.0
          %394 = vst [vmem:[%s359 + $0x40] sm:$0xff] 0.0
          %395 = vst [vmem:[%s359 + $0x48] sm:$0xff] 0.0
          %396 = vst [vmem:[%s359 + $0x50] sm:$0xff] 0.0
          %397 = vst [vmem:[%s359 + $0x58] sm:$0xff] 0.0
          %398 = vst [vmem:[%s359 + $0x60] sm:$0xff] 0.0
          %399 = vst [vmem:[%s359 + $0x68] sm:$0xff] 0.0
          %400 = vst [vmem:[%s359 + $0x70] sm:$0xff] 0.0
          %401 = vst [vmem:[%s359 + $0x78] sm:$0xff] 0.0
          %402 = vst [vmem:[%s359 + $0x80] sm:$0xff] 0.0
          %403 = vst [vmem:[%s359 + $0x88] sm:$0xff] 0.0
          %404 = vst [vmem:[%s359 + $0x90] sm:$0xff] 0.0
          %405 = vst [vmem:[%s359 + $0x98] sm:$0xff] 0.0
          %406 = vst [vmem:[%s359 + $0xa0] sm:$0xff] 0.0
          %407 = vst [vmem:[%s359 + $0xa8] sm:$0xff] 0.0
          %408 = vst [vmem:[%s359 + $0xb0] sm:$0xff] 0.0
          %409 = vst [vmem:[%s359 + $0xb8] sm:$0xff] 0.0
          %410 = vst [vmem:[%s359 + $0xc0] sm:$0xff] 0.0
          %411 = vst [vmem:[%s359 + $0xc8] sm:$0xff] 0.0
          %412 = vst [vmem:[%s359 + $0xd0] sm:$0xff] 0.0
          %413 = vst [vmem:[%s359 + $0xd8] sm:$0xff] 0.0
          %414 = vst [vmem:[%s359 + $0xe0] sm:$0xff] 0.0
          %415 = vst [vmem:[%s359 + $0xe8] sm:$0xff] 0.0
          %416 = vst [vmem:[%s359 + $0xf0] sm:$0xff] 0.0
          %417 = vst [vmem:[%s359 + $0xf8] sm:$0xff] 0.0
          %418 = vst [vmem:[%s359 + $0x100] sm:$0xff] 0.0
          %419 = vst [vmem:[%s359 + $0x108] sm:$0xff] 0.0
          %420 = vst [vmem:[%s359 + $0x110] sm:$0xff] 0.0
          %421 = vst [vmem:[%s359 + $0x118] sm:$0xff] 0.0
          %422 = vst [vmem:[%s359 + $0x120] sm:$0xff] 0.0
          %423 = vst [vmem:[%s359 + $0x128] sm:$0xff] 0.0
          %424 = vst [vmem:[%s359 + $0x130] sm:$0xff] 0.0
          %425 = vst [vmem:[%s359 + $0x138] sm:$0xff] 0.0
          %426 = vst [vmem:[%s359 + $0x140] sm:$0xff] 0.0
          %427 = vst [vmem:[%s359 + $0x148] sm:$0xff] 0.0
          %428 = vst [vmem:[%s359 + $0x150] sm:$0xff] 0.0
          %429 = vst [vmem:[%s359 + $0x158] sm:$0xff] 0.0
          %430 = vst [vmem:[%s359 + $0x160] sm:$0xff] 0.0
          %431 = vst [vmem:[%s359 + $0x168] sm:$0xff] 0.0
          %432 = vst [vmem:[%s359 + $0x170] sm:$0xff] 0.0
          %433 = vst [vmem:[%s359 + $0x178] sm:$0xff] 0.0
          %434 = vst [vmem:[%s359 + $0x180] sm:$0xff] 0.0
          %435 = vst [vmem:[%s359 + $0x188] sm:$0xff] 0.0
          %436 = vst [vmem:[%s359 + $0x190] sm:$0xff] 0.0
          %437 = vst [vmem:[%s359 + $0x198] sm:$0xff] 0.0
          %438 = vst [vmem:[%s359 + $0x1a0] sm:$0xff] 0.0
          %439 = vst [vmem:[%s359 + $0x1a8] sm:$0xff] 0.0
          %440 = vst [vmem:[%s359 + $0x1b0] sm:$0xff] 0.0
          %441 = vst [vmem:[%s359 + $0x1b8] sm:$0xff] 0.0
          %442 = vst [vmem:[%s359 + $0x1c0] sm:$0xff] 0.0
          %443 = vst [vmem:[%s359 + $0x1c8] sm:$0xff] 0.0
          %444 = vst [vmem:[%s359 + $0x1d0] sm:$0xff] 0.0
          %445 = vst [vmem:[%s359 + $0x1d8] sm:$0xff] 0.0
          %446 = vst [vmem:[%s359 + $0x1e0] sm:$0xff] 0.0
          %447 = vst [vmem:[%s359 + $0x1e8] sm:$0xff] 0.0
          %448 = vst [vmem:[%s359 + $0x1f0] sm:$0xff] 0.0
          %449 = vst [vmem:[%s359 + $0x1f8] sm:$0xff] 0.0
        $region60: #{tpu_custom_call.1} parent=43 // pred_fallthru
          _
        %v450 = vld [vmem:[%s366] sm:$0xff]
        %v451 = vld [vmem:[%s366 + $0x8] sm:$0xff]
        %v452 = vld [vmem:[%s366 + $0x10] sm:$0xff]
        %v453 = vld [vmem:[%s366 + $0x18] sm:$0xff]
        %v454 = vld [vmem:[%s366 + $0x20] sm:$0xff]
        %v455 = vld [vmem:[%s366 + $0x28] sm:$0xff]
        %v456 = vld [vmem:[%s366 + $0x30] sm:$0xff]
        %v457 = vld [vmem:[%s366 + $0x38] sm:$0xff]
        %v458 = vld [vmem:[%s366 + $0x40] sm:$0xff]
        %v459 = vld [vmem:[%s366 + $0x48] sm:$0xff]
        %v460 = vld [vmem:[%s366 + $0x50] sm:$0xff]
        %v461 = vld [vmem:[%s366 + $0x58] sm:$0xff]
        %v462 = vld [vmem:[%s366 + $0x60] sm:$0xff]
        %v463 = vld [vmem:[%s366 + $0x68] sm:$0xff]
        %v464 = vld [vmem:[%s366 + $0x70] sm:$0xff]
        %v465 = vld [vmem:[%s366 + $0x78] sm:$0xff]
        %v466 = vld [vmem:[%s366 + $0x80] sm:$0xff]
        %v467 = vld [vmem:[%s366 + $0x88] sm:$0xff]
        %v468 = vld [vmem:[%s366 + $0x90] sm:$0xff]
        %v469 = vld [vmem:[%s366 + $0x98] sm:$0xff]
        %v470 = vld [vmem:[%s366 + $0xa0] sm:$0xff]
        %v471 = vld [vmem:[%s366 + $0xa8] sm:$0xff]
        %v472 = vld [vmem:[%s366 + $0xb0] sm:$0xff]
        %v473 = vld [vmem:[%s366 + $0xb8] sm:$0xff]
        %v474 = vld [vmem:[%s366 + $0xc0] sm:$0xff]
        %v475 = vld [vmem:[%s366 + $0xc8] sm:$0xff]
        %v476 = vld [vmem:[%s366 + $0xd0] sm:$0xff]
        %v477 = vld [vmem:[%s366 + $0xd8] sm:$0xff]
        %v478 = vld [vmem:[%s366 + $0xe0] sm:$0xff]
        %v479 = vld [vmem:[%s366 + $0xe8] sm:$0xff]
        %v480 = vld [vmem:[%s366 + $0xf0] sm:$0xff]
        %v481 = vld [vmem:[%s366 + $0xf8] sm:$0xff]
        %v482 = vld [vmem:[%s366 + $0x100] sm:$0xff]
        %v483 = vld [vmem:[%s366 + $0x108] sm:$0xff]
        %v484 = vld [vmem:[%s366 + $0x110] sm:$0xff]
        %v485 = vld [vmem:[%s366 + $0x118] sm:$0xff]
        %v486 = vld [vmem:[%s366 + $0x120] sm:$0xff]
        %v487 = vld [vmem:[%s366 + $0x128] sm:$0xff]
        %v488 = vld [vmem:[%s366 + $0x130] sm:$0xff]
        %v489 = vld [vmem:[%s366 + $0x138] sm:$0xff]
        %v490 = vld [vmem:[%s366 + $0x140] sm:$0xff]
        %v491 = vld [vmem:[%s366 + $0x148] sm:$0xff]
        %v492 = vld [vmem:[%s366 + $0x150] sm:$0xff]
        %v493 = vld [vmem:[%s366 + $0x158] sm:$0xff]
        %v494 = vld [vmem:[%s366 + $0x160] sm:$0xff]
        %v495 = vld [vmem:[%s366 + $0x168] sm:$0xff]
        %v496 = vld [vmem:[%s366 + $0x170] sm:$0xff]
        %v497 = vld [vmem:[%s366 + $0x178] sm:$0xff]
        %v498 = vld [vmem:[%s366 + $0x180] sm:$0xff]
        %v499 = vld [vmem:[%s366 + $0x188] sm:$0xff]
        %v500 = vld [vmem:[%s366 + $0x190] sm:$0xff]
        %v501 = vld [vmem:[%s366 + $0x198] sm:$0xff]
        %v502 = vld [vmem:[%s366 + $0x1a0] sm:$0xff]
        %v503 = vld [vmem:[%s366 + $0x1a8] sm:$0xff]
        %v504 = vld [vmem:[%s366 + $0x1b0] sm:$0xff]
        %v505 = vld [vmem:[%s366 + $0x1b8] sm:$0xff]
        %v506 = vld [vmem:[%s366 + $0x1c0] sm:$0xff]
        %v507 = vld [vmem:[%s366 + $0x1c8] sm:$0xff]
        %v508 = vld [vmem:[%s366 + $0x1d0] sm:$0xff]
        %v509 = vld [vmem:[%s366 + $0x1d8] sm:$0xff]
        %v510 = vld [vmem:[%s366 + $0x1e0] sm:$0xff]
        %v511 = vld [vmem:[%s366 + $0x1e8] sm:$0xff]
        %v512 = vld [vmem:[%s366 + $0x1f0] sm:$0xff]
        %v513 = vld [vmem:[%s366 + $0x1f8] sm:$0xff]
        %v514 = vld [vmem:[#allocation5] sm:$0xff]
        %vm515 = vcmask 64512
        %v517 = vsel %vm515, %v450, 0
        %v520 = vsel %vm515, %v451, 0
        %v523 = vsel %vm515, %v452, 0
        %v526 = vsel %vm515, %v453, 0
        %v529 = vsel %vm515, %v454, 0
        %v532 = vsel %vm515, %v455, 0
        %v535 = vsel %vm515, %v456, 0
        %v538 = vsel %vm515, %v457, 0
        %v541 = vsel %vm515, %v458, 0
        %v544 = vsel %vm515, %v459, 0
        %v547 = vsel %vm515, %v460, 0
        %v550 = vsel %vm515, %v461, 0
        %v553 = vsel %vm515, %v462, 0
        %v556 = vsel %vm515, %v463, 0
        %v559 = vsel %vm515, %v464, 0
        %v562 = vsel %vm515, %v465, 0
        %v565 = vsel %vm515, %v466, 0
        %v568 = vsel %vm515, %v467, 0
        %v571 = vsel %vm515, %v468, 0
        %v574 = vsel %vm515, %v469, 0
        %v577 = vsel %vm515, %v470, 0
        %v580 = vsel %vm515, %v471, 0
        %v583 = vsel %vm515, %v472, 0
        %v586 = vsel %vm515, %v473, 0
        %v589 = vsel %vm515, %v474, 0
        %v592 = vsel %vm515, %v475, 0
        %v595 = vsel %vm515, %v476, 0
        %v598 = vsel %vm515, %v477, 0
        %v601 = vsel %vm515, %v478, 0
        %v604 = vsel %vm515, %v479, 0
        %v607 = vsel %vm515, %v480, 0
        %v610 = vsel %vm515, %v481, 0
        %v613 = vsel %vm515, %v482, 0
        %v616 = vsel %vm515, %v483, 0
        %v619 = vsel %vm515, %v484, 0
        %v622 = vsel %vm515, %v485, 0
        %v625 = vsel %vm515, %v486, 0
        %v628 = vsel %vm515, %v487, 0
        %v631 = vsel %vm515, %v488, 0
        %v634 = vsel %vm515, %v489, 0
        %v637 = vsel %vm515, %v490, 0
        %v640 = vsel %vm515, %v491, 0
        %v643 = vsel %vm515, %v492, 0
        %v646 = vsel %vm515, %v493, 0
        %v649 = vsel %vm515, %v494, 0
        %v652 = vsel %vm515, %v495, 0
        %v655 = vsel %vm515, %v496, 0
        %v658 = vsel %vm515, %v497, 0
        %v661 = vsel %vm515, %v498, 0
        %v664 = vsel %vm515, %v499, 0
        %v667 = vsel %vm515, %v500, 0
        %v670 = vsel %vm515, %v501, 0
        %v673 = vsel %vm515, %v502, 0
        %v676 = vsel %vm515, %v503, 0
        %v679 = vsel %vm515, %v504, 0
        %v682 = vsel %vm515, %v505, 0
        %v685 = vsel %vm515, %v506, 0
        %v688 = vsel %vm515, %v507, 0
        %v691 = vsel %vm515, %v508, 0
        %v694 = vsel %vm515, %v509, 0
        %v697 = vsel %vm515, %v510, 0
        %v700 = vsel %vm515, %v511, 0
        %v703 = vsel %vm515, %v512, 0
        %v706 = vsel %vm515, %v513, 0
        %708 = vmatprep.subr.mxu0 0.0
        %709 = vmatpush1.msra.mxu0 %v514
        %710 = vmatprep.subr.mxu0 0.0
        %711 = vmatpush1.msra.mxu0 0.0
        %712 = vmatprep.subr.mxu0 0.0
        %713 = vmatpush1.msra.mxu0 0.0
        %714 = vmatprep.subr.mxu0 0.0
        %715 = vmatpush1.msra.mxu0 0.0
        %716 = vmatprep.subr.mxu0 0.0
        %717 = vmatpush1.msra.mxu0 0.0
        %718 = vmatprep.subr.mxu0 0.0
        %719 = vmatpush1.msra.mxu0 0.0
        %720 = vmatprep.subr.mxu0 0.0
        %721 = vmatpush1.msra.mxu0 0.0
        %722 = vmatprep.subr.mxu0 0.0
        %723 = vmatpush1.msra.mxu0 0.0
        %724 = vmatprep.subr.mxu0 0.0
        %725 = vmatpush1.msra.mxu0 0.0
        %726 = vmatprep.subr.mxu0 0.0
        %727 = vmatpush1.msra.mxu0 0.0
        %728 = vmatprep.subr.mxu0 0.0
        %729 = vmatpush1.msra.mxu0 0.0
        %730 = vmatprep.subr.mxu0 0.0
        %731 = vmatpush1.msra.mxu0 0.0
        %732 = vmatprep.subr.mxu0 0.0
        %733 = vmatpush1.msra.mxu0 0.0
        %734 = vmatprep.subr.mxu0 0.0
        %735 = vmatpush1.msra.mxu0 0.0
        %736 = vmatprep.subr.mxu0 0.0
        %737 = vmatpush1.msra.mxu0 0.0
        %738 = vmatprep.subr.mxu0 0.0
        %739 = vmatpush1.msra.mxu0 0.0
        %740 = vmatprep.subr.mxu0 0.0
        %741 = vmatpush1.msra.mxu0 0.0
        %742 = vmatprep.subr.mxu0 0.0
        %743 = vmatpush1.msra.mxu0 0.0
        %744 = vmatprep.subr.mxu0 0.0
        %745 = vmatpush1.msra.mxu0 0.0
        %746 = vmatprep.subr.mxu0 0.0
        %747 = vmatpush1.msra.mxu0 0.0
        %748 = vmatprep.subr.mxu0 0.0
        %749 = vmatpush1.msra.mxu0 0.0
        %750 = vmatprep.subr.mxu0 0.0
        %751 = vmatpush1.msra.mxu0 0.0
        %752 = vmatprep.subr.mxu0 0.0
        %753 = vmatpush1.msra.mxu0 0.0
        %754 = vmatprep.subr.mxu0 0.0
        %755 = vmatpush1.msra.mxu0 0.0
        %756 = vmatprep.subr.mxu0 0.0
        %757 = vmatpush1.msra.mxu0 0.0
        %758 = vmatprep.subr.mxu0 0.0
        %759 = vmatpush1.msra.mxu0 0.0
        %760 = vmatprep.subr.mxu0 0.0
        %761 = vmatpush1.msra.mxu0 0.0
        %762 = vmatprep.subr.mxu0 0.0
        %763 = vmatpush1.msra.mxu0 0.0
        %764 = vmatprep.subr.mxu0 0.0
        %765 = vmatpush1.msra.mxu0 0.0
        %766 = vmatprep.subr.mxu0 0.0
        %767 = vmatpush1.msra.mxu0 0.0
        %768 = vmatprep.subr.mxu0 0.0
        %769 = vmatpush1.msra.mxu0 0.0
        %770 = vmatprep.subr.mxu0 0.0
        %771 = vmatpush1.msra.mxu0 0.0
        %772 = vmatprep.mubr.f32.mxu0 0.0
        %773 = vmatmul.mubr.f32.gmra.mrb[0].mxu0 %v517
        %v774 = vpop.f32.mrb[0].mxu0
        %v775 = vadd.f32 0.0, %v774
        %v776 = vpop.f32.mrb[0].mxu0
        %777 = vmatprep.mubr.f32.mxu0 0.0
        %778 = vmatmul.mubr.f32.gmra.mrb[0].mxu0 %v520
        %v779 = vpop.f32.mrb[0].mxu0
        %v780 = vadd.f32 0.0, %v779
        %v781 = vpop.f32.mrb[0].mxu0
        %782 = vmatprep.mubr.f32.mxu0 0.0
        %783 = vmatmul.mubr.f32.gmra.mrb[0].mxu0 %v523
        %v784 = vpop.f32.mrb[0].mxu0
        %v785 = vadd.f32 0.0, %v784
        %v786 = vpop.f32.mrb[0].mxu0
        %787 = vmatprep.mubr.f32.mxu0 0.0
        %788 = vmatmul.mubr.f32.gmra.mrb[0].mxu0 %v526
        %v789 = vpop.f32.mrb[0].mxu0
        %v790 = vadd.f32 0.0, %v789
        %v791 = vpop.f32.mrb[0].mxu0
        %792 = vmatprep.mubr.f32.mxu0 0.0
        %793 = vmatmul.mubr.f32.gmra.mrb[0].mxu0 %v529
        %v794 = vpop.f32.mrb[0].mxu0
        %v795 = vadd.f32 0.0, %v794
        %v796 = vpop.f32.mrb[0].mxu0
        %797 = vmatprep.mubr.f32.mxu0 0.0
        %798 = vmatmul.mubr.f32.gmra.mrb[0].mxu0 %v532
        %v799 = vpop.f32.mrb[0].mxu0
        %v800 = vadd.f32 0.0, %v799
        %v801 = vpop.f32.mrb[0].mxu0
        %802 = vmatprep.mubr.f32.mxu0 0.0
        %803 = vmatmul.mubr.f32.gmra.mrb[0].mxu0 %v535
        %v804 = vpop.f32.mrb[0].mxu0
        %v805 = vadd.f32 0.0, %v804
        %v806 = vpop.f32.mrb[0].mxu0
        %807 = vmatprep.mubr.f32.mxu0 0.0
        %808 = vmatmul.mubr.f32.gmra.mrb[0].mxu0 %v538
        %v809 = vpop.f32.mrb[0].mxu0
        %v810 = vadd.f32 0.0, %v809
        %v811 = vpop.f32.mrb[0].mxu0
        %812 = vmatprep.mubr.f32.mxu0 0.0
        %813 = vmatmul.mubr.f32.gmra.mrb[0].mxu0 %v541
        %v814 = vpop.f32.mrb[0].mxu0
        %v815 = vadd.f32 0.0, %v814
        %v816 = vpop.f32.mrb[0].mxu0
        %817 = vmatprep.mubr.f32.mxu0 0.0
        %818 = vmatmul.mubr.f32.gmra.mrb[0].mxu0 %v544
        %v819 = vpop.f32.mrb[0].mxu0
        %v820 = vadd.f32 0.0, %v819
        %v821 = vpop.f32.mrb[0].mxu0
        %822 = vmatprep.mubr.f32.mxu0 0.0
        %823 = vmatmul.mubr.f32.gmra.mrb[0].mxu0 %v547
        %v824 = vpop.f32.mrb[0].mxu0
        %v825 = vadd.f32 0.0, %v824
        %v826 = vpop.f32.mrb[0].mxu0
        %827 = vmatprep.mubr.f32.mxu0 0.0
        %828 = vmatmul.mubr.f32.gmra.mrb[0].mxu0 %v550
        %v829 = vpop.f32.mrb[0].mxu0
        %v830 = vadd.f32 0.0, %v829
        %v831 = vpop.f32.mrb[0].mxu0
        %832 = vmatprep.mubr.f32.mxu0 0.0
        %833 = vmatmul.mubr.f32.gmra.mrb[0].mxu0 %v553
        %v834 = vpop.f32.mrb[0].mxu0
        %v835 = vadd.f32 0.0, %v834
        %v836 = vpop.f32.mrb[0].mxu0
        %837 = vmatprep.mubr.f32.mxu0 0.0
        %838 = vmatmul.mubr.f32.gmra.mrb[0].mxu0 %v556
        %v839 = vpop.f32.mrb[0].mxu0
        %v840 = vadd.f32 0.0, %v839
        %v841 = vpop.f32.mrb[0].mxu0
        %842 = vmatprep.mubr.f32.mxu0 0.0
        %843 = vmatmul.mubr.f32.gmra.mrb[0].mxu0 %v559
        %v844 = vpop.f32.mrb[0].mxu0
        %v845 = vadd.f32 0.0, %v844
        %v846 = vpop.f32.mrb[0].mxu0
        %847 = vmatprep.mubr.f32.mxu0 0.0
        %848 = vmatmul.mubr.f32.gmra.mrb[0].mxu0 %v562
        %v849 = vpop.f32.mrb[0].mxu0
        %v850 = vadd.f32 0.0, %v849
        %v851 = vpop.f32.mrb[0].mxu0
        %852 = vmatprep.mubr.f32.mxu0 0.0
        %853 = vmatmul.mubr.f32.gmra.mrb[0].mxu0 %v565
        %v854 = vpop.f32.mrb[0].mxu0
        %v855 = vadd.f32 0.0, %v854
        %v856 = vpop.f32.mrb[0].mxu0
        %857 = vmatprep.mubr.f32.mxu0 0.0
        %858 = vmatmul.mubr.f32.gmra.mrb[0].mxu0 %v568
        %v859 = vpop.f32.mrb[0].mxu0
        %v860 = vadd.f32 0.0, %v859
        %v861 = vpop.f32.mrb[0].mxu0
        %862 = vmatprep.mubr.f32.mxu0 0.0
        %863 = vmatmul.mubr.f32.gmra.mrb[0].mxu0 %v571
        %v864 = vpop.f32.mrb[0].mxu0
        %v865 = vadd.f32 0.0, %v864
        %v866 = vpop.f32.mrb[0].mxu0
        %867 = vmatprep.mubr.f32.mxu0 0.0
        %868 = vmatmul.mubr.f32.gmra.mrb[0].mxu0 %v574
        %v869 = vpop.f32.mrb[0].mxu0
        %v870 = vadd.f32 0.0, %v869
        %v871 = vpop.f32.mrb[0].mxu0
        %872 = vmatprep.mubr.f32.mxu0 0.0
        %873 = vmatmul.mubr.f32.gmra.mrb[0].mxu0 %v577
        %v874 = vpop.f32.mrb[0].mxu0
        %v875 = vadd.f32 0.0, %v874
        %v876 = vpop.f32.mrb[0].mxu0
        %877 = vmatprep.mubr.f32.mxu0 0.0
        %878 = vmatmul.mubr.f32.gmra.mrb[0].mxu0 %v580
        %v879 = vpop.f32.mrb[0].mxu0
        %v880 = vadd.f32 0.0, %v879
        %v881 = vpop.f32.mrb[0].mxu0
        %882 = vmatprep.mubr.f32.mxu0 0.0
        %883 = vmatmul.mubr.f32.gmra.mrb[0].mxu0 %v583
        %v884 = vpop.f32.mrb[0].mxu0
        %v885 = vadd.f32 0.0, %v884
        %v886 = vpop.f32.mrb[0].mxu0
        %887 = vmatprep.mubr.f32.mxu0 0.0
        %888 = vmatmul.mubr.f32.gmra.mrb[0].mxu0 %v586
        %v889 = vpop.f32.mrb[0].mxu0
        %v890 = vadd.f32 0.0, %v889
        %v891 = vpop.f32.mrb[0].mxu0
        %892 = vmatprep.mubr.f32.mxu0 0.0
        %893 = vmatmul.mubr.f32.gmra.mrb[0].mxu0 %v589
        %v894 = vpop.f32.mrb[0].mxu0
        %v895 = vadd.f32 0.0, %v894
        %v896 = vpop.f32.mrb[0].mxu0
        %897 = vmatprep.mubr.f32.mxu0 0.0
        %898 = vmatmul.mubr.f32.gmra.mrb[0].mxu0 %v592
        %v899 = vpop.f32.mrb[0].mxu0
        %v900 = vadd.f32 0.0, %v899
        %v901 = vpop.f32.mrb[0].mxu0
        %902 = vmatprep.mubr.f32.mxu0 0.0
        %903 = vmatmul.mubr.f32.gmra.mrb[0].mxu0 %v595
        %v904 = vpop.f32.mrb[0].mxu0
        %v905 = vadd.f32 0.0, %v904
        %v906 = vpop.f32.mrb[0].mxu0
        %907 = vmatprep.mubr.f32.mxu0 0.0
        %908 = vmatmul.mubr.f32.gmra.mrb[0].mxu0 %v598
        %v909 = vpop.f32.mrb[0].mxu0
        %v910 = vadd.f32 0.0, %v909
        %v911 = vpop.f32.mrb[0].mxu0
        %912 = vmatprep.mubr.f32.mxu0 0.0
        %913 = vmatmul.mubr.f32.gmra.mrb[0].mxu0 %v601
        %v914 = vpop.f32.mrb[0].mxu0
        %v915 = vadd.f32 0.0, %v914
        %v916 = vpop.f32.mrb[0].mxu0
        %917 = vmatprep.mubr.f32.mxu0 0.0
        %918 = vmatmul.mubr.f32.gmra.mrb[0].mxu0 %v604
        %v919 = vpop.f32.mrb[0].mxu0
        %v920 = vadd.f32 0.0, %v919
        %v921 = vpop.f32.mrb[0].mxu0
        %922 = vmatprep.mubr.f32.mxu0 0.0
        %923 = vmatmul.mubr.f32.gmra.mrb[0].mxu0 %v607
        %v924 = vpop.f32.mrb[0].mxu0
        %v925 = vadd.f32 0.0, %v924
        %v926 = vpop.f32.mrb[0].mxu0
        %927 = vmatprep.mubr.f32.mxu0 0.0
        %928 = vmatmul.mubr.f32.gmra.mrb[0].mxu0 %v610
        %v929 = vpop.f32.mrb[0].mxu0
        %v930 = vadd.f32 0.0, %v929
        %v931 = vpop.f32.mrb[0].mxu0
        %932 = vmatprep.mubr.f32.mxu0 0.0
        %933 = vmatmul.mubr.f32.gmra.mrb[0].mxu0 %v613
        %v934 = vpop.f32.mrb[0].mxu0
        %v935 = vadd.f32 0.0, %v934
        %v936 = vpop.f32.mrb[0].mxu0
        %937 = vmatprep.mubr.f32.mxu0 0.0
        %938 = vmatmul.mubr.f32.gmra.mrb[0].mxu0 %v616
        %v939 = vpop.f32.mrb[0].mxu0
        %v940 = vadd.f32 0.0, %v939
        %v941 = vpop.f32.mrb[0].mxu0
        %942 = vmatprep.mubr.f32.mxu0 0.0
        %943 = vmatmul.mubr.f32.gmra.mrb[0].mxu0 %v619
        %v944 = vpop.f32.mrb[0].mxu0
        %v945 = vadd.f32 0.0, %v944
        %v946 = vpop.f32.mrb[0].mxu0
        %947 = vmatprep.mubr.f32.mxu0 0.0
        %948 = vmatmul.mubr.f32.gmra.mrb[0].mxu0 %v622
        %v949 = vpop.f32.mrb[0].mxu0
        %v950 = vadd.f32 0.0, %v949
        %v951 = vpop.f32.mrb[0].mxu0
        %952 = vmatprep.mubr.f32.mxu0 0.0
        %953 = vmatmul.mubr.f32.gmra.mrb[0].mxu0 %v625
        %v954 = vpop.f32.mrb[0].mxu0
        %v955 = vadd.f32 0.0, %v954
        %v956 = vpop.f32.mrb[0].mxu0
        %957 = vmatprep.mubr.f32.mxu0 0.0
        %958 = vmatmul.mubr.f32.gmra.mrb[0].mxu0 %v628
        %v959 = vpop.f32.mrb[0].mxu0
        %v960 = vadd.f32 0.0, %v959
        %v961 = vpop.f32.mrb[0].mxu0
        %962 = vmatprep.mubr.f32.mxu0 0.0
        %963 = vmatmul.mubr.f32.gmra.mrb[0].mxu0 %v631
        %v964 = vpop.f32.mrb[0].mxu0
        %v965 = vadd.f32 0.0, %v964
        %v966 = vpop.f32.mrb[0].mxu0
        %967 = vmatprep.mubr.f32.mxu0 0.0
        %968 = vmatmul.mubr.f32.gmra.mrb[0].mxu0 %v634
        %v969 = vpop.f32.mrb[0].mxu0
        %v970 = vadd.f32 0.0, %v969
        %v971 = vpop.f32.mrb[0].mxu0
        %972 = vmatprep.mubr.f32.mxu0 0.0
        %973 = vmatmul.mubr.f32.gmra.mrb[0].mxu0 %v637
        %v974 = vpop.f32.mrb[0].mxu0
        %v975 = vadd.f32 0.0, %v974
        %v976 = vpop.f32.mrb[0].mxu0
        %977 = vmatprep.mubr.f32.mxu0 0.0
        %978 = vmatmul.mubr.f32.gmra.mrb[0].mxu0 %v640
        %v979 = vpop.f32.mrb[0].mxu0
        %v980 = vadd.f32 0.0, %v979
        %v981 = vpop.f32.mrb[0].mxu0
        %982 = vmatprep.mubr.f32.mxu0 0.0
        %983 = vmatmul.mubr.f32.gmra.mrb[0].mxu0 %v643
        %v984 = vpop.f32.mrb[0].mxu0
        %v985 = vadd.f32 0.0, %v984
        %v986 = vpop.f32.mrb[0].mxu0
        %987 = vmatprep.mubr.f32.mxu0 0.0
        %988 = vmatmul.mubr.f32.gmra.mrb[0].mxu0 %v646
        %v989 = vpop.f32.mrb[0].mxu0
        %v990 = vadd.f32 0.0, %v989
        %v991 = vpop.f32.mrb[0].mxu0
        %992 = vmatprep.mubr.f32.mxu0 0.0
        %993 = vmatmul.mubr.f32.gmra.mrb[0].mxu0 %v649
        %v994 = vpop.f32.mrb[0].mxu0
        %v995 = vadd.f32 0.0, %v994
        %v996 = vpop.f32.mrb[0].mxu0
        %997 = vmatprep.mubr.f32.mxu0 0.0
        %998 = vmatmul.mubr.f32.gmra.mrb[0].mxu0 %v652
        %v999 = vpop.f32.mrb[0].mxu0
        %v1000 = vadd.f32 0.0, %v999
        %v1001 = vpop.f32.mrb[0].mxu0
        %1002 = vmatprep.mubr.f32.mxu0 0.0
        %1003 = vmatmul.mubr.f32.gmra.mrb[0].mxu0 %v655
        %v1004 = vpop.f32.mrb[0].mxu0
        %v1005 = vadd.f32 0.0, %v1004
        %v1006 = vpop.f32.mrb[0].mxu0
        %1007 = vmatprep.mubr.f32.mxu0 0.0
        %1008 = vmatmul.mubr.f32.gmra.mrb[0].mxu0 %v658
        %v1009 = vpop.f32.mrb[0].mxu0
        %v1010 = vadd.f32 0.0, %v1009
        %v1011 = vpop.f32.mrb[0].mxu0
        %1012 = vmatprep.mubr.f32.mxu0 0.0
        %1013 = vmatmul.mubr.f32.gmra.mrb[0].mxu0 %v661
        %v1014 = vpop.f32.mrb[0].mxu0
        %v1015 = vadd.f32 0.0, %v1014
        %v1016 = vpop.f32.mrb[0].mxu0
        %1017 = vmatprep.mubr.f32.mxu0 0.0
        %1018 = vmatmul.mubr.f32.gmra.mrb[0].mxu0 %v664
        %v1019 = vpop.f32.mrb[0].mxu0
        %v1020 = vadd.f32 0.0, %v1019
        %v1021 = vpop.f32.mrb[0].mxu0
        %1022 = vmatprep.mubr.f32.mxu0 0.0
        %1023 = vmatmul.mubr.f32.gmra.mrb[0].mxu0 %v667
        %v1024 = vpop.f32.mrb[0].mxu0
        %v1025 = vadd.f32 0.0, %v1024
        %v1026 = vpop.f32.mrb[0].mxu0
        %1027 = vmatprep.mubr.f32.mxu0 0.0
        %1028 = vmatmul.mubr.f32.gmra.mrb[0].mxu0 %v670
        %v1029 = vpop.f32.mrb[0].mxu0
        %v1030 = vadd.f32 0.0, %v1029
        %v1031 = vpop.f32.mrb[0].mxu0
        %1032 = vmatprep.mubr.f32.mxu0 0.0
        %1033 = vmatmul.mubr.f32.gmra.mrb[0].mxu0 %v673
        %v1034 = vpop.f32.mrb[0].mxu0
        %v1035 = vadd.f32 0.0, %v1034
        %v1036 = vpop.f32.mrb[0].mxu0
        %1037 = vmatprep.mubr.f32.mxu0 0.0
        %1038 = vmatmul.mubr.f32.gmra.mrb[0].mxu0 %v676
        %v1039 = vpop.f32.mrb[0].mxu0
        %v1040 = vadd.f32 0.0, %v1039
        %v1041 = vpop.f32.mrb[0].mxu0
        %1042 = vmatprep.mubr.f32.mxu0 0.0
        %1043 = vmatmul.mubr.f32.gmra.mrb[0].mxu0 %v679
        %v1044 = vpop.f32.mrb[0].mxu0
        %v1045 = vadd.f32 0.0, %v1044
        %v1046 = vpop.f32.mrb[0].mxu0
        %1047 = vmatprep.mubr.f32.mxu0 0.0
        %1048 = vmatmul.mubr.f32.gmra.mrb[0].mxu0 %v682
        %v1049 = vpop.f32.mrb[0].mxu0
        %v1050 = vadd.f32 0.0, %v1049
        %v1051 = vpop.f32.mrb[0].mxu0
        %1052 = vmatprep.mubr.f32.mxu0 0.0
        %1053 = vmatmul.mubr.f32.gmra.mrb[0].mxu0 %v685
        %v1054 = vpop.f32.mrb[0].mxu0
        %v1055 = vadd.f32 0.0, %v1054
        %v1056 = vpop.f32.mrb[0].mxu0
        %1057 = vmatprep.mubr.f32.mxu0 0.0
        %1058 = vmatmul.mubr.f32.gmra.mrb[0].mxu0 %v688
        %v1059 = vpop.f32.mrb[0].mxu0
        %v1060 = vadd.f32 0.0, %v1059
        %v1061 = vpop.f32.mrb[0].mxu0
        %1062 = vmatprep.mubr.f32.mxu0 0.0
        %1063 = vmatmul.mubr.f32.gmra.mrb[0].mxu0 %v691
        %v1064 = vpop.f32.mrb[0].mxu0
        %v1065 = vadd.f32 0.0, %v1064
        %v1066 = vpop.f32.mrb[0].mxu0
        %1067 = vmatprep.mubr.f32.mxu0 0.0
        %1068 = vmatmul.mubr.f32.gmra.mrb[0].mxu0 %v694
        %v1069 = vpop.f32.mrb[0].mxu0
        %v1070 = vadd.f32 0.0, %v1069
        %v1071 = vpop.f32.mrb[0].mxu0
        %1072 = vmatprep.mubr.f32.mxu0 0.0
        %1073 = vmatmul.mubr.f32.gmra.mrb[0].mxu0 %v697
        %v1074 = vpop.f32.mrb[0].mxu0
        %v1075 = vadd.f32 0.0, %v1074
        %v1076 = vpop.f32.mrb[0].mxu0
        %1077 = vmatprep.mubr.f32.mxu0 0.0
        %1078 = vmatmul.mubr.f32.gmra.mrb[0].mxu0 %v700
        %v1079 = vpop.f32.mrb[0].mxu0
        %v1080 = vadd.f32 0.0, %v1079
        %v1081 = vpop.f32.mrb[0].mxu0
        %1082 = vmatprep.mubr.f32.mxu0 0.0
        %1083 = vmatmul.mubr.f32.gmra.mrb[0].mxu0 %v703
        %v1084 = vpop.f32.mrb[0].mxu0
        %v1085 = vadd.f32 0.0, %v1084
        %v1086 = vpop.f32.mrb[0].mxu0
        %1087 = vmatprep.mubr.f32.mxu0 0.0
        %1088 = vmatmul.mubr.f32.gmra.mrb[0].mxu0 %v706
        %v1089 = vpop.f32.mrb[0].mxu0
        %v1090 = vadd.f32 0.0, %v1089
        %v1091 = vpop.f32.mrb[0].mxu0
        %1092 = vdwg.mxu0
        %v1093 = vld [vmem:[%s372] sm:$0xff]
        %v1094 = vld [vmem:[%s372 + $0x8] sm:$0xff]
        %v1095 = vld [vmem:[%s372 + $0x10] sm:$0xff]
        %v1096 = vld [vmem:[%s372 + $0x18] sm:$0xff]
        %v1097 = vld [vmem:[%s372 + $0x20] sm:$0xff]
        %v1098 = vld [vmem:[%s372 + $0x28] sm:$0xff]
        %v1099 = vld [vmem:[%s372 + $0x30] sm:$0xff]
        %v1100 = vld [vmem:[%s372 + $0x38] sm:$0xff]
        %v1101 = vld [vmem:[%s372 + $0x40] sm:$0xff]
        %v1102 = vld [vmem:[%s372 + $0x48] sm:$0xff]
        %v1103 = vld [vmem:[%s372 + $0x50] sm:$0xff]
        %v1104 = vld [vmem:[%s372 + $0x58] sm:$0xff]
        %v1105 = vld [vmem:[%s372 + $0x60] sm:$0xff]
        %v1106 = vld [vmem:[%s372 + $0x68] sm:$0xff]
        %v1107 = vld [vmem:[%s372 + $0x70] sm:$0xff]
        %v1108 = vld [vmem:[%s372 + $0x78] sm:$0xff]
        %v1109 = vld [vmem:[%s372 + $0x80] sm:$0xff]
        %v1110 = vld [vmem:[%s372 + $0x88] sm:$0xff]
        %v1111 = vld [vmem:[%s372 + $0x90] sm:$0xff]
        %v1112 = vld [vmem:[%s372 + $0x98] sm:$0xff]
        %v1113 = vld [vmem:[%s372 + $0xa0] sm:$0xff]
        %v1114 = vld [vmem:[%s372 + $0xa8] sm:$0xff]
        %v1115 = vld [vmem:[%s372 + $0xb0] sm:$0xff]
        %v1116 = vld [vmem:[%s372 + $0xb8] sm:$0xff]
        %v1117 = vld [vmem:[%s372 + $0xc0] sm:$0xff]
        %v1118 = vld [vmem:[%s372 + $0xc8] sm:$0xff]
        %v1119 = vld [vmem:[%s372 + $0xd0] sm:$0xff]
        %v1120 = vld [vmem:[%s372 + $0xd8] sm:$0xff]
        %v1121 = vld [vmem:[%s372 + $0xe0] sm:$0xff]
        %v1122 = vld [vmem:[%s372 + $0xe8] sm:$0xff]
        %v1123 = vld [vmem:[%s372 + $0xf0] sm:$0xff]
        %v1124 = vld [vmem:[%s372 + $0xf8] sm:$0xff]
        %v1125 = vld [vmem:[%s372 + $0x100] sm:$0xff]
        %v1126 = vld [vmem:[%s372 + $0x108] sm:$0xff]
        %v1127 = vld [vmem:[%s372 + $0x110] sm:$0xff]
        %v1128 = vld [vmem:[%s372 + $0x118] sm:$0xff]
        %v1129 = vld [vmem:[%s372 + $0x120] sm:$0xff]
        %v1130 = vld [vmem:[%s372 + $0x128] sm:$0xff]
        %v1131 = vld [vmem:[%s372 + $0x130] sm:$0xff]
        %v1132 = vld [vmem:[%s372 + $0x138] sm:$0xff]
        %v1133 = vld [vmem:[%s372 + $0x140] sm:$0xff]
        %v1134 = vld [vmem:[%s372 + $0x148] sm:$0xff]
        %v1135 = vld [vmem:[%s372 + $0x150] sm:$0xff]
        %v1136 = vld [vmem:[%s372 + $0x158] sm:$0xff]
        %v1137 = vld [vmem:[%s372 + $0x160] sm:$0xff]
        %v1138 = vld [vmem:[%s372 + $0x168] sm:$0xff]
        %v1139 = vld [vmem:[%s372 + $0x170] sm:$0xff]
        %v1140 = vld [vmem:[%s372 + $0x178] sm:$0xff]
        %v1141 = vld [vmem:[%s372 + $0x180] sm:$0xff]
        %v1142 = vld [vmem:[%s372 + $0x188] sm:$0xff]
        %v1143 = vld [vmem:[%s372 + $0x190] sm:$0xff]
        %v1144 = vld [vmem:[%s372 + $0x198] sm:$0xff]
        %v1145 = vld [vmem:[%s372 + $0x1a0] sm:$0xff]
        %v1146 = vld [vmem:[%s372 + $0x1a8] sm:$0xff]
        %v1147 = vld [vmem:[%s372 + $0x1b0] sm:$0xff]
        %v1148 = vld [vmem:[%s372 + $0x1b8] sm:$0xff]
        %v1149 = vld [vmem:[%s372 + $0x1c0] sm:$0xff]
        %v1150 = vld [vmem:[%s372 + $0x1c8] sm:$0xff]
        %v1151 = vld [vmem:[%s372 + $0x1d0] sm:$0xff]
        %v1152 = vld [vmem:[%s372 + $0x1d8] sm:$0xff]
        %v1153 = vld [vmem:[%s372 + $0x1e0] sm:$0xff]
        %v1154 = vld [vmem:[%s372 + $0x1e8] sm:$0xff]
        %v1155 = vld [vmem:[%s372 + $0x1f0] sm:$0xff]
        %v1156 = vld [vmem:[%s372 + $0x1f8] sm:$0xff]
        %1158 = vset.pattern.permute.xlu0 0
        %1159 = vperm.xlu0 %1158, %v1093
        %v1160 = vpop.permute.xlu0 %1159
        %1163 = vset.pattern.permute.xlu0 0
        %1164 = vperm.xlu0 %1163, %v1094
        %v1165 = vpop.permute.xlu0 %1164
        %1168 = vset.pattern.permute.xlu0 0
        %1169 = vperm.xlu0 %1168, %v1095
        %v1170 = vpop.permute.xlu0 %1169
        %1173 = vset.pattern.permute.xlu0 0
        %1174 = vperm.xlu0 %1173, %v1096
        %v1175 = vpop.permute.xlu0 %1174
        %1178 = vset.pattern.permute.xlu0 0
        %1179 = vperm.xlu0 %1178, %v1097
        %v1180 = vpop.permute.xlu0 %1179
        %1183 = vset.pattern.permute.xlu0 0
        %1184 = vperm.xlu0 %1183, %v1098
        %v1185 = vpop.permute.xlu0 %1184
        %1188 = vset.pattern.permute.xlu0 0
        %1189 = vperm.xlu0 %1188, %v1099
        %v1190 = vpop.permute.xlu0 %1189
        %1193 = vset.pattern.permute.xlu0 0
        %1194 = vperm.xlu0 %1193, %v1100
        %v1195 = vpop.permute.xlu0 %1194
        %1198 = vset.pattern.permute.xlu0 0
        %1199 = vperm.xlu0 %1198, %v1101
        %v1200 = vpop.permute.xlu0 %1199
        %1203 = vset.pattern.permute.xlu0 0
        %1204 = vperm.xlu0 %1203, %v1102
        %v1205 = vpop.permute.xlu0 %1204
        %1208 = vset.pattern.permute.xlu0 0
        %1209 = vperm.xlu0 %1208, %v1103
        %v1210 = vpop.permute.xlu0 %1209
        %1213 = vset.pattern.permute.xlu0 0
        %1214 = vperm.xlu0 %1213, %v1104
        %v1215 = vpop.permute.xlu0 %1214
        %1218 = vset.pattern.permute.xlu0 0
        %1219 = vperm.xlu0 %1218, %v1105
        %v1220 = vpop.permute.xlu0 %1219
        %1223 = vset.pattern.permute.xlu0 0
        %1224 = vperm.xlu0 %1223, %v1106
        %v1225 = vpop.permute.xlu0 %1224
        %1228 = vset.pattern.permute.xlu0 0
        %1229 = vperm.xlu0 %1228, %v1107
        %v1230 = vpop.permute.xlu0 %1229
        %1233 = vset.pattern.permute.xlu0 0
        %1234 = vperm.xlu0 %1233, %v1108
        %v1235 = vpop.permute.xlu0 %1234
        %1238 = vset.pattern.permute.xlu0 0
        %1239 = vperm.xlu0 %1238, %v1109
        %v1240 = vpop.permute.xlu0 %1239
        %1243 = vset.pattern.permute.xlu0 0
        %1244 = vperm.xlu0 %1243, %v1110
        %v1245 = vpop.permute.xlu0 %1244
        %1248 = vset.pattern.permute.xlu0 0
        %1249 = vperm.xlu0 %1248, %v1111
        %v1250 = vpop.permute.xlu0 %1249
        %1253 = vset.pattern.permute.xlu0 0
        %1254 = vperm.xlu0 %1253, %v1112
        %v1255 = vpop.permute.xlu0 %1254
        %1258 = vset.pattern.permute.xlu0 0
        %1259 = vperm.xlu0 %1258, %v1113
        %v1260 = vpop.permute.xlu0 %1259
        %1263 = vset.pattern.permute.xlu0 0
        %1264 = vperm.xlu0 %1263, %v1114
        %v1265 = vpop.permute.xlu0 %1264
        %1268 = vset.pattern.permute.xlu0 0
        %1269 = vperm.xlu0 %1268, %v1115
        %v1270 = vpop.permute.xlu0 %1269
        %1273 = vset.pattern.permute.xlu0 0
        %1274 = vperm.xlu0 %1273, %v1116
        %v1275 = vpop.permute.xlu0 %1274
        %1278 = vset.pattern.permute.xlu0 0
        %1279 = vperm.xlu0 %1278, %v1117
        %v1280 = vpop.permute.xlu0 %1279
        %1283 = vset.pattern.permute.xlu0 0
        %1284 = vperm.xlu0 %1283, %v1118
        %v1285 = vpop.permute.xlu0 %1284
        %1288 = vset.pattern.permute.xlu0 0
        %1289 = vperm.xlu0 %1288, %v1119
        %v1290 = vpop.permute.xlu0 %1289
        %1293 = vset.pattern.permute.xlu0 0
        %1294 = vperm.xlu0 %1293, %v1120
        %v1295 = vpop.permute.xlu0 %1294
        %1298 = vset.pattern.permute.xlu0 0
        %1299 = vperm.xlu0 %1298, %v1121
        %v1300 = vpop.permute.xlu0 %1299
        %1303 = vset.pattern.permute.xlu0 0
        %1304 = vperm.xlu0 %1303, %v1122
        %v1305 = vpop.permute.xlu0 %1304
        %1308 = vset.pattern.permute.xlu0 0
        %1309 = vperm.xlu0 %1308, %v1123
        %v1310 = vpop.permute.xlu0 %1309
        %1313 = vset.pattern.permute.xlu0 0
        %1314 = vperm.xlu0 %1313, %v1124
        %v1315 = vpop.permute.xlu0 %1314
        %1318 = vset.pattern.permute.xlu0 0
        %1319 = vperm.xlu0 %1318, %v1125
        %v1320 = vpop.permute.xlu0 %1319
        %1323 = vset.pattern.permute.xlu0 0
        %1324 = vperm.xlu0 %1323, %v1126
        %v1325 = vpop.permute.xlu0 %1324
        %1328 = vset.pattern.permute.xlu0 0
        %1329 = vperm.xlu0 %1328, %v1127
        %v1330 = vpop.permute.xlu0 %1329
        %1333 = vset.pattern.permute.xlu0 0
        %1334 = vperm.xlu0 %1333, %v1128
        %v1335 = vpop.permute.xlu0 %1334
        %1338 = vset.pattern.permute.xlu0 0
        %1339 = vperm.xlu0 %1338, %v1129
        %v1340 = vpop.permute.xlu0 %1339
        %1343 = vset.pattern.permute.xlu0 0
        %1344 = vperm.xlu0 %1343, %v1130
        %v1345 = vpop.permute.xlu0 %1344
        %1348 = vset.pattern.permute.xlu0 0
        %1349 = vperm.xlu0 %1348, %v1131
        %v1350 = vpop.permute.xlu0 %1349
        %1353 = vset.pattern.permute.xlu0 0
        %1354 = vperm.xlu0 %1353, %v1132
        %v1355 = vpop.permute.xlu0 %1354
        %1358 = vset.pattern.permute.xlu0 0
        %1359 = vperm.xlu0 %1358, %v1133
        %v1360 = vpop.permute.xlu0 %1359
        %1363 = vset.pattern.permute.xlu0 0
        %1364 = vperm.xlu0 %1363, %v1134
        %v1365 = vpop.permute.xlu0 %1364
        %1368 = vset.pattern.permute.xlu0 0
        %1369 = vperm.xlu0 %1368, %v1135
        %v1370 = vpop.permute.xlu0 %1369
        %1373 = vset.pattern.permute.xlu0 0
        %1374 = vperm.xlu0 %1373, %v1136
        %v1375 = vpop.permute.xlu0 %1374
        %1378 = vset.pattern.permute.xlu0 0
        %1379 = vperm.xlu0 %1378, %v1137
        %v1380 = vpop.permute.xlu0 %1379
        %1383 = vset.pattern.permute.xlu0 0
        %1384 = vperm.xlu0 %1383, %v1138
        %v1385 = vpop.permute.xlu0 %1384
        %1388 = vset.pattern.permute.xlu0 0
        %1389 = vperm.xlu0 %1388, %v1139
        %v1390 = vpop.permute.xlu0 %1389
        %1393 = vset.pattern.permute.xlu0 0
        %1394 = vperm.xlu0 %1393, %v1140
        %v1395 = vpop.permute.xlu0 %1394
        %1398 = vset.pattern.permute.xlu0 0
        %1399 = vperm.xlu0 %1398, %v1141
        %v1400 = vpop.permute.xlu0 %1399
        %1403 = vset.pattern.permute.xlu0 0
        %1404 = vperm.xlu0 %1403, %v1142
        %v1405 = vpop.permute.xlu0 %1404
        %1408 = vset.pattern.permute.xlu0 0
        %1409 = vperm.xlu0 %1408, %v1143
        %v1410 = vpop.permute.xlu0 %1409
        %1413 = vset.pattern.permute.xlu0 0
        %1414 = vperm.xlu0 %1413, %v1144
        %v1415 = vpop.permute.xlu0 %1414
        %1418 = vset.pattern.permute.xlu0 0
        %1419 = vperm.xlu0 %1418, %v1145
        %v1420 = vpop.permute.xlu0 %1419
        %1423 = vset.pattern.permute.xlu0 0
        %1424 = vperm.xlu0 %1423, %v1146
        %v1425 = vpop.permute.xlu0 %1424
        %1428 = vset.pattern.permute.xlu0 0
        %1429 = vperm.xlu0 %1428, %v1147
        %v1430 = vpop.permute.xlu0 %1429
        %1433 = vset.pattern.permute.xlu0 0
        %1434 = vperm.xlu0 %1433, %v1148
        %v1435 = vpop.permute.xlu0 %1434
        %1438 = vset.pattern.permute.xlu0 0
        %1439 = vperm.xlu0 %1438, %v1149
        %v1440 = vpop.permute.xlu0 %1439
        %1443 = vset.pattern.permute.xlu0 0
        %1444 = vperm.xlu0 %1443, %v1150
        %v1445 = vpop.permute.xlu0 %1444
        %1448 = vset.pattern.permute.xlu0 0
        %1449 = vperm.xlu0 %1448, %v1151
        %v1450 = vpop.permute.xlu0 %1449
        %1453 = vset.pattern.permute.xlu0 0
        %1454 = vperm.xlu0 %1453, %v1152
        %v1455 = vpop.permute.xlu0 %1454
        %1458 = vset.pattern.permute.xlu0 0
        %1459 = vperm.xlu0 %1458, %v1153
        %v1460 = vpop.permute.xlu0 %1459
        %1463 = vset.pattern.permute.xlu0 0
        %1464 = vperm.xlu0 %1463, %v1154
        %v1465 = vpop.permute.xlu0 %1464
        %1468 = vset.pattern.permute.xlu0 0
        %1469 = vperm.xlu0 %1468, %v1155
        %v1470 = vpop.permute.xlu0 %1469
        %1473 = vset.pattern.permute.xlu0 0
        %1474 = vperm.xlu0 %1473, %v1156
        %v1475 = vpop.permute.xlu0 %1474
        %v1477 = vmul.f32 %v775, %v1160
        %v1478 = vmul.f32 %v780, %v1165
        %v1479 = vmul.f32 %v785, %v1170
        %v1480 = vmul.f32 %v790, %v1175
        %v1481 = vmul.f32 %v795, %v1180
        %v1482 = vmul.f32 %v800, %v1185
        %v1483 = vmul.f32 %v805, %v1190
        %v1484 = vmul.f32 %v810, %v1195
        %v1485 = vmul.f32 %v815, %v1200
        %v1486 = vmul.f32 %v820, %v1205
        %v1487 = vmul.f32 %v825, %v1210
        %v1488 = vmul.f32 %v830, %v1215
        %v1489 = vmul.f32 %v835, %v1220
        %v1490 = vmul.f32 %v840, %v1225
        %v1491 = vmul.f32 %v845, %v1230
        %v1492 = vmul.f32 %v850, %v1235
        %v1493 = vmul.f32 %v855, %v1240
        %v1494 = vmul.f32 %v860, %v1245
        %v1495 = vmul.f32 %v865, %v1250
        %v1496 = vmul.f32 %v870, %v1255
        %v1497 = vmul.f32 %v875, %v1260
        %v1498 = vmul.f32 %v880, %v1265
        %v1499 = vmul.f32 %v885, %v1270
        %v1500 = vmul.f32 %v890, %v1275
        %v1501 = vmul.f32 %v895, %v1280
        %v1502 = vmul.f32 %v900, %v1285
        %v1503 = vmul.f32 %v905, %v1290
        %v1504 = vmul.f32 %v910, %v1295
        %v1505 = vmul.f32 %v915, %v1300
        %v1506 = vmul.f32 %v920, %v1305
        %v1507 = vmul.f32 %v925, %v1310
        %v1508 = vmul.f32 %v930, %v1315
        %v1509 = vmul.f32 %v935, %v1320
        %v1510 = vmul.f32 %v940, %v1325
        %v1511 = vmul.f32 %v945, %v1330
        %v1512 = vmul.f32 %v950, %v1335
        %v1513 = vmul.f32 %v955, %v1340
        %v1514 = vmul.f32 %v960, %v1345
        %v1515 = vmul.f32 %v965, %v1350
        %v1516 = vmul.f32 %v970, %v1355
        %v1517 = vmul.f32 %v975, %v1360
        %v1518 = vmul.f32 %v980, %v1365
        %v1519 = vmul.f32 %v985, %v1370
        %v1520 = vmul.f32 %v990, %v1375
        %v1521 = vmul.f32 %v995, %v1380
        %v1522 = vmul.f32 %v1000, %v1385
        %v1523 = vmul.f32 %v1005, %v1390
        %v1524 = vmul.f32 %v1010, %v1395
        %v1525 = vmul.f32 %v1015, %v1400
        %v1526 = vmul.f32 %v1020, %v1405
        %v1527 = vmul.f32 %v1025, %v1410
        %v1528 = vmul.f32 %v1030, %v1415
        %v1529 = vmul.f32 %v1035, %v1420
        %v1530 = vmul.f32 %v1040, %v1425
        %v1531 = vmul.f32 %v1045, %v1430
        %v1532 = vmul.f32 %v1050, %v1435
        %v1533 = vmul.f32 %v1055, %v1440
        %v1534 = vmul.f32 %v1060, %v1445
        %v1535 = vmul.f32 %v1065, %v1450
        %v1536 = vmul.f32 %v1070, %v1455
        %v1537 = vmul.f32 %v1075, %v1460
        %v1538 = vmul.f32 %v1080, %v1465
        %v1539 = vmul.f32 %v1085, %v1470
        %v1540 = vmul.f32 %v1090, %v1475
        %v1541 = vpack.c.bf16 %v1478, %v1477
        %v1542 = vpack.c.bf16 %v1480, %v1479
        %v1543 = vpack.c.bf16 %v1482, %v1481
        %v1544 = vpack.c.bf16 %v1484, %v1483
        %v1545 = vpack.c.bf16 %v1486, %v1485
        %v1546 = vpack.c.bf16 %v1488, %v1487
        %v1547 = vpack.c.bf16 %v1490, %v1489
        %v1548 = vpack.c.bf16 %v1492, %v1491
        %v1549 = vpack.c.bf16 %v1494, %v1493
        %v1550 = vpack.c.bf16 %v1496, %v1495
        %v1551 = vpack.c.bf16 %v1498, %v1497
        %v1552 = vpack.c.bf16 %v1500, %v1499
        %v1553 = vpack.c.bf16 %v1502, %v1501
        %v1554 = vpack.c.bf16 %v1504, %v1503
        %v1555 = vpack.c.bf16 %v1506, %v1505
        %v1556 = vpack.c.bf16 %v1508, %v1507
        %v1557 = vpack.c.bf16 %v1510, %v1509
        %v1558 = vpack.c.bf16 %v1512, %v1511
        %v1559 = vpack.c.bf16 %v1514, %v1513
        %v1560 = vpack.c.bf16 %v1516, %v1515
        %v1561 = vpack.c.bf16 %v1518, %v1517
        %v1562 = vpack.c.bf16 %v1520, %v1519
        %v1563 = vpack.c.bf16 %v1522, %v1521
        %v1564 = vpack.c.bf16 %v1524, %v1523
        %v1565 = vpack.c.bf16 %v1526, %v1525
        %v1566 = vpack.c.bf16 %v1528, %v1527
        %v1567 = vpack.c.bf16 %v1530, %v1529
        %v1568 = vpack.c.bf16 %v1532, %v1531
        %v1569 = vpack.c.bf16 %v1534, %v1533
        %v1570 = vpack.c.bf16 %v1536, %v1535
        %v1571 = vpack.c.bf16 %v1538, %v1537
        %v1572 = vpack.c.bf16 %v1540, %v1539
        %v1573 = vld [vmem:[%s359] sm:$0xff]
        %v1574 = vld [vmem:[%s359 + $0x8] sm:$0xff]
        %v1575 = vld [vmem:[%s359 + $0x10] sm:$0xff]
        %v1576 = vld [vmem:[%s359 + $0x18] sm:$0xff]
        %v1577 = vld [vmem:[%s359 + $0x20] sm:$0xff]
        %v1578 = vld [vmem:[%s359 + $0x28] sm:$0xff]
        %v1579 = vld [vmem:[%s359 + $0x30] sm:$0xff]
        %v1580 = vld [vmem:[%s359 + $0x38] sm:$0xff]
        %v1581 = vld [vmem:[%s359 + $0x40] sm:$0xff]
        %v1582 = vld [vmem:[%s359 + $0x48] sm:$0xff]
        %v1583 = vld [vmem:[%s359 + $0x50] sm:$0xff]
        %v1584 = vld [vmem:[%s359 + $0x58] sm:$0xff]
        %v1585 = vld [vmem:[%s359 + $0x60] sm:$0xff]
        %v1586 = vld [vmem:[%s359 + $0x68] sm:$0xff]
        %v1587 = vld [vmem:[%s359 + $0x70] sm:$0xff]
        %v1588 = vld [vmem:[%s359 + $0x78] sm:$0xff]
        %v1589 = vld [vmem:[%s359 + $0x80] sm:$0xff]
        %v1590 = vld [vmem:[%s359 + $0x88] sm:$0xff]
        %v1591 = vld [vmem:[%s359 + $0x90] sm:$0xff]
        %v1592 = vld [vmem:[%s359 + $0x98] sm:$0xff]
        %v1593 = vld [vmem:[%s359 + $0xa0] sm:$0xff]
        %v1594 = vld [vmem:[%s359 + $0xa8] sm:$0xff]
        %v1595 = vld [vmem:[%s359 + $0xb0] sm:$0xff]
        %v1596 = vld [vmem:[%s359 + $0xb8] sm:$0xff]
        %v1597 = vld [vmem:[%s359 + $0xc0] sm:$0xff]
        %v1598 = vld [vmem:[%s359 + $0xc8] sm:$0xff]
        %v1599 = vld [vmem:[%s359 + $0xd0] sm:$0xff]
        %v1600 = vld [vmem:[%s359 + $0xd8] sm:$0xff]
        %v1601 = vld [vmem:[%s359 + $0xe0] sm:$0xff]
        %v1602 = vld [vmem:[%s359 + $0xe8] sm:$0xff]
        %v1603 = vld [vmem:[%s359 + $0xf0] sm:$0xff]
        %v1604 = vld [vmem:[%s359 + $0xf8] sm:$0xff]
        %v1605 = vld [vmem:[%s359 + $0x100] sm:$0xff]
        %v1606 = vld [vmem:[%s359 + $0x108] sm:$0xff]
        %v1607 = vld [vmem:[%s359 + $0x110] sm:$0xff]
        %v1608 = vld [vmem:[%s359 + $0x118] sm:$0xff]
        %v1609 = vld [vmem:[%s359 + $0x120] sm:$0xff]
        %v1610 = vld [vmem:[%s359 + $0x128] sm:$0xff]
        %v1611 = vld [vmem:[%s359 + $0x130] sm:$0xff]
        %v1612 = vld [vmem:[%s359 + $0x138] sm:$0xff]
        %v1613 = vld [vmem:[%s359 + $0x140] sm:$0xff]
        %v1614 = vld [vmem:[%s359 + $0x148] sm:$0xff]
        %v1615 = vld [vmem:[%s359 + $0x150] sm:$0xff]
        %v1616 = vld [vmem:[%s359 + $0x158] sm:$0xff]
        %v1617 = vld [vmem:[%s359 + $0x160] sm:$0xff]
        %v1618 = vld [vmem:[%s359 + $0x168] sm:$0xff]
        %v1619 = vld [vmem:[%s359 + $0x170] sm:$0xff]
        %v1620 = vld [vmem:[%s359 + $0x178] sm:$0xff]
        %v1621 = vld [vmem:[%s359 + $0x180] sm:$0xff]
        %v1622 = vld [vmem:[%s359 + $0x188] sm:$0xff]
        %v1623 = vld [vmem:[%s359 + $0x190] sm:$0xff]
        %v1624 = vld [vmem:[%s359 + $0x198] sm:$0xff]
        %v1625 = vld [vmem:[%s359 + $0x1a0] sm:$0xff]
        %v1626 = vld [vmem:[%s359 + $0x1a8] sm:$0xff]
        %v1627 = vld [vmem:[%s359 + $0x1b0] sm:$0xff]
        %v1628 = vld [vmem:[%s359 + $0x1b8] sm:$0xff]
        %v1629 = vld [vmem:[%s359 + $0x1c0] sm:$0xff]
        %v1630 = vld [vmem:[%s359 + $0x1c8] sm:$0xff]
        %v1631 = vld [vmem:[%s359 + $0x1d0] sm:$0xff]
        %v1632 = vld [vmem:[%s359 + $0x1d8] sm:$0xff]
        %v1633 = vld [vmem:[%s359 + $0x1e0] sm:$0xff]
        %v1634 = vld [vmem:[%s359 + $0x1e8] sm:$0xff]
        %v1635 = vld [vmem:[%s359 + $0x1f0] sm:$0xff]
        %v1636 = vld [vmem:[%s359 + $0x1f8] sm:$0xff]
        %v1637 = vld [vmem:[%s308] sm:$0xff]
        %v1638 = vld [vmem:[%s308 + $0x8] sm:$0xff]
        %v1639 = vld [vmem:[%s308 + $0x10] sm:$0xff]
        %v1640 = vld [vmem:[%s308 + $0x18] sm:$0xff]
        %v1641 = vld [vmem:[%s308 + $0x20] sm:$0xff]
        %v1642 = vld [vmem:[%s308 + $0x28] sm:$0xff]
        %v1643 = vld [vmem:[%s308 + $0x30] sm:$0xff]
        %v1644 = vld [vmem:[%s308 + $0x38] sm:$0xff]
        %v1645 = vld [vmem:[%s308 + $0x40] sm:$0xff]
        %v1646 = vld [vmem:[%s308 + $0x48] sm:$0xff]
        %v1647 = vld [vmem:[%s308 + $0x50] sm:$0xff]
        %v1648 = vld [vmem:[%s308 + $0x58] sm:$0xff]
        %v1649 = vld [vmem:[%s308 + $0x60] sm:$0xff]
        %v1650 = vld [vmem:[%s308 + $0x68] sm:$0xff]
        %v1651 = vld [vmem:[%s308 + $0x70] sm:$0xff]
        %v1652 = vld [vmem:[%s308 + $0x78] sm:$0xff]
        %v1653 = vld [vmem:[%s308 + $0x80] sm:$0xff]
        %v1654 = vld [vmem:[%s308 + $0x88] sm:$0xff]
        %v1655 = vld [vmem:[%s308 + $0x90] sm:$0xff]
        %v1656 = vld [vmem:[%s308 + $0x98] sm:$0xff]
        %v1657 = vld [vmem:[%s308 + $0xa0] sm:$0xff]
        %v1658 = vld [vmem:[%s308 + $0xa8] sm:$0xff]
        %v1659 = vld [vmem:[%s308 + $0xb0] sm:$0xff]
        %v1660 = vld [vmem:[%s308 + $0xb8] sm:$0xff]
        %v1661 = vld [vmem:[%s308 + $0xc0] sm:$0xff]
        %v1662 = vld [vmem:[%s308 + $0xc8] sm:$0xff]
        %v1663 = vld [vmem:[%s308 + $0xd0] sm:$0xff]
        %v1664 = vld [vmem:[%s308 + $0xd8] sm:$0xff]
        %v1665 = vld [vmem:[%s308 + $0xe0] sm:$0xff]
        %v1666 = vld [vmem:[%s308 + $0xe8] sm:$0xff]
        %v1667 = vld [vmem:[%s308 + $0xf0] sm:$0xff]
        %v1668 = vld [vmem:[%s308 + $0xf8] sm:$0xff]
        %v1669 = vld [vmem:[%s308 + $0x100] sm:$0xff]
        %v1670 = vld [vmem:[%s308 + $0x108] sm:$0xff]
        %v1671 = vld [vmem:[%s308 + $0x110] sm:$0xff]
        %v1672 = vld [vmem:[%s308 + $0x118] sm:$0xff]
        %v1673 = vld [vmem:[%s308 + $0x120] sm:$0xff]
        %v1674 = vld [vmem:[%s308 + $0x128] sm:$0xff]
        %v1675 = vld [vmem:[%s308 + $0x130] sm:$0xff]
        %v1676 = vld [vmem:[%s308 + $0x138] sm:$0xff]
        %v1677 = vld [vmem:[%s308 + $0x140] sm:$0xff]
        %v1678 = vld [vmem:[%s308 + $0x148] sm:$0xff]
        %v1679 = vld [vmem:[%s308 + $0x150] sm:$0xff]
        %v1680 = vld [vmem:[%s308 + $0x158] sm:$0xff]
        %v1681 = vld [vmem:[%s308 + $0x160] sm:$0xff]
        %v1682 = vld [vmem:[%s308 + $0x168] sm:$0xff]
        %v1683 = vld [vmem:[%s308 + $0x170] sm:$0xff]
        %v1684 = vld [vmem:[%s308 + $0x178] sm:$0xff]
        %v1685 = vld [vmem:[%s308 + $0x180] sm:$0xff]
        %v1686 = vld [vmem:[%s308 + $0x188] sm:$0xff]
        %v1687 = vld [vmem:[%s308 + $0x190] sm:$0xff]
        %v1688 = vld [vmem:[%s308 + $0x198] sm:$0xff]
        %v1689 = vld [vmem:[%s308 + $0x1a0] sm:$0xff]
        %v1690 = vld [vmem:[%s308 + $0x1a8] sm:$0xff]
        %v1691 = vld [vmem:[%s308 + $0x1b0] sm:$0xff]
        %v1692 = vld [vmem:[%s308 + $0x1b8] sm:$0xff]
        %v1693 = vld [vmem:[%s308 + $0x1c0] sm:$0xff]
        %v1694 = vld [vmem:[%s308 + $0x1c8] sm:$0xff]
        %v1695 = vld [vmem:[%s308 + $0x1d0] sm:$0xff]
        %v1696 = vld [vmem:[%s308 + $0x1d8] sm:$0xff]
        %v1697 = vld [vmem:[%s308 + $0x1e0] sm:$0xff]
        %v1698 = vld [vmem:[%s308 + $0x1e8] sm:$0xff]
        %v1699 = vld [vmem:[%s308 + $0x1f0] sm:$0xff]
        %v1700 = vld [vmem:[%s308 + $0x1f8] sm:$0xff]
        %v1701 = vld [vmem:[%s308 + $0x200] sm:$0xff]
        %v1702 = vld [vmem:[%s308 + $0x208] sm:$0xff]
        %v1703 = vld [vmem:[%s308 + $0x210] sm:$0xff]
        %v1704 = vld [vmem:[%s308 + $0x218] sm:$0xff]
        %v1705 = vld [vmem:[%s308 + $0x220] sm:$0xff]
        %v1706 = vld [vmem:[%s308 + $0x228] sm:$0xff]
        %v1707 = vld [vmem:[%s308 + $0x230] sm:$0xff]
        %v1708 = vld [vmem:[%s308 + $0x238] sm:$0xff]
        %v1709 = vld [vmem:[%s308 + $0x240] sm:$0xff]
        %v1710 = vld [vmem:[%s308 + $0x248] sm:$0xff]
        %v1711 = vld [vmem:[%s308 + $0x250] sm:$0xff]
        %v1712 = vld [vmem:[%s308 + $0x258] sm:$0xff]
        %v1713 = vld [vmem:[%s308 + $0x260] sm:$0xff]
        %v1714 = vld [vmem:[%s308 + $0x268] sm:$0xff]
        %v1715 = vld [vmem:[%s308 + $0x270] sm:$0xff]
        %v1716 = vld [vmem:[%s308 + $0x278] sm:$0xff]
        %v1717 = vld [vmem:[%s308 + $0x280] sm:$0xff]
        %v1718 = vld [vmem:[%s308 + $0x288] sm:$0xff]
        %v1719 = vld [vmem:[%s308 + $0x290] sm:$0xff]
        %v1720 = vld [vmem:[%s308 + $0x298] sm:$0xff]
        %v1721 = vld [vmem:[%s308 + $0x2a0] sm:$0xff]
        %v1722 = vld [vmem:[%s308 + $0x2a8] sm:$0xff]
        %v1723 = vld [vmem:[%s308 + $0x2b0] sm:$0xff]
        %v1724 = vld [vmem:[%s308 + $0x2b8] sm:$0xff]
        %v1725 = vld [vmem:[%s308 + $0x2c0] sm:$0xff]
        %v1726 = vld [vmem:[%s308 + $0x2c8] sm:$0xff]
        %v1727 = vld [vmem:[%s308 + $0x2d0] sm:$0xff]
        %v1728 = vld [vmem:[%s308 + $0x2d8] sm:$0xff]
        %v1729 = vld [vmem:[%s308 + $0x2e0] sm:$0xff]
        %v1730 = vld [vmem:[%s308 + $0x2e8] sm:$0xff]
        %v1731 = vld [vmem:[%s308 + $0x2f0] sm:$0xff]
        %v1732 = vld [vmem:[%s308 + $0x2f8] sm:$0xff]
        %v1733 = vld [vmem:[%s308 + $0x300] sm:$0xff]
        %v1734 = vld [vmem:[%s308 + $0x308] sm:$0xff]
        %v1735 = vld [vmem:[%s308 + $0x310] sm:$0xff]
        %v1736 = vld [vmem:[%s308 + $0x318] sm:$0xff]
        %v1737 = vld [vmem:[%s308 + $0x320] sm:$0xff]
        %v1738 = vld [vmem:[%s308 + $0x328] sm:$0xff]
        %v1739 = vld [vmem:[%s308 + $0x330] sm:$0xff]
        %v1740 = vld [vmem:[%s308 + $0x338] sm:$0xff]
        %v1741 = vld [vmem:[%s308 + $0x340] sm:$0xff]
        %v1742 = vld [vmem:[%s308 + $0x348] sm:$0xff]
        %v1743 = vld [vmem:[%s308 + $0x350] sm:$0xff]
        %v1744 = vld [vmem:[%s308 + $0x358] sm:$0xff]
        %v1745 = vld [vmem:[%s308 + $0x360] sm:$0xff]
        %v1746 = vld [vmem:[%s308 + $0x368] sm:$0xff]
        %v1747 = vld [vmem:[%s308 + $0x370] sm:$0xff]
        %v1748 = vld [vmem:[%s308 + $0x378] sm:$0xff]
        %v1749 = vld [vmem:[%s308 + $0x380] sm:$0xff]
        %v1750 = vld [vmem:[%s308 + $0x388] sm:$0xff]
        %v1751 = vld [vmem:[%s308 + $0x390] sm:$0xff]
        %v1752 = vld [vmem:[%s308 + $0x398] sm:$0xff]
        %v1753 = vld [vmem:[%s308 + $0x3a0] sm:$0xff]
        %v1754 = vld [vmem:[%s308 + $0x3a8] sm:$0xff]
        %v1755 = vld [vmem:[%s308 + $0x3b0] sm:$0xff]
        %v1756 = vld [vmem:[%s308 + $0x3b8] sm:$0xff]
        %v1757 = vld [vmem:[%s308 + $0x3c0] sm:$0xff]
        %v1758 = vld [vmem:[%s308 + $0x3c8] sm:$0xff]
        %v1759 = vld [vmem:[%s308 + $0x3d0] sm:$0xff]
        %v1760 = vld [vmem:[%s308 + $0x3d8] sm:$0xff]
        %v1761 = vld [vmem:[%s308 + $0x3e0] sm:$0xff]
        %v1762 = vld [vmem:[%s308 + $0x3e8] sm:$0xff]
        %v1763 = vld [vmem:[%s308 + $0x3f0] sm:$0xff]
        %v1764 = vld [vmem:[%s308 + $0x3f8] sm:$0xff]
        %v1893 = vunpack.c.l.b16 %v1637
        %v1894 = vunpack.c.h.b16 %v1637
        %v1895 = vunpack.c.l.b16 %v1638
        %v1896 = vunpack.c.h.b16 %v1638
        %v1897 = vunpack.c.l.b16 %v1639
        %v1898 = vunpack.c.h.b16 %v1639
        %v1899 = vunpack.c.l.b16 %v1640
        %v1900 = vunpack.c.h.b16 %v1640
        %v1901 = vunpack.c.l.b16 %v1641
        %v1902 = vunpack.c.h.b16 %v1641
        %v1903 = vunpack.c.l.b16 %v1642
        %v1904 = vunpack.c.h.b16 %v1642
        %v1905 = vunpack.c.l.b16 %v1643
        %v1906 = vunpack.c.h.b16 %v1643
        %v1907 = vunpack.c.l.b16 %v1644
        %v1908 = vunpack.c.h.b16 %v1644
        %v1909 = vunpack.c.l.b16 %v1645
        %v1910 = vunpack.c.h.b16 %v1645
        %v1911 = vunpack.c.l.b16 %v1646
        %v1912 = vunpack.c.h.b16 %v1646
        %v1913 = vunpack.c.l.b16 %v1647
        %v1914 = vunpack.c.h.b16 %v1647
        %v1915 = vunpack.c.l.b16 %v1648
        %v1916 = vunpack.c.h.b16 %v1648
        %v1917 = vunpack.c.l.b16 %v1649
        %v1918 = vunpack.c.h.b16 %v1649
        %v1919 = vunpack.c.l.b16 %v1650
        %v1920 = vunpack.c.h.b16 %v1650
        %v1921 = vunpack.c.l.b16 %v1651
        %v1922 = vunpack.c.h.b16 %v1651
        %v1923 = vunpack.c.l.b16 %v1652
        %v1924 = vunpack.c.h.b16 %v1652
        %v1925 = vunpack.c.l.b16 %v1653
        %v1926 = vunpack.c.h.b16 %v1653
        %v1927 = vunpack.c.l.b16 %v1654
        %v1928 = vunpack.c.h.b16 %v1654
        %v1929 = vunpack.c.l.b16 %v1655
        %v1930 = vunpack.c.h.b16 %v1655
        %v1931 = vunpack.c.l.b16 %v1656
        %v1932 = vunpack.c.h.b16 %v1656
        %v1933 = vunpack.c.l.b16 %v1657
        %v1934 = vunpack.c.h.b16 %v1657
        %v1935 = vunpack.c.l.b16 %v1658
        %v1936 = vunpack.c.h.b16 %v1658
        %v1937 = vunpack.c.l.b16 %v1659
        %v1938 = vunpack.c.h.b16 %v1659
        %v1939 = vunpack.c.l.b16 %v1660
        %v1940 = vunpack.c.h.b16 %v1660
        %v1941 = vunpack.c.l.b16 %v1661
        %v1942 = vunpack.c.h.b16 %v1661
        %v1943 = vunpack.c.l.b16 %v1662
        %v1944 = vunpack.c.h.b16 %v1662
        %v1945 = vunpack.c.l.b16 %v1663
        %v1946 = vunpack.c.h.b16 %v1663
        %v1947 = vunpack.c.l.b16 %v1664
        %v1948 = vunpack.c.h.b16 %v1664
        %v1949 = vunpack.c.l.b16 %v1665
        %v1950 = vunpack.c.h.b16 %v1665
        %v1951 = vunpack.c.l.b16 %v1666
        %v1952 = vunpack.c.h.b16 %v1666
        %v1953 = vunpack.c.l.b16 %v1667
        %v1954 = vunpack.c.h.b16 %v1667
        %v1955 = vunpack.c.l.b16 %v1668
        %v1956 = vunpack.c.h.b16 %v1668
        %v1957 = vunpack.c.l.b16 %v1669
        %v1958 = vunpack.c.h.b16 %v1669
        %v1959 = vunpack.c.l.b16 %v1670
        %v1960 = vunpack.c.h.b16 %v1670
        %v1961 = vunpack.c.l.b16 %v1671
        %v1962 = vunpack.c.h.b16 %v1671
        %v1963 = vunpack.c.l.b16 %v1672
        %v1964 = vunpack.c.h.b16 %v1672
        %v1965 = vunpack.c.l.b16 %v1673
        %v1966 = vunpack.c.h.b16 %v1673
        %v1967 = vunpack.c.l.b16 %v1674
        %v1968 = vunpack.c.h.b16 %v1674
        %v1969 = vunpack.c.l.b16 %v1675
        %v1970 = vunpack.c.h.b16 %v1675
        %v1971 = vunpack.c.l.b16 %v1676
        %v1972 = vunpack.c.h.b16 %v1676
        %v1973 = vunpack.c.l.b16 %v1677
        %v1974 = vunpack.c.h.b16 %v1677
        %v1975 = vunpack.c.l.b16 %v1678
        %v1976 = vunpack.c.h.b16 %v1678
        %v1977 = vunpack.c.l.b16 %v1679
        %v1978 = vunpack.c.h.b16 %v1679
        %v1979 = vunpack.c.l.b16 %v1680
        %v1980 = vunpack.c.h.b16 %v1680
        %v1981 = vunpack.c.l.b16 %v1681
        %v1982 = vunpack.c.h.b16 %v1681
        %v1983 = vunpack.c.l.b16 %v1682
        %v1984 = vunpack.c.h.b16 %v1682
        %v1985 = vunpack.c.l.b16 %v1683
        %v1986 = vunpack.c.h.b16 %v1683
        %v1987 = vunpack.c.l.b16 %v1684
        %v1988 = vunpack.c.h.b16 %v1684
        %v1989 = vunpack.c.l.b16 %v1685
        %v1990 = vunpack.c.h.b16 %v1685
        %v1991 = vunpack.c.l.b16 %v1686
        %v1992 = vunpack.c.h.b16 %v1686
        %v1993 = vunpack.c.l.b16 %v1687
        %v1994 = vunpack.c.h.b16 %v1687
        %v1995 = vunpack.c.l.b16 %v1688
        %v1996 = vunpack.c.h.b16 %v1688
        %v1997 = vunpack.c.l.b16 %v1689
        %v1998 = vunpack.c.h.b16 %v1689
        %v1999 = vunpack.c.l.b16 %v1690
        %v2000 = vunpack.c.h.b16 %v1690
        %v2001 = vunpack.c.l.b16 %v1691
        %v2002 = vunpack.c.h.b16 %v1691
        %v2003 = vunpack.c.l.b16 %v1692
        %v2004 = vunpack.c.h.b16 %v1692
        %v2005 = vunpack.c.l.b16 %v1693
        %v2006 = vunpack.c.h.b16 %v1693
        %v2007 = vunpack.c.l.b16 %v1694
        %v2008 = vunpack.c.h.b16 %v1694
        %v2009 = vunpack.c.l.b16 %v1695
        %v2010 = vunpack.c.h.b16 %v1695
        %v2011 = vunpack.c.l.b16 %v1696
        %v2012 = vunpack.c.h.b16 %v1696
        %v2013 = vunpack.c.l.b16 %v1697
        %v2014 = vunpack.c.h.b16 %v1697
        %v2015 = vunpack.c.l.b16 %v1698
        %v2016 = vunpack.c.h.b16 %v1698
        %v2017 = vunpack.c.l.b16 %v1699
        %v2018 = vunpack.c.h.b16 %v1699
        %v2019 = vunpack.c.l.b16 %v1700
        %v2020 = vunpack.c.h.b16 %v1700
        %v2021 = vunpack.c.l.b16 %v1701
        %v2022 = vunpack.c.h.b16 %v1701
        %v2023 = vunpack.c.l.b16 %v1702
        %v2024 = vunpack.c.h.b16 %v1702
        %v2025 = vunpack.c.l.b16 %v1703
        %v2026 = vunpack.c.h.b16 %v1703
        %v2027 = vunpack.c.l.b16 %v1704
        %v2028 = vunpack.c.h.b16 %v1704
        %v2029 = vunpack.c.l.b16 %v1705
        %v2030 = vunpack.c.h.b16 %v1705
        %v2031 = vunpack.c.l.b16 %v1706
        %v2032 = vunpack.c.h.b16 %v1706
        %v2033 = vunpack.c.l.b16 %v1707
        %v2034 = vunpack.c.h.b16 %v1707
        %v2035 = vunpack.c.l.b16 %v1708
        %v2036 = vunpack.c.h.b16 %v1708
        %v2037 = vunpack.c.l.b16 %v1709
        %v2038 = vunpack.c.h.b16 %v1709
        %v2039 = vunpack.c.l.b16 %v1710
        %v2040 = vunpack.c.h.b16 %v1710
        %v2041 = vunpack.c.l.b16 %v1711
        %v2042 = vunpack.c.h.b16 %v1711
        %v2043 = vunpack.c.l.b16 %v1712
        %v2044 = vunpack.c.h.b16 %v1712
        %v2045 = vunpack.c.l.b16 %v1713
        %v2046 = vunpack.c.h.b16 %v1713
        %v2047 = vunpack.c.l.b16 %v1714
        %v2048 = vunpack.c.h.b16 %v1714
        %v2049 = vunpack.c.l.b16 %v1715
        %v2050 = vunpack.c.h.b16 %v1715
        %v2051 = vunpack.c.l.b16 %v1716
        %v2052 = vunpack.c.h.b16 %v1716
        %v2053 = vunpack.c.l.b16 %v1717
        %v2054 = vunpack.c.h.b16 %v1717
        %v2055 = vunpack.c.l.b16 %v1718
        %v2056 = vunpack.c.h.b16 %v1718
        %v2057 = vunpack.c.l.b16 %v1719
        %v2058 = vunpack.c.h.b16 %v1719
        %v2059 = vunpack.c.l.b16 %v1720
        %v2060 = vunpack.c.h.b16 %v1720
        %v2061 = vunpack.c.l.b16 %v1721
        %v2062 = vunpack.c.h.b16 %v1721
        %v2063 = vunpack.c.l.b16 %v1722
        %v2064 = vunpack.c.h.b16 %v1722
        %v2065 = vunpack.c.l.b16 %v1723
        %v2066 = vunpack.c.h.b16 %v1723
        %v2067 = vunpack.c.l.b16 %v1724
        %v2068 = vunpack.c.h.b16 %v1724
        %v2069 = vunpack.c.l.b16 %v1725
        %v2070 = vunpack.c.h.b16 %v1725
        %v2071 = vunpack.c.l.b16 %v1726
        %v2072 = vunpack.c.h.b16 %v1726
        %v2073 = vunpack.c.l.b16 %v1727
        %v2074 = vunpack.c.h.b16 %v1727
        %v2075 = vunpack.c.l.b16 %v1728
        %v2076 = vunpack.c.h.b16 %v1728
        %v2077 = vunpack.c.l.b16 %v1729
        %v2078 = vunpack.c.h.b16 %v1729
        %v2079 = vunpack.c.l.b16 %v1730
        %v2080 = vunpack.c.h.b16 %v1730
        %v2081 = vunpack.c.l.b16 %v1731
        %v2082 = vunpack.c.h.b16 %v1731
        %v2083 = vunpack.c.l.b16 %v1732
        %v2084 = vunpack.c.h.b16 %v1732
        %v2085 = vunpack.c.l.b16 %v1733
        %v2086 = vunpack.c.h.b16 %v1733
        %v2087 = vunpack.c.l.b16 %v1734
        %v2088 = vunpack.c.h.b16 %v1734
        %v2089 = vunpack.c.l.b16 %v1735
        %v2090 = vunpack.c.h.b16 %v1735
        %v2091 = vunpack.c.l.b16 %v1736
        %v2092 = vunpack.c.h.b16 %v1736
        %v2093 = vunpack.c.l.b16 %v1737
        %v2094 = vunpack.c.h.b16 %v1737
        %v2095 = vunpack.c.l.b16 %v1738
        %v2096 = vunpack.c.h.b16 %v1738
        %v2097 = vunpack.c.l.b16 %v1739
        %v2098 = vunpack.c.h.b16 %v1739
        %v2099 = vunpack.c.l.b16 %v1740
        %v2100 = vunpack.c.h.b16 %v1740
        %v2101 = vunpack.c.l.b16 %v1741
        %v2102 = vunpack.c.h.b16 %v1741
        %v2103 = vunpack.c.l.b16 %v1742
        %v2104 = vunpack.c.h.b16 %v1742
        %v2105 = vunpack.c.l.b16 %v1743
        %v2106 = vunpack.c.h.b16 %v1743
        %v2107 = vunpack.c.l.b16 %v1744
        %v2108 = vunpack.c.h.b16 %v1744
        %v2109 = vunpack.c.l.b16 %v1745
        %v2110 = vunpack.c.h.b16 %v1745
        %v2111 = vunpack.c.l.b16 %v1746
        %v2112 = vunpack.c.h.b16 %v1746
        %v2113 = vunpack.c.l.b16 %v1747
        %v2114 = vunpack.c.h.b16 %v1747
        %v2115 = vunpack.c.l.b16 %v1748
        %v2116 = vunpack.c.h.b16 %v1748
        %v2117 = vunpack.c.l.b16 %v1749
        %v2118 = vunpack.c.h.b16 %v1749
        %v2119 = vunpack.c.l.b16 %v1750
        %v2120 = vunpack.c.h.b16 %v1750
        %v2121 = vunpack.c.l.b16 %v1751
        %v2122 = vunpack.c.h.b16 %v1751
        %v2123 = vunpack.c.l.b16 %v1752
        %v2124 = vunpack.c.h.b16 %v1752
        %v2125 = vunpack.c.l.b16 %v1753
        %v2126 = vunpack.c.h.b16 %v1753
        %v2127 = vunpack.c.l.b16 %v1754
        %v2128 = vunpack.c.h.b16 %v1754
        %v2129 = vunpack.c.l.b16 %v1755
        %v2130 = vunpack.c.h.b16 %v1755
        %v2131 = vunpack.c.l.b16 %v1756
        %v2132 = vunpack.c.h.b16 %v1756
        %v2133 = vunpack.c.l.b16 %v1757
        %v2134 = vunpack.c.h.b16 %v1757
        %v2135 = vunpack.c.l.b16 %v1758
        %v2136 = vunpack.c.h.b16 %v1758
        %v2137 = vunpack.c.l.b16 %v1759
        %v2138 = vunpack.c.h.b16 %v1759
        %v2139 = vunpack.c.l.b16 %v1760
        %v2140 = vunpack.c.h.b16 %v1760
        %v2141 = vunpack.c.l.b16 %v1761
        %v2142 = vunpack.c.h.b16 %v1761
        %v2143 = vunpack.c.l.b16 %v1762
        %v2144 = vunpack.c.h.b16 %v1762
        %v2145 = vunpack.c.l.b16 %v1763
        %v2146 = vunpack.c.h.b16 %v1763
        %v2147 = vunpack.c.l.b16 %v1764
        %v2148 = vunpack.c.h.b16 %v1764
        %v2149 = vpack.c.b16 %v1897, %v1893
        %v2150 = vpack.c.b16 %v1898, %v1894
        %v2151 = vpack.c.b16 %v1899, %v1895
        %v2152 = vpack.c.b16 %v1900, %v1896
        %v2153 = vpack.c.b16 %v1905, %v1901
        %v2154 = vpack.c.b16 %v1906, %v1902
        %v2155 = vpack.c.b16 %v1907, %v1903
        %v2156 = vpack.c.b16 %v1908, %v1904
        %v2157 = vpack.c.b16 %v1913, %v1909
        %v2158 = vpack.c.b16 %v1914, %v1910
        %v2159 = vpack.c.b16 %v1915, %v1911
        %v2160 = vpack.c.b16 %v1916, %v1912
        %v2161 = vpack.c.b16 %v1921, %v1917
        %v2162 = vpack.c.b16 %v1922, %v1918
        %v2163 = vpack.c.b16 %v1923, %v1919
        %v2164 = vpack.c.b16 %v1924, %v1920
        %v2165 = vpack.c.b16 %v1929, %v1925
        %v2166 = vpack.c.b16 %v1930, %v1926
        %v2167 = vpack.c.b16 %v1931, %v1927
        %v2168 = vpack.c.b16 %v1932, %v1928
        %v2169 = vpack.c.b16 %v1937, %v1933
        %v2170 = vpack.c.b16 %v1938, %v1934
        %v2171 = vpack.c.b16 %v1939, %v1935
        %v2172 = vpack.c.b16 %v1940, %v1936
        %v2173 = vpack.c.b16 %v1945, %v1941
        %v2174 = vpack.c.b16 %v1946, %v1942
        %v2175 = vpack.c.b16 %v1947, %v1943
        %v2176 = vpack.c.b16 %v1948, %v1944
        %v2177 = vpack.c.b16 %v1953, %v1949
        %v2178 = vpack.c.b16 %v1954, %v1950
        %v2179 = vpack.c.b16 %v1955, %v1951
        %v2180 = vpack.c.b16 %v1956, %v1952
        %v2181 = vpack.c.b16 %v1961, %v1957
        %v2182 = vpack.c.b16 %v1962, %v1958
        %v2183 = vpack.c.b16 %v1963, %v1959
        %v2184 = vpack.c.b16 %v1964, %v1960
        %v2185 = vpack.c.b16 %v1969, %v1965
        %v2186 = vpack.c.b16 %v1970, %v1966
        %v2187 = vpack.c.b16 %v1971, %v1967
        %v2188 = vpack.c.b16 %v1972, %v1968
        %v2189 = vpack.c.b16 %v1977, %v1973
        %v2190 = vpack.c.b16 %v1978, %v1974
        %v2191 = vpack.c.b16 %v1979, %v1975
        %v2192 = vpack.c.b16 %v1980, %v1976
        %v2193 = vpack.c.b16 %v1985, %v1981
        %v2194 = vpack.c.b16 %v1986, %v1982
        %v2195 = vpack.c.b16 %v1987, %v1983
        %v2196 = vpack.c.b16 %v1988, %v1984
        %v2197 = vpack.c.b16 %v1993, %v1989
        %v2198 = vpack.c.b16 %v1994, %v1990
        %v2199 = vpack.c.b16 %v1995, %v1991
        %v2200 = vpack.c.b16 %v1996, %v1992
        %v2201 = vpack.c.b16 %v2001, %v1997
        %v2202 = vpack.c.b16 %v2002, %v1998
        %v2203 = vpack.c.b16 %v2003, %v1999
        %v2204 = vpack.c.b16 %v2004, %v2000
        %v2205 = vpack.c.b16 %v2009, %v2005
        %v2206 = vpack.c.b16 %v2010, %v2006
        %v2207 = vpack.c.b16 %v2011, %v2007
        %v2208 = vpack.c.b16 %v2012, %v2008
        %v2209 = vpack.c.b16 %v2017, %v2013
        %v2210 = vpack.c.b16 %v2018, %v2014
        %v2211 = vpack.c.b16 %v2019, %v2015
        %v2212 = vpack.c.b16 %v2020, %v2016
        %v2213 = vpack.c.b16 %v2025, %v2021
        %v2214 = vpack.c.b16 %v2026, %v2022
        %v2215 = vpack.c.b16 %v2027, %v2023
        %v2216 = vpack.c.b16 %v2028, %v2024
        %v2217 = vpack.c.b16 %v2033, %v2029
        %v2218 = vpack.c.b16 %v2034, %v2030
        %v2219 = vpack.c.b16 %v2035, %v2031
        %v2220 = vpack.c.b16 %v2036, %v2032
        %v2221 = vpack.c.b16 %v2041, %v2037
        %v2222 = vpack.c.b16 %v2042, %v2038
        %v2223 = vpack.c.b16 %v2043, %v2039
        %v2224 = vpack.c.b16 %v2044, %v2040
        %v2225 = vpack.c.b16 %v2049, %v2045
        %v2226 = vpack.c.b16 %v2050, %v2046
        %v2227 = vpack.c.b16 %v2051, %v2047
        %v2228 = vpack.c.b16 %v2052, %v2048
        %v2229 = vpack.c.b16 %v2057, %v2053
        %v2230 = vpack.c.b16 %v2058, %v2054
        %v2231 = vpack.c.b16 %v2059, %v2055
        %v2232 = vpack.c.b16 %v2060, %v2056
        %v2233 = vpack.c.b16 %v2065, %v2061
        %v2234 = vpack.c.b16 %v2066, %v2062
        %v2235 = vpack.c.b16 %v2067, %v2063
        %v2236 = vpack.c.b16 %v2068, %v2064
        %v2237 = vpack.c.b16 %v2073, %v2069
        %v2238 = vpack.c.b16 %v2074, %v2070
        %v2239 = vpack.c.b16 %v2075, %v2071
        %v2240 = vpack.c.b16 %v2076, %v2072
        %v2241 = vpack.c.b16 %v2081, %v2077
        %v2242 = vpack.c.b16 %v2082, %v2078
        %v2243 = vpack.c.b16 %v2083, %v2079
        %v2244 = vpack.c.b16 %v2084, %v2080
        %v2245 = vpack.c.b16 %v2089, %v2085
        %v2246 = vpack.c.b16 %v2090, %v2086
        %v2247 = vpack.c.b16 %v2091, %v2087
        %v2248 = vpack.c.b16 %v2092, %v2088
        %v2249 = vpack.c.b16 %v2097, %v2093
        %v2250 = vpack.c.b16 %v2098, %v2094
        %v2251 = vpack.c.b16 %v2099, %v2095
        %v2252 = vpack.c.b16 %v2100, %v2096
        %v2253 = vpack.c.b16 %v2105, %v2101
        %v2254 = vpack.c.b16 %v2106, %v2102
        %v2255 = vpack.c.b16 %v2107, %v2103
        %v2256 = vpack.c.b16 %v2108, %v2104
        %v2257 = vpack.c.b16 %v2113, %v2109
        %v2258 = vpack.c.b16 %v2114, %v2110
        %v2259 = vpack.c.b16 %v2115, %v2111
        %v2260 = vpack.c.b16 %v2116, %v2112
        %v2261 = vpack.c.b16 %v2121, %v2117
        %v2262 = vpack.c.b16 %v2122, %v2118
        %v2263 = vpack.c.b16 %v2123, %v2119
        %v2264 = vpack.c.b16 %v2124, %v2120
        %v2265 = vpack.c.b16 %v2129, %v2125
        %v2266 = vpack.c.b16 %v2130, %v2126
        %v2267 = vpack.c.b16 %v2131, %v2127
        %v2268 = vpack.c.b16 %v2132, %v2128
        %v2269 = vpack.c.b16 %v2137, %v2133
        %v2270 = vpack.c.b16 %v2138, %v2134
        %v2271 = vpack.c.b16 %v2139, %v2135
        %v2272 = vpack.c.b16 %v2140, %v2136
        %v2273 = vpack.c.b16 %v2145, %v2141
        %v2274 = vpack.c.b16 %v2146, %v2142
        %v2275 = vpack.c.b16 %v2147, %v2143
        %v2276 = vpack.c.b16 %v2148, %v2144
        %2405 = vmatprep.subr.bf16.mxu0 0
        %2406 = vmatpush1.bf16.msra.mxu0 %v1541
        %2407 = vmatprep.subr.bf16.mxu0 0
        %2408 = vmatpush1.bf16.msra.mxu0 %v1542
        %2409 = vmatprep.subr.bf16.mxu0 0
        %2410 = vmatpush1.bf16.msra.mxu0 %v1543
        %2411 = vmatprep.subr.bf16.mxu0 0
        %2412 = vmatpush1.bf16.msra.mxu0 %v1544
        %2413 = vmatprep.subr.bf16.mxu0 0
        %2414 = vmatpush1.bf16.msra.mxu0 %v1545
        %2415 = vmatprep.subr.bf16.mxu0 0
        %2416 = vmatpush1.bf16.msra.mxu0 %v1546
        %2417 = vmatprep.subr.bf16.mxu0 0
        %2418 = vmatpush1.bf16.msra.mxu0 %v1547
        %2419 = vmatprep.subr.bf16.mxu0 0
        %2420 = vmatpush1.bf16.msra.mxu0 %v1548
        %2421 = vmatprep.subr.bf16.mxu0 0
        %2422 = vmatpush1.bf16.msra.mxu0 %v1549
        %2423 = vmatprep.subr.bf16.mxu0 0
        %2424 = vmatpush1.bf16.msra.mxu0 %v1550
        %2425 = vmatprep.subr.bf16.mxu0 0
        %2426 = vmatpush1.bf16.msra.mxu0 %v1551
        %2427 = vmatprep.subr.bf16.mxu0 0
        %2428 = vmatpush1.bf16.msra.mxu0 %v1552
        %2429 = vmatprep.subr.bf16.mxu0 0
        %2430 = vmatpush1.bf16.msra.mxu0 %v1553
        %2431 = vmatprep.subr.bf16.mxu0 0
        %2432 = vmatpush1.bf16.msra.mxu0 %v1554
        %2433 = vmatprep.subr.bf16.mxu0 0
        %2434 = vmatpush1.bf16.msra.mxu0 %v1555
        %2435 = vmatprep.subr.bf16.mxu0 0
        %2436 = vmatpush1.bf16.msra.mxu0 %v1556
        %2437 = vmatprep.mubr.bf16.mxu0 %v2150
        %2438 = vmatmul.mubr.bf16.gmra.mrb[0].mxu0 %v2149
        %v2439 = vpop.f32.mrb[0].mxu0
        %v2440 = vadd.f32 0.0, %v2439
        %v2441 = vpop.f32.mrb[0].mxu0
        %v2442 = vpop.f32.mrb[0].mxu0
        %v2443 = vadd.f32 0.0, %v2442
        %v2444 = vpop.f32.mrb[0].mxu0
        %2445 = vmatprep.mubr.bf16.mxu0 %v2154
        %2446 = vmatmul.mubr.bf16.gmra.mrb[0].mxu0 %v2153
        %v2447 = vpop.f32.mrb[0].mxu0
        %v2448 = vadd.f32 0.0, %v2447
        %v2449 = vpop.f32.mrb[0].mxu0
        %v2450 = vpop.f32.mrb[0].mxu0
        %v2451 = vadd.f32 0.0, %v2450
        %v2452 = vpop.f32.mrb[0].mxu0
        %2453 = vmatprep.mubr.bf16.mxu0 %v2158
        %2454 = vmatmul.mubr.bf16.gmra.mrb[0].mxu0 %v2157
        %v2455 = vpop.f32.mrb[0].mxu0
        %v2456 = vadd.f32 0.0, %v2455
        %v2457 = vpop.f32.mrb[0].mxu0
        %v2458 = vpop.f32.mrb[0].mxu0
        %v2459 = vadd.f32 0.0, %v2458
        %v2460 = vpop.f32.mrb[0].mxu0
        %2461 = vmatprep.mubr.bf16.mxu0 %v2162
        %2462 = vmatmul.mubr.bf16.gmra.mrb[0].mxu0 %v2161
        %v2463 = vpop.f32.mrb[0].mxu0
        %v2464 = vadd.f32 0.0, %v2463
        %v2465 = vpop.f32.mrb[0].mxu0
        %v2466 = vpop.f32.mrb[0].mxu0
        %v2467 = vadd.f32 0.0, %v2466
        %v2468 = vpop.f32.mrb[0].mxu0
        %2469 = vmatprep.mubr.bf16.mxu0 %v2166
        %2470 = vmatmul.mubr.bf16.gmra.mrb[0].mxu0 %v2165
        %v2471 = vpop.f32.mrb[0].mxu0
        %v2472 = vadd.f32 0.0, %v2471
        %v2473 = vpop.f32.mrb[0].mxu0
        %v2474 = vpop.f32.mrb[0].mxu0
        %v2475 = vadd.f32 0.0, %v2474
        %v2476 = vpop.f32.mrb[0].mxu0
        %2477 = vmatprep.mubr.bf16.mxu0 %v2170
        %2478 = vmatmul.mubr.bf16.gmra.mrb[0].mxu0 %v2169
        %v2479 = vpop.f32.mrb[0].mxu0
        %v2480 = vadd.f32 0.0, %v2479
        %v2481 = vpop.f32.mrb[0].mxu0
        %v2482 = vpop.f32.mrb[0].mxu0
        %v2483 = vadd.f32 0.0, %v2482
        %v2484 = vpop.f32.mrb[0].mxu0
        %2485 = vmatprep.mubr.bf16.mxu0 %v2174
        %2486 = vmatmul.mubr.bf16.gmra.mrb[0].mxu0 %v2173
        %v2487 = vpop.f32.mrb[0].mxu0
        %v2488 = vadd.f32 0.0, %v2487
        %v2489 = vpop.f32.mrb[0].mxu0
        %v2490 = vpop.f32.mrb[0].mxu0
        %v2491 = vadd.f32 0.0, %v2490
        %v2492 = vpop.f32.mrb[0].mxu0
        %2493 = vmatprep.mubr.bf16.mxu0 %v2178
        %2494 = vmatmul.mubr.bf16.gmra.mrb[0].mxu0 %v2177
        %v2495 = vpop.f32.mrb[0].mxu0
        %v2496 = vadd.f32 0.0, %v2495
        %v2497 = vpop.f32.mrb[0].mxu0
        %v2498 = vpop.f32.mrb[0].mxu0
        %v2499 = vadd.f32 0.0, %v2498
        %v2500 = vpop.f32.mrb[0].mxu0
        %2501 = vmatprep.mubr.bf16.mxu0 %v2182
        %2502 = vmatmul.mubr.bf16.gmra.mrb[0].mxu0 %v2181
        %v2503 = vpop.f32.mrb[0].mxu0
        %v2504 = vadd.f32 0.0, %v2503
        %v2505 = vpop.f32.mrb[0].mxu0
        %v2506 = vpop.f32.mrb[0].mxu0
        %v2507 = vadd.f32 0.0, %v2506
        %v2508 = vpop.f32.mrb[0].mxu0
        %2509 = vmatprep.mubr.bf16.mxu0 %v2186
        %2510 = vmatmul.mubr.bf16.gmra.mrb[0].mxu0 %v2185
        %v2511 = vpop.f32.mrb[0].mxu0
        %v2512 = vadd.f32 0.0, %v2511
        %v2513 = vpop.f32.mrb[0].mxu0
        %v2514 = vpop.f32.mrb[0].mxu0
        %v2515 = vadd.f32 0.0, %v2514
        %v2516 = vpop.f32.mrb[0].mxu0
        %2517 = vmatprep.mubr.bf16.mxu0 %v2190
        %2518 = vmatmul.mubr.bf16.gmra.mrb[0].mxu0 %v2189
        %v2519 = vpop.f32.mrb[0].mxu0
        %v2520 = vadd.f32 0.0, %v2519
        %v2521 = vpop.f32.mrb[0].mxu0
        %v2522 = vpop.f32.mrb[0].mxu0
        %v2523 = vadd.f32 0.0, %v2522
        %v2524 = vpop.f32.mrb[0].mxu0
        %2525 = vmatprep.mubr.bf16.mxu0 %v2194
        %2526 = vmatmul.mubr.bf16.gmra.mrb[0].mxu0 %v2193
        %v2527 = vpop.f32.mrb[0].mxu0
        %v2528 = vadd.f32 0.0, %v2527
        %v2529 = vpop.f32.mrb[0].mxu0
        %v2530 = vpop.f32.mrb[0].mxu0
        %v2531 = vadd.f32 0.0, %v2530
        %v2532 = vpop.f32.mrb[0].mxu0
        %2533 = vmatprep.mubr.bf16.mxu0 %v2198
        %2534 = vmatmul.mubr.bf16.gmra.mrb[0].mxu0 %v2197
        %v2535 = vpop.f32.mrb[0].mxu0
        %v2536 = vadd.f32 0.0, %v2535
        %v2537 = vpop.f32.mrb[0].mxu0
        %v2538 = vpop.f32.mrb[0].mxu0
        %v2539 = vadd.f32 0.0, %v2538
        %v2540 = vpop.f32.mrb[0].mxu0
        %2541 = vmatprep.mubr.bf16.mxu0 %v2202
        %2542 = vmatmul.mubr.bf16.gmra.mrb[0].mxu0 %v2201
        %v2543 = vpop.f32.mrb[0].mxu0
        %v2544 = vadd.f32 0.0, %v2543
        %v2545 = vpop.f32.mrb[0].mxu0
        %v2546 = vpop.f32.mrb[0].mxu0
        %v2547 = vadd.f32 0.0, %v2546
        %v2548 = vpop.f32.mrb[0].mxu0
        %2549 = vmatprep.mubr.bf16.mxu0 %v2206
        %2550 = vmatmul.mubr.bf16.gmra.mrb[0].mxu0 %v2205
        %v2551 = vpop.f32.mrb[0].mxu0
        %v2552 = vadd.f32 0.0, %v2551
        %v2553 = vpop.f32.mrb[0].mxu0
        %v2554 = vpop.f32.mrb[0].mxu0
        %v2555 = vadd.f32 0.0, %v2554
        %v2556 = vpop.f32.mrb[0].mxu0
        %2557 = vmatprep.mubr.bf16.mxu0 %v2210
        %2558 = vmatmul.mubr.bf16.gmra.mrb[0].mxu0 %v2209
        %v2559 = vpop.f32.mrb[0].mxu0
        %v2560 = vadd.f32 0.0, %v2559
        %v2561 = vpop.f32.mrb[0].mxu0
        %v2562 = vpop.f32.mrb[0].mxu0
        %v2563 = vadd.f32 0.0, %v2562
        %v2564 = vpop.f32.mrb[0].mxu0
        %2565 = vmatprep.mubr.bf16.mxu0 %v2214
        %2566 = vmatmul.mubr.bf16.gmra.mrb[0].mxu0 %v2213
        %v2567 = vpop.f32.mrb[0].mxu0
        %v2568 = vadd.f32 0.0, %v2567
        %v2569 = vpop.f32.mrb[0].mxu0
        %v2570 = vpop.f32.mrb[0].mxu0
        %v2571 = vadd.f32 0.0, %v2570
        %v2572 = vpop.f32.mrb[0].mxu0
        %2573 = vmatprep.mubr.bf16.mxu0 %v2218
        %2574 = vmatmul.mubr.bf16.gmra.mrb[0].mxu0 %v2217
        %v2575 = vpop.f32.mrb[0].mxu0
        %v2576 = vadd.f32 0.0, %v2575
        %v2577 = vpop.f32.mrb[0].mxu0
        %v2578 = vpop.f32.mrb[0].mxu0
        %v2579 = vadd.f32 0.0, %v2578
        %v2580 = vpop.f32.mrb[0].mxu0
        %2581 = vmatprep.mubr.bf16.mxu0 %v2222
        %2582 = vmatmul.mubr.bf16.gmra.mrb[0].mxu0 %v2221
        %v2583 = vpop.f32.mrb[0].mxu0
        %v2584 = vadd.f32 0.0, %v2583
        %v2585 = vpop.f32.mrb[0].mxu0
        %v2586 = vpop.f32.mrb[0].mxu0
        %v2587 = vadd.f32 0.0, %v2586
        %v2588 = vpop.f32.mrb[0].mxu0
        %2589 = vmatprep.mubr.bf16.mxu0 %v2226
        %2590 = vmatmul.mubr.bf16.gmra.mrb[0].mxu0 %v2225
        %v2591 = vpop.f32.mrb[0].mxu0
        %v2592 = vadd.f32 0.0, %v2591
        %v2593 = vpop.f32.mrb[0].mxu0
        %v2594 = vpop.f32.mrb[0].mxu0
        %v2595 = vadd.f32 0.0, %v2594
        %v2596 = vpop.f32.mrb[0].mxu0
        %2597 = vmatprep.mubr.bf16.mxu0 %v2230
        %2598 = vmatmul.mubr.bf16.gmra.mrb[0].mxu0 %v2229
        %v2599 = vpop.f32.mrb[0].mxu0
        %v2600 = vadd.f32 0.0, %v2599
        %v2601 = vpop.f32.mrb[0].mxu0
        %v2602 = vpop.f32.mrb[0].mxu0
        %v2603 = vadd.f32 0.0, %v2602
        %v2604 = vpop.f32.mrb[0].mxu0
        %2605 = vmatprep.mubr.bf16.mxu0 %v2234
        %2606 = vmatmul.mubr.bf16.gmra.mrb[0].mxu0 %v2233
        %v2607 = vpop.f32.mrb[0].mxu0
        %v2608 = vadd.f32 0.0, %v2607
        %v2609 = vpop.f32.mrb[0].mxu0
        %v2610 = vpop.f32.mrb[0].mxu0
        %v2611 = vadd.f32 0.0, %v2610
        %v2612 = vpop.f32.mrb[0].mxu0
        %2613 = vmatprep.mubr.bf16.mxu0 %v2238
        %2614 = vmatmul.mubr.bf16.gmra.mrb[0].mxu0 %v2237
        %v2615 = vpop.f32.mrb[0].mxu0
        %v2616 = vadd.f32 0.0, %v2615
        %v2617 = vpop.f32.mrb[0].mxu0
        %v2618 = vpop.f32.mrb[0].mxu0
        %v2619 = vadd.f32 0.0, %v2618
        %v2620 = vpop.f32.mrb[0].mxu0
        %2621 = vmatprep.mubr.bf16.mxu0 %v2242
        %2622 = vmatmul.mubr.bf16.gmra.mrb[0].mxu0 %v2241
        %v2623 = vpop.f32.mrb[0].mxu0
        %v2624 = vadd.f32 0.0, %v2623
        %v2625 = vpop.f32.mrb[0].mxu0
        %v2626 = vpop.f32.mrb[0].mxu0
        %v2627 = vadd.f32 0.0, %v2626
        %v2628 = vpop.f32.mrb[0].mxu0
        %2629 = vmatprep.mubr.bf16.mxu0 %v2246
        %2630 = vmatmul.mubr.bf16.gmra.mrb[0].mxu0 %v2245
        %v2631 = vpop.f32.mrb[0].mxu0
        %v2632 = vadd.f32 0.0, %v2631
        %v2633 = vpop.f32.mrb[0].mxu0
        %v2634 = vpop.f32.mrb[0].mxu0
        %v2635 = vadd.f32 0.0, %v2634
        %v2636 = vpop.f32.mrb[0].mxu0
        %2637 = vmatprep.mubr.bf16.mxu0 %v2250
        %2638 = vmatmul.mubr.bf16.gmra.mrb[0].mxu0 %v2249
        %v2639 = vpop.f32.mrb[0].mxu0
        %v2640 = vadd.f32 0.0, %v2639
        %v2641 = vpop.f32.mrb[0].mxu0
        %v2642 = vpop.f32.mrb[0].mxu0
        %v2643 = vadd.f32 0.0, %v2642
        %v2644 = vpop.f32.mrb[0].mxu0
        %2645 = vmatprep.mubr.bf16.mxu0 %v2254
        %2646 = vmatmul.mubr.bf16.gmra.mrb[0].mxu0 %v2253
        %v2647 = vpop.f32.mrb[0].mxu0
        %v2648 = vadd.f32 0.0, %v2647
        %v2649 = vpop.f32.mrb[0].mxu0
        %v2650 = vpop.f32.mrb[0].mxu0
        %v2651 = vadd.f32 0.0, %v2650
        %v2652 = vpop.f32.mrb[0].mxu0
        %2653 = vmatprep.mubr.bf16.mxu0 %v2258
        %2654 = vmatmul.mubr.bf16.gmra.mrb[0].mxu0 %v2257
        %v2655 = vpop.f32.mrb[0].mxu0
        %v2656 = vadd.f32 0.0, %v2655
        %v2657 = vpop.f32.mrb[0].mxu0
        %v2658 = vpop.f32.mrb[0].mxu0
        %v2659 = vadd.f32 0.0, %v2658
        %v2660 = vpop.f32.mrb[0].mxu0
        %2661 = vmatprep.mubr.bf16.mxu0 %v2262
        %2662 = vmatmul.mubr.bf16.gmra.mrb[0].mxu0 %v2261
        %v2663 = vpop.f32.mrb[0].mxu0
        %v2664 = vadd.f32 0.0, %v2663
        %v2665 = vpop.f32.mrb[0].mxu0
        %v2666 = vpop.f32.mrb[0].mxu0
        %v2667 = vadd.f32 0.0, %v2666
        %v2668 = vpop.f32.mrb[0].mxu0
        %2669 = vmatprep.mubr.bf16.mxu0 %v2266
        %2670 = vmatmul.mubr.bf16.gmra.mrb[0].mxu0 %v2265
        %v2671 = vpop.f32.mrb[0].mxu0
        %v2672 = vadd.f32 0.0, %v2671
        %v2673 = vpop.f32.mrb[0].mxu0
        %v2674 = vpop.f32.mrb[0].mxu0
        %v2675 = vadd.f32 0.0, %v2674
        %v2676 = vpop.f32.mrb[0].mxu0
        %2677 = vmatprep.mubr.bf16.mxu0 %v2270
        %2678 = vmatmul.mubr.bf16.gmra.mrb[0].mxu0 %v2269
        %v2679 = vpop.f32.mrb[0].mxu0
        %v2680 = vadd.f32 0.0, %v2679
        %v2681 = vpop.f32.mrb[0].mxu0
        %v2682 = vpop.f32.mrb[0].mxu0
        %v2683 = vadd.f32 0.0, %v2682
        %v2684 = vpop.f32.mrb[0].mxu0
        %2685 = vmatprep.mubr.bf16.mxu0 %v2274
        %2686 = vmatmul.mubr.bf16.gmra.mrb[0].mxu0 %v2273
        %v2687 = vpop.f32.mrb[0].mxu0
        %v2688 = vadd.f32 0.0, %v2687
        %v2689 = vpop.f32.mrb[0].mxu0
        %v2690 = vpop.f32.mrb[0].mxu0
        %v2691 = vadd.f32 0.0, %v2690
        %v2692 = vpop.f32.mrb[0].mxu0
        %2693 = vdwg.mxu0
        %2694 = vmatprep.subr.bf16.mxu0 0
        %2695 = vmatpush1.bf16.msra.mxu0 %v1557
        %2696 = vmatprep.subr.bf16.mxu0 0
        %2697 = vmatpush1.bf16.msra.mxu0 %v1558
        %2698 = vmatprep.subr.bf16.mxu0 0
        %2699 = vmatpush1.bf16.msra.mxu0 %v1559
        %2700 = vmatprep.subr.bf16.mxu0 0
        %2701 = vmatpush1.bf16.msra.mxu0 %v1560
        %2702 = vmatprep.subr.bf16.mxu0 0
        %2703 = vmatpush1.bf16.msra.mxu0 %v1561
        %2704 = vmatprep.subr.bf16.mxu0 0
        %2705 = vmatpush1.bf16.msra.mxu0 %v1562
        %2706 = vmatprep.subr.bf16.mxu0 0
        %2707 = vmatpush1.bf16.msra.mxu0 %v1563
        %2708 = vmatprep.subr.bf16.mxu0 0
        %2709 = vmatpush1.bf16.msra.mxu0 %v1564
        %2710 = vmatprep.subr.bf16.mxu0 0
        %2711 = vmatpush1.bf16.msra.mxu0 %v1565
        %2712 = vmatprep.subr.bf16.mxu0 0
        %2713 = vmatpush1.bf16.msra.mxu0 %v1566
        %2714 = vmatprep.subr.bf16.mxu0 0
        %2715 = vmatpush1.bf16.msra.mxu0 %v1567
        %2716 = vmatprep.subr.bf16.mxu0 0
        %2717 = vmatpush1.bf16.msra.mxu0 %v1568
        %2718 = vmatprep.subr.bf16.mxu0 0
        %2719 = vmatpush1.bf16.msra.mxu0 %v1569
        %2720 = vmatprep.subr.bf16.mxu0 0
        %2721 = vmatpush1.bf16.msra.mxu0 %v1570
        %2722 = vmatprep.subr.bf16.mxu0 0
        %2723 = vmatpush1.bf16.msra.mxu0 %v1571
        %2724 = vmatprep.subr.bf16.mxu0 0
        %2725 = vmatpush1.bf16.msra.mxu0 %v1572
        %2726 = vmatprep.mubr.bf16.mxu0 %v2152
        %2727 = vmatmul.mubr.bf16.gmra.mrb[0].mxu0 %v2151
        %v2728 = vpop.f32.mrb[0].mxu0
        %v2729 = vadd.f32 %v2440, %v2728
        %v2730 = vpop.f32.mrb[0].mxu0
        %v2731 = vpop.f32.mrb[0].mxu0
        %v2732 = vadd.f32 %v2443, %v2731
        %v2733 = vpop.f32.mrb[0].mxu0
        %2734 = vmatprep.mubr.bf16.mxu0 %v2156
        %2735 = vmatmul.mubr.bf16.gmra.mrb[0].mxu0 %v2155
        %v2736 = vpop.f32.mrb[0].mxu0
        %v2737 = vadd.f32 %v2448, %v2736
        %v2738 = vpop.f32.mrb[0].mxu0
        %v2739 = vpop.f32.mrb[0].mxu0
        %v2740 = vadd.f32 %v2451, %v2739
        %v2741 = vpop.f32.mrb[0].mxu0
        %2742 = vmatprep.mubr.bf16.mxu0 %v2160
        %2743 = vmatmul.mubr.bf16.gmra.mrb[0].mxu0 %v2159
        %v2744 = vpop.f32.mrb[0].mxu0
        %v2745 = vadd.f32 %v2456, %v2744
        %v2746 = vpop.f32.mrb[0].mxu0
        %v2747 = vpop.f32.mrb[0].mxu0
        %v2748 = vadd.f32 %v2459, %v2747
        %v2749 = vpop.f32.mrb[0].mxu0
        %2750 = vmatprep.mubr.bf16.mxu0 %v2164
        %2751 = vmatmul.mubr.bf16.gmra.mrb[0].mxu0 %v2163
        %v2752 = vpop.f32.mrb[0].mxu0
        %v2753 = vadd.f32 %v2464, %v2752
        %v2754 = vpop.f32.mrb[0].mxu0
        %v2755 = vpop.f32.mrb[0].mxu0
        %v2756 = vadd.f32 %v2467, %v2755
        %v2757 = vpop.f32.mrb[0].mxu0
        %2758 = vmatprep.mubr.bf16.mxu0 %v2168
        %2759 = vmatmul.mubr.bf16.gmra.mrb[0].mxu0 %v2167
        %v2760 = vpop.f32.mrb[0].mxu0
        %v2761 = vadd.f32 %v2472, %v2760
        %v2762 = vpop.f32.mrb[0].mxu0
        %v2763 = vpop.f32.mrb[0].mxu0
        %v2764 = vadd.f32 %v2475, %v2763
        %v2765 = vpop.f32.mrb[0].mxu0
        %2766 = vmatprep.mubr.bf16.mxu0 %v2172
        %2767 = vmatmul.mubr.bf16.gmra.mrb[0].mxu0 %v2171
        %v2768 = vpop.f32.mrb[0].mxu0
        %v2769 = vadd.f32 %v2480, %v2768
        %v2770 = vpop.f32.mrb[0].mxu0
        %v2771 = vpop.f32.mrb[0].mxu0
        %v2772 = vadd.f32 %v2483, %v2771
        %v2773 = vpop.f32.mrb[0].mxu0
        %2774 = vmatprep.mubr.bf16.mxu0 %v2176
        %2775 = vmatmul.mubr.bf16.gmra.mrb[0].mxu0 %v2175
        %v2776 = vpop.f32.mrb[0].mxu0
        %v2777 = vadd.f32 %v2488, %v2776
        %v2778 = vpop.f32.mrb[0].mxu0
        %v2779 = vpop.f32.mrb[0].mxu0
        %v2780 = vadd.f32 %v2491, %v2779
        %v2781 = vpop.f32.mrb[0].mxu0
        %2782 = vmatprep.mubr.bf16.mxu0 %v2180
        %2783 = vmatmul.mubr.bf16.gmra.mrb[0].mxu0 %v2179
        %v2784 = vpop.f32.mrb[0].mxu0
        %v2785 = vadd.f32 %v2496, %v2784
        %v2786 = vpop.f32.mrb[0].mxu0
        %v2787 = vpop.f32.mrb[0].mxu0
        %v2788 = vadd.f32 %v2499, %v2787
        %v2789 = vpop.f32.mrb[0].mxu0
        %2790 = vmatprep.mubr.bf16.mxu0 %v2184
        %2791 = vmatmul.mubr.bf16.gmra.mrb[0].mxu0 %v2183
        %v2792 = vpop.f32.mrb[0].mxu0
        %v2793 = vadd.f32 %v2504, %v2792
        %v2794 = vpop.f32.mrb[0].mxu0
        %v2795 = vpop.f32.mrb[0].mxu0
        %v2796 = vadd.f32 %v2507, %v2795
        %v2797 = vpop.f32.mrb[0].mxu0
        %2798 = vmatprep.mubr.bf16.mxu0 %v2188
        %2799 = vmatmul.mubr.bf16.gmra.mrb[0].mxu0 %v2187
        %v2800 = vpop.f32.mrb[0].mxu0
        %v2801 = vadd.f32 %v2512, %v2800
        %v2802 = vpop.f32.mrb[0].mxu0
        %v2803 = vpop.f32.mrb[0].mxu0
        %v2804 = vadd.f32 %v2515, %v2803
        %v2805 = vpop.f32.mrb[0].mxu0
        %2806 = vmatprep.mubr.bf16.mxu0 %v2192
        %2807 = vmatmul.mubr.bf16.gmra.mrb[0].mxu0 %v2191
        %v2808 = vpop.f32.mrb[0].mxu0
        %v2809 = vadd.f32 %v2520, %v2808
        %v2810 = vpop.f32.mrb[0].mxu0
        %v2811 = vpop.f32.mrb[0].mxu0
        %v2812 = vadd.f32 %v2523, %v2811
        %v2813 = vpop.f32.mrb[0].mxu0
        %2814 = vmatprep.mubr.bf16.mxu0 %v2196
        %2815 = vmatmul.mubr.bf16.gmra.mrb[0].mxu0 %v2195
        %v2816 = vpop.f32.mrb[0].mxu0
        %v2817 = vadd.f32 %v2528, %v2816
        %v2818 = vpop.f32.mrb[0].mxu0
        %v2819 = vpop.f32.mrb[0].mxu0
        %v2820 = vadd.f32 %v2531, %v2819
        %v2821 = vpop.f32.mrb[0].mxu0
        %2822 = vmatprep.mubr.bf16.mxu0 %v2200
        %2823 = vmatmul.mubr.bf16.gmra.mrb[0].mxu0 %v2199
        %v2824 = vpop.f32.mrb[0].mxu0
        %v2825 = vadd.f32 %v2536, %v2824
        %v2826 = vpop.f32.mrb[0].mxu0
        %v2827 = vpop.f32.mrb[0].mxu0
        %v2828 = vadd.f32 %v2539, %v2827
        %v2829 = vpop.f32.mrb[0].mxu0
        %2830 = vmatprep.mubr.bf16.mxu0 %v2204
        %2831 = vmatmul.mubr.bf16.gmra.mrb[0].mxu0 %v2203
        %v2832 = vpop.f32.mrb[0].mxu0
        %v2833 = vadd.f32 %v2544, %v2832
        %v2834 = vpop.f32.mrb[0].mxu0
        %v2835 = vpop.f32.mrb[0].mxu0
        %v2836 = vadd.f32 %v2547, %v2835
        %v2837 = vpop.f32.mrb[0].mxu0
        %2838 = vmatprep.mubr.bf16.mxu0 %v2208
        %2839 = vmatmul.mubr.bf16.gmra.mrb[0].mxu0 %v2207
        %v2840 = vpop.f32.mrb[0].mxu0
        %v2841 = vadd.f32 %v2552, %v2840
        %v2842 = vpop.f32.mrb[0].mxu0
        %v2843 = vpop.f32.mrb[0].mxu0
        %v2844 = vadd.f32 %v2555, %v2843
        %v2845 = vpop.f32.mrb[0].mxu0
        %2846 = vmatprep.mubr.bf16.mxu0 %v2212
        %2847 = vmatmul.mubr.bf16.gmra.mrb[0].mxu0 %v2211
        %v2848 = vpop.f32.mrb[0].mxu0
        %v2849 = vadd.f32 %v2560, %v2848
        %v2850 = vpop.f32.mrb[0].mxu0
        %v2851 = vpop.f32.mrb[0].mxu0
        %v2852 = vadd.f32 %v2563, %v2851
        %v2853 = vpop.f32.mrb[0].mxu0
        %2854 = vmatprep.mubr.bf16.mxu0 %v2216
        %2855 = vmatmul.mubr.bf16.gmra.mrb[0].mxu0 %v2215
        %v2856 = vpop.f32.mrb[0].mxu0
        %v2857 = vadd.f32 %v2568, %v2856
        %v2858 = vpop.f32.mrb[0].mxu0
        %v2859 = vpop.f32.mrb[0].mxu0
        %v2860 = vadd.f32 %v2571, %v2859
        %v2861 = vpop.f32.mrb[0].mxu0
        %2862 = vmatprep.mubr.bf16.mxu0 %v2220
        %2863 = vmatmul.mubr.bf16.gmra.mrb[0].mxu0 %v2219
        %v2864 = vpop.f32.mrb[0].mxu0
        %v2865 = vadd.f32 %v2576, %v2864
        %v2866 = vpop.f32.mrb[0].mxu0
        %v2867 = vpop.f32.mrb[0].mxu0
        %v2868 = vadd.f32 %v2579, %v2867
        %v2869 = vpop.f32.mrb[0].mxu0
        %2870 = vmatprep.mubr.bf16.mxu0 %v2224
        %2871 = vmatmul.mubr.bf16.gmra.mrb[0].mxu0 %v2223
        %v2872 = vpop.f32.mrb[0].mxu0
        %v2873 = vadd.f32 %v2584, %v2872
        %v2874 = vpop.f32.mrb[0].mxu0
        %v2875 = vpop.f32.mrb[0].mxu0
        %v2876 = vadd.f32 %v2587, %v2875
        %v2877 = vpop.f32.mrb[0].mxu0
        %2878 = vmatprep.mubr.bf16.mxu0 %v2228
        %2879 = vmatmul.mubr.bf16.gmra.mrb[0].mxu0 %v2227
        %v2880 = vpop.f32.mrb[0].mxu0
        %v2881 = vadd.f32 %v2592, %v2880
        %v2882 = vpop.f32.mrb[0].mxu0
        %v2883 = vpop.f32.mrb[0].mxu0
        %v2884 = vadd.f32 %v2595, %v2883
        %v2885 = vpop.f32.mrb[0].mxu0
        %2886 = vmatprep.mubr.bf16.mxu0 %v2232
        %2887 = vmatmul.mubr.bf16.gmra.mrb[0].mxu0 %v2231
        %v2888 = vpop.f32.mrb[0].mxu0
        %v2889 = vadd.f32 %v2600, %v2888
        %v2890 = vpop.f32.mrb[0].mxu0
        %v2891 = vpop.f32.mrb[0].mxu0
        %v2892 = vadd.f32 %v2603, %v2891
        %v2893 = vpop.f32.mrb[0].mxu0
        %2894 = vmatprep.mubr.bf16.mxu0 %v2236
        %2895 = vmatmul.mubr.bf16.gmra.mrb[0].mxu0 %v2235
        %v2896 = vpop.f32.mrb[0].mxu0
        %v2897 = vadd.f32 %v2608, %v2896
        %v2898 = vpop.f32.mrb[0].mxu0
        %v2899 = vpop.f32.mrb[0].mxu0
        %v2900 = vadd.f32 %v2611, %v2899
        %v2901 = vpop.f32.mrb[0].mxu0
        %2902 = vmatprep.mubr.bf16.mxu0 %v2240
        %2903 = vmatmul.mubr.bf16.gmra.mrb[0].mxu0 %v2239
        %v2904 = vpop.f32.mrb[0].mxu0
        %v2905 = vadd.f32 %v2616, %v2904
        %v2906 = vpop.f32.mrb[0].mxu0
        %v2907 = vpop.f32.mrb[0].mxu0
        %v2908 = vadd.f32 %v2619, %v2907
        %v2909 = vpop.f32.mrb[0].mxu0
        %2910 = vmatprep.mubr.bf16.mxu0 %v2244
        %2911 = vmatmul.mubr.bf16.gmra.mrb[0].mxu0 %v2243
        %v2912 = vpop.f32.mrb[0].mxu0
        %v2913 = vadd.f32 %v2624, %v2912
        %v2914 = vpop.f32.mrb[0].mxu0
        %v2915 = vpop.f32.mrb[0].mxu0
        %v2916 = vadd.f32 %v2627, %v2915
        %v2917 = vpop.f32.mrb[0].mxu0
        %2918 = vmatprep.mubr.bf16.mxu0 %v2248
        %2919 = vmatmul.mubr.bf16.gmra.mrb[0].mxu0 %v2247
        %v2920 = vpop.f32.mrb[0].mxu0
        %v2921 = vadd.f32 %v2632, %v2920
        %v2922 = vpop.f32.mrb[0].mxu0
        %v2923 = vpop.f32.mrb[0].mxu0
        %v2924 = vadd.f32 %v2635, %v2923
        %v2925 = vpop.f32.mrb[0].mxu0
        %2926 = vmatprep.mubr.bf16.mxu0 %v2252
        %2927 = vmatmul.mubr.bf16.gmra.mrb[0].mxu0 %v2251
        %v2928 = vpop.f32.mrb[0].mxu0
        %v2929 = vadd.f32 %v2640, %v2928
        %v2930 = vpop.f32.mrb[0].mxu0
        %v2931 = vpop.f32.mrb[0].mxu0
        %v2932 = vadd.f32 %v2643, %v2931
        %v2933 = vpop.f32.mrb[0].mxu0
        %2934 = vmatprep.mubr.bf16.mxu0 %v2256
        %2935 = vmatmul.mubr.bf16.gmra.mrb[0].mxu0 %v2255
        %v2936 = vpop.f32.mrb[0].mxu0
        %v2937 = vadd.f32 %v2648, %v2936
        %v2938 = vpop.f32.mrb[0].mxu0
        %v2939 = vpop.f32.mrb[0].mxu0
        %v2940 = vadd.f32 %v2651, %v2939
        %v2941 = vpop.f32.mrb[0].mxu0
        %2942 = vmatprep.mubr.bf16.mxu0 %v2260
        %2943 = vmatmul.mubr.bf16.gmra.mrb[0].mxu0 %v2259
        %v2944 = vpop.f32.mrb[0].mxu0
        %v2945 = vadd.f32 %v2656, %v2944
        %v2946 = vpop.f32.mrb[0].mxu0
        %v2947 = vpop.f32.mrb[0].mxu0
        %v2948 = vadd.f32 %v2659, %v2947
        %v2949 = vpop.f32.mrb[0].mxu0
        %2950 = vmatprep.mubr.bf16.mxu0 %v2264
        %2951 = vmatmul.mubr.bf16.gmra.mrb[0].mxu0 %v2263
        %v2952 = vpop.f32.mrb[0].mxu0
        %v2953 = vadd.f32 %v2664, %v2952
        %v2954 = vpop.f32.mrb[0].mxu0
        %v2955 = vpop.f32.mrb[0].mxu0
        %v2956 = vadd.f32 %v2667, %v2955
        %v2957 = vpop.f32.mrb[0].mxu0
        %2958 = vmatprep.mubr.bf16.mxu0 %v2268
        %2959 = vmatmul.mubr.bf16.gmra.mrb[0].mxu0 %v2267
        %v2960 = vpop.f32.mrb[0].mxu0
        %v2961 = vadd.f32 %v2672, %v2960
        %v2962 = vpop.f32.mrb[0].mxu0
        %v2963 = vpop.f32.mrb[0].mxu0
        %v2964 = vadd.f32 %v2675, %v2963
        %v2965 = vpop.f32.mrb[0].mxu0
        %2966 = vmatprep.mubr.bf16.mxu0 %v2272
        %2967 = vmatmul.mubr.bf16.gmra.mrb[0].mxu0 %v2271
        %v2968 = vpop.f32.mrb[0].mxu0
        %v2969 = vadd.f32 %v2680, %v2968
        %v2970 = vpop.f32.mrb[0].mxu0
        %v2971 = vpop.f32.mrb[0].mxu0
        %v2972 = vadd.f32 %v2683, %v2971
        %v2973 = vpop.f32.mrb[0].mxu0
        %2974 = vmatprep.mubr.bf16.mxu0 %v2276
        %2975 = vmatmul.mubr.bf16.gmra.mrb[0].mxu0 %v2275
        %v2976 = vpop.f32.mrb[0].mxu0
        %v2977 = vadd.f32 %v2688, %v2976
        %v2978 = vpop.f32.mrb[0].mxu0
        %v2979 = vpop.f32.mrb[0].mxu0
        %v2980 = vadd.f32 %v2691, %v2979
        %v2981 = vpop.f32.mrb[0].mxu0
        %2982 = vdwg.mxu0
        %v2983 = vadd.f32 %v1573, %v2729
        %v2984 = vadd.f32 %v1574, %v2732
        %v2985 = vadd.f32 %v1575, %v2737
        %v2986 = vadd.f32 %v1576, %v2740
        %v2987 = vadd.f32 %v1577, %v2745
        %v2988 = vadd.f32 %v1578, %v2748
        %v2989 = vadd.f32 %v1579, %v2753
        %v2990 = vadd.f32 %v1580, %v2756
        %v2991 = vadd.f32 %v1581, %v2761
        %v2992 = vadd.f32 %v1582, %v2764
        %v2993 = vadd.f32 %v1583, %v2769
        %v2994 = vadd.f32 %v1584, %v2772
        %v2995 = vadd.f32 %v1585, %v2777
        %v2996 = vadd.f32 %v1586, %v2780
        %v2997 = vadd.f32 %v1587, %v2785
        %v2998 = vadd.f32 %v1588, %v2788
        %v2999 = vadd.f32 %v1589, %v2793
        %v3000 = vadd.f32 %v1590, %v2796
        %v3001 = vadd.f32 %v1591, %v2801
        %v3002 = vadd.f32 %v1592, %v2804
        %v3003 = vadd.f32 %v1593, %v2809
        %v3004 = vadd.f32 %v1594, %v2812
        %v3005 = vadd.f32 %v1595, %v2817
        %v3006 = vadd.f32 %v1596, %v2820
        %v3007 = vadd.f32 %v1597, %v2825
        %v3008 = vadd.f32 %v1598, %v2828
        %v3009 = vadd.f32 %v1599, %v2833
        %v3010 = vadd.f32 %v1600, %v2836
        %v3011 = vadd.f32 %v1601, %v2841
        %v3012 = vadd.f32 %v1602, %v2844
        %v3013 = vadd.f32 %v1603, %v2849
        %v3014 = vadd.f32 %v1604, %v2852
        %v3015 = vadd.f32 %v1605, %v2857
        %v3016 = vadd.f32 %v1606, %v2860
        %v3017 = vadd.f32 %v1607, %v2865
        %v3018 = vadd.f32 %v1608, %v2868
        %v3019 = vadd.f32 %v1609, %v2873
        %v3020 = vadd.f32 %v1610, %v2876
        %v3021 = vadd.f32 %v1611, %v2881
        %v3022 = vadd.f32 %v1612, %v2884
        %v3023 = vadd.f32 %v1613, %v2889
        %v3024 = vadd.f32 %v1614, %v2892
        %v3025 = vadd.f32 %v1615, %v2897
        %v3026 = vadd.f32 %v1616, %v2900
        %v3027 = vadd.f32 %v1617, %v2905
        %v3028 = vadd.f32 %v1618, %v2908
        %v3029 = vadd.f32 %v1619, %v2913
        %v3030 = vadd.f32 %v1620, %v2916
        %v3031 = vadd.f32 %v1621, %v2921
        %v3032 = vadd.f32 %v1622, %v2924
        %v3033 = vadd.f32 %v1623, %v2929
        %v3034 = vadd.f32 %v1624, %v2932
        %v3035 = vadd.f32 %v1625, %v2937
        %v3036 = vadd.f32 %v1626, %v2940
        %v3037 = vadd.f32 %v1627, %v2945
        %v3038 = vadd.f32 %v1628, %v2948
        %v3039 = vadd.f32 %v1629, %v2953
        %v3040 = vadd.f32 %v1630, %v2956
        %v3041 = vadd.f32 %v1631, %v2961
        %v3042 = vadd.f32 %v1632, %v2964
        %v3043 = vadd.f32 %v1633, %v2969
        %v3044 = vadd.f32 %v1634, %v2972
        %v3045 = vadd.f32 %v1635, %v2977
        %v3046 = vadd.f32 %v1636, %v2980
        %3047 = vst [vmem:[%s359] sm:$0xff] %v2983
        %3048 = vst [vmem:[%s359 + $0x8] sm:$0xff] %v2984
        %3049 = vst [vmem:[%s359 + $0x10] sm:$0xff] %v2985
        %3050 = vst [vmem:[%s359 + $0x18] sm:$0xff] %v2986
        %3051 = vst [vmem:[%s359 + $0x20] sm:$0xff] %v2987
        %3052 = vst [vmem:[%s359 + $0x28] sm:$0xff] %v2988
        %3053 = vst [vmem:[%s359 + $0x30] sm:$0xff] %v2989
        %3054 = vst [vmem:[%s359 + $0x38] sm:$0xff] %v2990
        %3055 = vst [vmem:[%s359 + $0x40] sm:$0xff] %v2991
        %3056 = vst [vmem:[%s359 + $0x48] sm:$0xff] %v2992
        %3057 = vst [vmem:[%s359 + $0x50] sm:$0xff] %v2993
        %3058 = vst [vmem:[%s359 + $0x58] sm:$0xff] %v2994
        %3059 = vst [vmem:[%s359 + $0x60] sm:$0xff] %v2995
        %3060 = vst [vmem:[%s359 + $0x68] sm:$0xff] %v2996
        %3061 = vst [vmem:[%s359 + $0x70] sm:$0xff] %v2997
        %3062 = vst [vmem:[%s359 + $0x78] sm:$0xff] %v2998
        %3063 = vst [vmem:[%s359 + $0x80] sm:$0xff] %v2999
        %3064 = vst [vmem:[%s359 + $0x88] sm:$0xff] %v3000
        %3065 = vst [vmem:[%s359 + $0x90] sm:$0xff] %v3001
        %3066 = vst [vmem:[%s359 + $0x98] sm:$0xff] %v3002
        %3067 = vst [vmem:[%s359 + $0xa0] sm:$0xff] %v3003
        %3068 = vst [vmem:[%s359 + $0xa8] sm:$0xff] %v3004
        %3069 = vst [vmem:[%s359 + $0xb0] sm:$0xff] %v3005
        %3070 = vst [vmem:[%s359 + $0xb8] sm:$0xff] %v3006
        %3071 = vst [vmem:[%s359 + $0xc0] sm:$0xff] %v3007
        %3072 = vst [vmem:[%s359 + $0xc8] sm:$0xff] %v3008
        %3073 = vst [vmem:[%s359 + $0xd0] sm:$0xff] %v3009
        %3074 = vst [vmem:[%s359 + $0xd8] sm:$0xff] %v3010
        %3075 = vst [vmem:[%s359 + $0xe0] sm:$0xff] %v3011
        %3076 = vst [vmem:[%s359 + $0xe8] sm:$0xff] %v3012
        %3077 = vst [vmem:[%s359 + $0xf0] sm:$0xff] %v3013
        %3078 = vst [vmem:[%s359 + $0xf8] sm:$0xff] %v3014
        %3079 = vst [vmem:[%s359 + $0x100] sm:$0xff] %v3015
        %3080 = vst [vmem:[%s359 + $0x108] sm:$0xff] %v3016
        %3081 = vst [vmem:[%s359 + $0x110] sm:$0xff] %v3017
        %3082 = vst [vmem:[%s359 + $0x118] sm:$0xff] %v3018
        %3083 = vst [vmem:[%s359 + $0x120] sm:$0xff] %v3019
        %3084 = vst [vmem:[%s359 + $0x128] sm:$0xff] %v3020
        %3085 = vst [vmem:[%s359 + $0x130] sm:$0xff] %v3021
        %3086 = vst [vmem:[%s359 + $0x138] sm:$0xff] %v3022
        %3087 = vst [vmem:[%s359 + $0x140] sm:$0xff] %v3023
        %3088 = vst [vmem:[%s359 + $0x148] sm:$0xff] %v3024
        %3089 = vst [vmem:[%s359 + $0x150] sm:$0xff] %v3025
        %3090 = vst [vmem:[%s359 + $0x158] sm:$0xff] %v3026
        %3091 = vst [vmem:[%s359 + $0x160] sm:$0xff] %v3027
        %3092 = vst [vmem:[%s359 + $0x168] sm:$0xff] %v3028
        %3093 = vst [vmem:[%s359 + $0x170] sm:$0xff] %v3029
        %3094 = vst [vmem:[%s359 + $0x178] sm:$0xff] %v3030
        %3095 = vst [vmem:[%s359 + $0x180] sm:$0xff] %v3031
        %3096 = vst [vmem:[%s359 + $0x188] sm:$0xff] %v3032
        %3097 = vst [vmem:[%s359 + $0x190] sm:$0xff] %v3033
        %3098 = vst [vmem:[%s359 + $0x198] sm:$0xff] %v3034
        %3099 = vst [vmem:[%s359 + $0x1a0] sm:$0xff] %v3035
        %3100 = vst [vmem:[%s359 + $0x1a8] sm:$0xff] %v3036
        %3101 = vst [vmem:[%s359 + $0x1b0] sm:$0xff] %v3037
        %3102 = vst [vmem:[%s359 + $0x1b8] sm:$0xff] %v3038
        %3103 = vst [vmem:[%s359 + $0x1c0] sm:$0xff] %v3039
        %3104 = vst [vmem:[%s359 + $0x1c8] sm:$0xff] %v3040
        %3105 = vst [vmem:[%s359 + $0x1d0] sm:$0xff] %v3041
        %3106 = vst [vmem:[%s359 + $0x1d8] sm:$0xff] %v3042
        %3107 = vst [vmem:[%s359 + $0x1e0] sm:$0xff] %v3043
        %3108 = vst [vmem:[%s359 + $0x1e8] sm:$0xff] %v3044
        %3109 = vst [vmem:[%s359 + $0x1f0] sm:$0xff] %v3045
        %3110 = vst [vmem:[%s359 + $0x1f8] sm:$0xff] %v3046
        %p3111 = scmp.eq.s32.totalorder %s29, 1
        // Predicated region
        $region61: #{tpu_custom_call.1} parent=43 // pred_check
          %p3112 = pneg %p3111
        $region62: #{tpu_custom_call.1} parent=43 // pred_check_branch
          %3114 = sbr.rel (%p3112) target = $region64
        $region63: #{tpu_custom_call.1} parent=43 // pred_region
          %v3115 = vld [vmem:[%s359] sm:$0xff]
          %v3116 = vld [vmem:[%s359 + $0x8] sm:$0xff]
          %v3117 = vld [vmem:[%s359 + $0x10] sm:$0xff]
          %v3118 = vld [vmem:[%s359 + $0x18] sm:$0xff]
          %v3119 = vld [vmem:[%s359 + $0x20] sm:$0xff]
          %v3120 = vld [vmem:[%s359 + $0x28] sm:$0xff]
          %v3121 = vld [vmem:[%s359 + $0x30] sm:$0xff]
          %v3122 = vld [vmem:[%s359 + $0x38] sm:$0xff]
          %v3123 = vld [vmem:[%s359 + $0x40] sm:$0xff]
          %v3124 = vld [vmem:[%s359 + $0x48] sm:$0xff]
          %v3125 = vld [vmem:[%s359 + $0x50] sm:$0xff]
          %v3126 = vld [vmem:[%s359 + $0x58] sm:$0xff]
          %v3127 = vld [vmem:[%s359 + $0x60] sm:$0xff]
          %v3128 = vld [vmem:[%s359 + $0x68] sm:$0xff]
          %v3129 = vld [vmem:[%s359 + $0x70] sm:$0xff]
          %v3130 = vld [vmem:[%s359 + $0x78] sm:$0xff]
          %v3131 = vld [vmem:[%s359 + $0x80] sm:$0xff]
          %v3132 = vld [vmem:[%s359 + $0x88] sm:$0xff]
          %v3133 = vld [vmem:[%s359 + $0x90] sm:$0xff]
          %v3134 = vld [vmem:[%s359 + $0x98] sm:$0xff]
          %v3135 = vld [vmem:[%s359 + $0xa0] sm:$0xff]
          %v3136 = vld [vmem:[%s359 + $0xa8] sm:$0xff]
          %v3137 = vld [vmem:[%s359 + $0xb0] sm:$0xff]
          %v3138 = vld [vmem:[%s359 + $0xb8] sm:$0xff]
          %v3139 = vld [vmem:[%s359 + $0xc0] sm:$0xff]
          %v3140 = vld [vmem:[%s359 + $0xc8] sm:$0xff]
          %v3141 = vld [vmem:[%s359 + $0xd0] sm:$0xff]
          %v3142 = vld [vmem:[%s359 + $0xd8] sm:$0xff]
          %v3143 = vld [vmem:[%s359 + $0xe0] sm:$0xff]
          %v3144 = vld [vmem:[%s359 + $0xe8] sm:$0xff]
          %v3145 = vld [vmem:[%s359 + $0xf0] sm:$0xff]
          %v3146 = vld [vmem:[%s359 + $0xf8] sm:$0xff]
          %v3147 = vld [vmem:[%s359 + $0x100] sm:$0xff]
          %v3148 = vld [vmem:[%s359 + $0x108] sm:$0xff]
          %v3149 = vld [vmem:[%s359 + $0x110] sm:$0xff]
          %v3150 = vld [vmem:[%s359 + $0x118] sm:$0xff]
          %v3151 = vld [vmem:[%s359 + $0x120] sm:$0xff]
          %v3152 = vld [vmem:[%s359 + $0x128] sm:$0xff]
          %v3153 = vld [vmem:[%s359 + $0x130] sm:$0xff]
          %v3154 = vld [vmem:[%s359 + $0x138] sm:$0xff]
          %v3155 = vld [vmem:[%s359 + $0x140] sm:$0xff]
          %v3156 = vld [vmem:[%s359 + $0x148] sm:$0xff]
          %v3157 = vld [vmem:[%s359 + $0x150] sm:$0xff]
          %v3158 = vld [vmem:[%s359 + $0x158] sm:$0xff]
          %v3159 = vld [vmem:[%s359 + $0x160] sm:$0xff]
          %v3160 = vld [vmem:[%s359 + $0x168] sm:$0xff]
          %v3161 = vld [vmem:[%s359 + $0x170] sm:$0xff]
          %v3162 = vld [vmem:[%s359 + $0x178] sm:$0xff]
          %v3163 = vld [vmem:[%s359 + $0x180] sm:$0xff]
          %v3164 = vld [vmem:[%s359 + $0x188] sm:$0xff]
          %v3165 = vld [vmem:[%s359 + $0x190] sm:$0xff]
          %v3166 = vld [vmem:[%s359 + $0x198] sm:$0xff]
          %v3167 = vld [vmem:[%s359 + $0x1a0] sm:$0xff]
          %v3168 = vld [vmem:[%s359 + $0x1a8] sm:$0xff]
          %v3169 = vld [vmem:[%s359 + $0x1b0] sm:$0xff]
          %v3170 = vld [vmem:[%s359 + $0x1b8] sm:$0xff]
          %v3171 = vld [vmem:[%s359 + $0x1c0] sm:$0xff]
          %v3172 = vld [vmem:[%s359 + $0x1c8] sm:$0xff]
          %v3173 = vld [vmem:[%s359 + $0x1d0] sm:$0xff]
          %v3174 = vld [vmem:[%s359 + $0x1d8] sm:$0xff]
          %v3175 = vld [vmem:[%s359 + $0x1e0] sm:$0xff]
          %v3176 = vld [vmem:[%s359 + $0x1e8] sm:$0xff]
          %v3177 = vld [vmem:[%s359 + $0x1f0] sm:$0xff]
          %v3178 = vld [vmem:[%s359 + $0x1f8] sm:$0xff]
          %v3179 = vld [vmem:[%s378] sm:$0xff]
          %v3180 = vld [vmem:[%s378 + $0x8] sm:$0xff]
          %v3181 = vld [vmem:[%s378 + $0x10] sm:$0xff]
          %v3182 = vld [vmem:[%s378 + $0x18] sm:$0xff]
          %v3183 = vld [vmem:[%s378 + $0x20] sm:$0xff]
          %v3184 = vld [vmem:[%s378 + $0x28] sm:$0xff]
          %v3185 = vld [vmem:[%s378 + $0x30] sm:$0xff]
          %v3186 = vld [vmem:[%s378 + $0x38] sm:$0xff]
          %v3187 = vld [vmem:[%s378 + $0x40] sm:$0xff]
          %v3188 = vld [vmem:[%s378 + $0x48] sm:$0xff]
          %v3189 = vld [vmem:[%s378 + $0x50] sm:$0xff]
          %v3190 = vld [vmem:[%s378 + $0x58] sm:$0xff]
          %v3191 = vld [vmem:[%s378 + $0x60] sm:$0xff]
          %v3192 = vld [vmem:[%s378 + $0x68] sm:$0xff]
          %v3193 = vld [vmem:[%s378 + $0x70] sm:$0xff]
          %v3194 = vld [vmem:[%s378 + $0x78] sm:$0xff]
          %v3195 = vld [vmem:[%s378 + $0x80] sm:$0xff]
          %v3196 = vld [vmem:[%s378 + $0x88] sm:$0xff]
          %v3197 = vld [vmem:[%s378 + $0x90] sm:$0xff]
          %v3198 = vld [vmem:[%s378 + $0x98] sm:$0xff]
          %v3199 = vld [vmem:[%s378 + $0xa0] sm:$0xff]
          %v3200 = vld [vmem:[%s378 + $0xa8] sm:$0xff]
          %v3201 = vld [vmem:[%s378 + $0xb0] sm:$0xff]
          %v3202 = vld [vmem:[%s378 + $0xb8] sm:$0xff]
          %v3203 = vld [vmem:[%s378 + $0xc0] sm:$0xff]
          %v3204 = vld [vmem:[%s378 + $0xc8] sm:$0xff]
          %v3205 = vld [vmem:[%s378 + $0xd0] sm:$0xff]
          %v3206 = vld [vmem:[%s378 + $0xd8] sm:$0xff]
          %v3207 = vld [vmem:[%s378 + $0xe0] sm:$0xff]
          %v3208 = vld [vmem:[%s378 + $0xe8] sm:$0xff]
          %v3209 = vld [vmem:[%s378 + $0xf0] sm:$0xff]
          %v3210 = vld [vmem:[%s378 + $0xf8] sm:$0xff]
          %v3211 = vld [vmem:[%s378 + $0x100] sm:$0xff]
          %v3212 = vld [vmem:[%s378 + $0x108] sm:$0xff]
          %v3213 = vld [vmem:[%s378 + $0x110] sm:$0xff]
          %v3214 = vld [vmem:[%s378 + $0x118] sm:$0xff]
          %v3215 = vld [vmem:[%s378 + $0x120] sm:$0xff]
          %v3216 = vld [vmem:[%s378 + $0x128] sm:$0xff]
          %v3217 = vld [vmem:[%s378 + $0x130] sm:$0xff]
          %v3218 = vld [vmem:[%s378 + $0x138] sm:$0xff]
          %v3219 = vld [vmem:[%s378 + $0x140] sm:$0xff]
          %v3220 = vld [vmem:[%s378 + $0x148] sm:$0xff]
          %v3221 = vld [vmem:[%s378 + $0x150] sm:$0xff]
          %v3222 = vld [vmem:[%s378 + $0x158] sm:$0xff]
          %v3223 = vld [vmem:[%s378 + $0x160] sm:$0xff]
          %v3224 = vld [vmem:[%s378 + $0x168] sm:$0xff]
          %v3225 = vld [vmem:[%s378 + $0x170] sm:$0xff]
          %v3226 = vld [vmem:[%s378 + $0x178] sm:$0xff]
          %v3227 = vld [vmem:[%s378 + $0x180] sm:$0xff]
          %v3228 = vld [vmem:[%s378 + $0x188] sm:$0xff]
          %v3229 = vld [vmem:[%s378 + $0x190] sm:$0xff]
          %v3230 = vld [vmem:[%s378 + $0x198] sm:$0xff]
          %v3231 = vld [vmem:[%s378 + $0x1a0] sm:$0xff]
          %v3232 = vld [vmem:[%s378 + $0x1a8] sm:$0xff]
          %v3233 = vld [vmem:[%s378 + $0x1b0] sm:$0xff]
          %v3234 = vld [vmem:[%s378 + $0x1b8] sm:$0xff]
          %v3235 = vld [vmem:[%s378 + $0x1c0] sm:$0xff]
          %v3236 = vld [vmem:[%s378 + $0x1c8] sm:$0xff]
          %v3237 = vld [vmem:[%s378 + $0x1d0] sm:$0xff]
          %v3238 = vld [vmem:[%s378 + $0x1d8] sm:$0xff]
          %v3239 = vld [vmem:[%s378 + $0x1e0] sm:$0xff]
          %v3240 = vld [vmem:[%s378 + $0x1e8] sm:$0xff]
          %v3241 = vld [vmem:[%s378 + $0x1f0] sm:$0xff]
          %v3242 = vld [vmem:[%s378 + $0x1f8] sm:$0xff]
          %3244 = vset.pattern.permute.xlu0 0
          %3245 = vperm.xlu0 %3244, %v3179
          %v3246 = vpop.permute.xlu0 %3245
          %3249 = vset.pattern.permute.xlu0 0
          %3250 = vperm.xlu0 %3249, %v3180
          %v3251 = vpop.permute.xlu0 %3250
          %3254 = vset.pattern.permute.xlu0 0
          %3255 = vperm.xlu0 %3254, %v3181
          %v3256 = vpop.permute.xlu0 %3255
          %3259 = vset.pattern.permute.xlu0 0
          %3260 = vperm.xlu0 %3259, %v3182
          %v3261 = vpop.permute.xlu0 %3260
          %3264 = vset.pattern.permute.xlu0 0
          %3265 = vperm.xlu0 %3264, %v3183
          %v3266 = vpop.permute.xlu0 %3265
          %3269 = vset.pattern.permute.xlu0 0
          %3270 = vperm.xlu0 %3269, %v3184
          %v3271 = vpop.permute.xlu0 %3270
          %3274 = vset.pattern.permute.xlu0 0
          %3275 = vperm.xlu0 %3274, %v3185
          %v3276 = vpop.permute.xlu0 %3275
          %3279 = vset.pattern.permute.xlu0 0
          %3280 = vperm.xlu0 %3279, %v3186
          %v3281 = vpop.permute.xlu0 %3280
          %3284 = vset.pattern.permute.xlu0 0
          %3285 = vperm.xlu0 %3284, %v3187
          %v3286 = vpop.permute.xlu0 %3285
          %3289 = vset.pattern.permute.xlu0 0
          %3290 = vperm.xlu0 %3289, %v3188
          %v3291 = vpop.permute.xlu0 %3290
          %3294 = vset.pattern.permute.xlu0 0
          %3295 = vperm.xlu0 %3294, %v3189
          %v3296 = vpop.permute.xlu0 %3295
          %3299 = vset.pattern.permute.xlu0 0
          %3300 = vperm.xlu0 %3299, %v3190
          %v3301 = vpop.permute.xlu0 %3300
          %3304 = vset.pattern.permute.xlu0 0
          %3305 = vperm.xlu0 %3304, %v3191
          %v3306 = vpop.permute.xlu0 %3305
          %3309 = vset.pattern.permute.xlu0 0
          %3310 = vperm.xlu0 %3309, %v3192
          %v3311 = vpop.permute.xlu0 %3310
          %3314 = vset.pattern.permute.xlu0 0
          %3315 = vperm.xlu0 %3314, %v3193
          %v3316 = vpop.permute.xlu0 %3315
          %3319 = vset.pattern.permute.xlu0 0
          %3320 = vperm.xlu0 %3319, %v3194
          %v3321 = vpop.permute.xlu0 %3320
          %3324 = vset.pattern.permute.xlu0 0
          %3325 = vperm.xlu0 %3324, %v3195
          %v3326 = vpop.permute.xlu0 %3325
          %3329 = vset.pattern.permute.xlu0 0
          %3330 = vperm.xlu0 %3329, %v3196
          %v3331 = vpop.permute.xlu0 %3330
          %3334 = vset.pattern.permute.xlu0 0
          %3335 = vperm.xlu0 %3334, %v3197
          %v3336 = vpop.permute.xlu0 %3335
          %3339 = vset.pattern.permute.xlu0 0
          %3340 = vperm.xlu0 %3339, %v3198
          %v3341 = vpop.permute.xlu0 %3340
          %3344 = vset.pattern.permute.xlu0 0
          %3345 = vperm.xlu0 %3344, %v3199
          %v3346 = vpop.permute.xlu0 %3345
          %3349 = vset.pattern.permute.xlu0 0
          %3350 = vperm.xlu0 %3349, %v3200
          %v3351 = vpop.permute.xlu0 %3350
          %3354 = vset.pattern.permute.xlu0 0
          %3355 = vperm.xlu0 %3354, %v3201
          %v3356 = vpop.permute.xlu0 %3355
          %3359 = vset.pattern.permute.xlu0 0
          %3360 = vperm.xlu0 %3359, %v3202
          %v3361 = vpop.permute.xlu0 %3360
          %3364 = vset.pattern.permute.xlu0 0
          %3365 = vperm.xlu0 %3364, %v3203
          %v3366 = vpop.permute.xlu0 %3365
          %3369 = vset.pattern.permute.xlu0 0
          %3370 = vperm.xlu0 %3369, %v3204
          %v3371 = vpop.permute.xlu0 %3370
          %3374 = vset.pattern.permute.xlu0 0
          %3375 = vperm.xlu0 %3374, %v3205
          %v3376 = vpop.permute.xlu0 %3375
          %3379 = vset.pattern.permute.xlu0 0
          %3380 = vperm.xlu0 %3379, %v3206
          %v3381 = vpop.permute.xlu0 %3380
          %3384 = vset.pattern.permute.xlu0 0
          %3385 = vperm.xlu0 %3384, %v3207
          %v3386 = vpop.permute.xlu0 %3385
          %3389 = vset.pattern.permute.xlu0 0
          %3390 = vperm.xlu0 %3389, %v3208
          %v3391 = vpop.permute.xlu0 %3390
          %3394 = vset.pattern.permute.xlu0 0
          %3395 = vperm.xlu0 %3394, %v3209
          %v3396 = vpop.permute.xlu0 %3395
          %3399 = vset.pattern.permute.xlu0 0
          %3400 = vperm.xlu0 %3399, %v3210
          %v3401 = vpop.permute.xlu0 %3400
          %3404 = vset.pattern.permute.xlu0 0
          %3405 = vperm.xlu0 %3404, %v3211
          %v3406 = vpop.permute.xlu0 %3405
          %3409 = vset.pattern.permute.xlu0 0
          %3410 = vperm.xlu0 %3409, %v3212
          %v3411 = vpop.permute.xlu0 %3410
          %3414 = vset.pattern.permute.xlu0 0
          %3415 = vperm.xlu0 %3414, %v3213
          %v3416 = vpop.permute.xlu0 %3415
          %3419 = vset.pattern.permute.xlu0 0
          %3420 = vperm.xlu0 %3419, %v3214
          %v3421 = vpop.permute.xlu0 %3420
          %3424 = vset.pattern.permute.xlu0 0
          %3425 = vperm.xlu0 %3424, %v3215
          %v3426 = vpop.permute.xlu0 %3425
          %3429 = vset.pattern.permute.xlu0 0
          %3430 = vperm.xlu0 %3429, %v3216
          %v3431 = vpop.permute.xlu0 %3430
          %3434 = vset.pattern.permute.xlu0 0
          %3435 = vperm.xlu0 %3434, %v3217
          %v3436 = vpop.permute.xlu0 %3435
          %3439 = vset.pattern.permute.xlu0 0
          %3440 = vperm.xlu0 %3439, %v3218
          %v3441 = vpop.permute.xlu0 %3440
          %3444 = vset.pattern.permute.xlu0 0
          %3445 = vperm.xlu0 %3444, %v3219
          %v3446 = vpop.permute.xlu0 %3445
          %3449 = vset.pattern.permute.xlu0 0
          %3450 = vperm.xlu0 %3449, %v3220
          %v3451 = vpop.permute.xlu0 %3450
          %3454 = vset.pattern.permute.xlu0 0
          %3455 = vperm.xlu0 %3454, %v3221
          %v3456 = vpop.permute.xlu0 %3455
          %3459 = vset.pattern.permute.xlu0 0
          %3460 = vperm.xlu0 %3459, %v3222
          %v3461 = vpop.permute.xlu0 %3460
          %3464 = vset.pattern.permute.xlu0 0
          %3465 = vperm.xlu0 %3464, %v3223
          %v3466 = vpop.permute.xlu0 %3465
          %3469 = vset.pattern.permute.xlu0 0
          %3470 = vperm.xlu0 %3469, %v3224
          %v3471 = vpop.permute.xlu0 %3470
          %3474 = vset.pattern.permute.xlu0 0
          %3475 = vperm.xlu0 %3474, %v3225
          %v3476 = vpop.permute.xlu0 %3475
          %3479 = vset.pattern.permute.xlu0 0
          %3480 = vperm.xlu0 %3479, %v3226
          %v3481 = vpop.permute.xlu0 %3480
          %3484 = vset.pattern.permute.xlu0 0
          %3485 = vperm.xlu0 %3484, %v3227
          %v3486 = vpop.permute.xlu0 %3485
          %3489 = vset.pattern.permute.xlu0 0
          %3490 = vperm.xlu0 %3489, %v3228
          %v3491 = vpop.permute.xlu0 %3490
          %3494 = vset.pattern.permute.xlu0 0
          %3495 = vperm.xlu0 %3494, %v3229
          %v3496 = vpop.permute.xlu0 %3495
          %3499 = vset.pattern.permute.xlu0 0
          %3500 = vperm.xlu0 %3499, %v3230
          %v3501 = vpop.permute.xlu0 %3500
          %3504 = vset.pattern.permute.xlu0 0
          %3505 = vperm.xlu0 %3504, %v3231
          %v3506 = vpop.permute.xlu0 %3505
          %3509 = vset.pattern.permute.xlu0 0
          %3510 = vperm.xlu0 %3509, %v3232
          %v3511 = vpop.permute.xlu0 %3510
          %3514 = vset.pattern.permute.xlu0 0
          %3515 = vperm.xlu0 %3514, %v3233
          %v3516 = vpop.permute.xlu0 %3515
          %3519 = vset.pattern.permute.xlu0 0
          %3520 = vperm.xlu0 %3519, %v3234
          %v3521 = vpop.permute.xlu0 %3520
          %3524 = vset.pattern.permute.xlu0 0
          %3525 = vperm.xlu0 %3524, %v3235
          %v3526 = vpop.permute.xlu0 %3525
          %3529 = vset.pattern.permute.xlu0 0
          %3530 = vperm.xlu0 %3529, %v3236
          %v3531 = vpop.permute.xlu0 %3530
          %3534 = vset.pattern.permute.xlu0 0
          %3535 = vperm.xlu0 %3534, %v3237
          %v3536 = vpop.permute.xlu0 %3535
          %3539 = vset.pattern.permute.xlu0 0
          %3540 = vperm.xlu0 %3539, %v3238
          %v3541 = vpop.permute.xlu0 %3540
          %3544 = vset.pattern.permute.xlu0 0
          %3545 = vperm.xlu0 %3544, %v3239
          %v3546 = vpop.permute.xlu0 %3545
          %3549 = vset.pattern.permute.xlu0 0
          %3550 = vperm.xlu0 %3549, %v3240
          %v3551 = vpop.permute.xlu0 %3550
          %3554 = vset.pattern.permute.xlu0 0
          %3555 = vperm.xlu0 %3554, %v3241
          %v3556 = vpop.permute.xlu0 %3555
          %3559 = vset.pattern.permute.xlu0 0
          %3560 = vperm.xlu0 %3559, %v3242
          %v3561 = vpop.permute.xlu0 %3560
          %v3563 = vmul.f32 %v3115, %v3246
          %v3564 = vmul.f32 %v3116, %v3251
          %v3565 = vmul.f32 %v3117, %v3256
          %v3566 = vmul.f32 %v3118, %v3261
          %v3567 = vmul.f32 %v3119, %v3266
          %v3568 = vmul.f32 %v3120, %v3271
          %v3569 = vmul.f32 %v3121, %v3276
          %v3570 = vmul.f32 %v3122, %v3281
          %v3571 = vmul.f32 %v3123, %v3286
          %v3572 = vmul.f32 %v3124, %v3291
          %v3573 = vmul.f32 %v3125, %v3296
          %v3574 = vmul.f32 %v3126, %v3301
          %v3575 = vmul.f32 %v3127, %v3306
          %v3576 = vmul.f32 %v3128, %v3311
          %v3577 = vmul.f32 %v3129, %v3316
          %v3578 = vmul.f32 %v3130, %v3321
          %v3579 = vmul.f32 %v3131, %v3326
          %v3580 = vmul.f32 %v3132, %v3331
          %v3581 = vmul.f32 %v3133, %v3336
          %v3582 = vmul.f32 %v3134, %v3341
          %v3583 = vmul.f32 %v3135, %v3346
          %v3584 = vmul.f32 %v3136, %v3351
          %v3585 = vmul.f32 %v3137, %v3356
          %v3586 = vmul.f32 %v3138, %v3361
          %v3587 = vmul.f32 %v3139, %v3366
          %v3588 = vmul.f32 %v3140, %v3371
          %v3589 = vmul.f32 %v3141, %v3376
          %v3590 = vmul.f32 %v3142, %v3381
          %v3591 = vmul.f32 %v3143, %v3386
          %v3592 = vmul.f32 %v3144, %v3391
          %v3593 = vmul.f32 %v3145, %v3396
          %v3594 = vmul.f32 %v3146, %v3401
          %v3595 = vmul.f32 %v3147, %v3406
          %v3596 = vmul.f32 %v3148, %v3411
          %v3597 = vmul.f32 %v3149, %v3416
          %v3598 = vmul.f32 %v3150, %v3421
          %v3599 = vmul.f32 %v3151, %v3426
          %v3600 = vmul.f32 %v3152, %v3431
          %v3601 = vmul.f32 %v3153, %v3436
          %v3602 = vmul.f32 %v3154, %v3441
          %v3603 = vmul.f32 %v3155, %v3446
          %v3604 = vmul.f32 %v3156, %v3451
          %v3605 = vmul.f32 %v3157, %v3456
          %v3606 = vmul.f32 %v3158, %v3461
          %v3607 = vmul.f32 %v3159, %v3466
          %v3608 = vmul.f32 %v3160, %v3471
          %v3609 = vmul.f32 %v3161, %v3476
          %v3610 = vmul.f32 %v3162, %v3481
          %v3611 = vmul.f32 %v3163, %v3486
          %v3612 = vmul.f32 %v3164, %v3491
          %v3613 = vmul.f32 %v3165, %v3496
          %v3614 = vmul.f32 %v3166, %v3501
          %v3615 = vmul.f32 %v3167, %v3506
          %v3616 = vmul.f32 %v3168, %v3511
          %v3617 = vmul.f32 %v3169, %v3516
          %v3618 = vmul.f32 %v3170, %v3521
          %v3619 = vmul.f32 %v3171, %v3526
          %v3620 = vmul.f32 %v3172, %v3531
          %v3621 = vmul.f32 %v3173, %v3536
          %v3622 = vmul.f32 %v3174, %v3541
          %v3623 = vmul.f32 %v3175, %v3546
          %v3624 = vmul.f32 %v3176, %v3551
          %v3625 = vmul.f32 %v3177, %v3556
          %v3626 = vmul.f32 %v3178, %v3561
          %v3627 = vld [vmem:[#allocation7] sm:$0x1]
          %v3629 = vlaneseq
          %v3630 = vshrl.u32 %v3629, 7
          %v3631 = vsub.s32 0, %v3630
          %v3632 = vrot.slane %v3627, %v3631
          %v3634 = vadd.f32 %v3563, %v3632
          %v3635 = vadd.f32 %v3564, %v3632
          %v3636 = vadd.f32 %v3565, %v3632
          %v3637 = vadd.f32 %v3566, %v3632
          %v3638 = vadd.f32 %v3567, %v3632
          %v3639 = vadd.f32 %v3568, %v3632
          %v3640 = vadd.f32 %v3569, %v3632
          %v3641 = vadd.f32 %v3570, %v3632
          %v3642 = vadd.f32 %v3571, %v3632
          %v3643 = vadd.f32 %v3572, %v3632
          %v3644 = vadd.f32 %v3573, %v3632
          %v3645 = vadd.f32 %v3574, %v3632
          %v3646 = vadd.f32 %v3575, %v3632
          %v3647 = vadd.f32 %v3576, %v3632
          %v3648 = vadd.f32 %v3577, %v3632
          %v3649 = vadd.f32 %v3578, %v3632
          %v3650 = vadd.f32 %v3579, %v3632
          %v3651 = vadd.f32 %v3580, %v3632
          %v3652 = vadd.f32 %v3581, %v3632
          %v3653 = vadd.f32 %v3582, %v3632
          %v3654 = vadd.f32 %v3583, %v3632
          %v3655 = vadd.f32 %v3584, %v3632
          %v3656 = vadd.f32 %v3585, %v3632
          %v3657 = vadd.f32 %v3586, %v3632
          %v3658 = vadd.f32 %v3587, %v3632
          %v3659 = vadd.f32 %v3588, %v3632
          %v3660 = vadd.f32 %v3589, %v3632
          %v3661 = vadd.f32 %v3590, %v3632
          %v3662 = vadd.f32 %v3591, %v3632
          %v3663 = vadd.f32 %v3592, %v3632
          %v3664 = vadd.f32 %v3593, %v3632
          %v3665 = vadd.f32 %v3594, %v3632
          %v3666 = vadd.f32 %v3595, %v3632
          %v3667 = vadd.f32 %v3596, %v3632
          %v3668 = vadd.f32 %v3597, %v3632
          %v3669 = vadd.f32 %v3598, %v3632
          %v3670 = vadd.f32 %v3599, %v3632
          %v3671 = vadd.f32 %v3600, %v3632
          %v3672 = vadd.f32 %v3601, %v3632
          %v3673 = vadd.f32 %v3602, %v3632
          %v3674 = vadd.f32 %v3603, %v3632
          %v3675 = vadd.f32 %v3604, %v3632
          %v3676 = vadd.f32 %v3605, %v3632
          %v3677 = vadd.f32 %v3606, %v3632
          %v3678 = vadd.f32 %v3607, %v3632
          %v3679 = vadd.f32 %v3608, %v3632
          %v3680 = vadd.f32 %v3609, %v3632
          %v3681 = vadd.f32 %v3610, %v3632
          %v3682 = vadd.f32 %v3611, %v3632
          %v3683 = vadd.f32 %v3612, %v3632
          %v3684 = vadd.f32 %v3613, %v3632
          %v3685 = vadd.f32 %v3614, %v3632
          %v3686 = vadd.f32 %v3615, %v3632
          %v3687 = vadd.f32 %v3616, %v3632
          %v3688 = vadd.f32 %v3617, %v3632
          %v3689 = vadd.f32 %v3618, %v3632
          %v3690 = vadd.f32 %v3619, %v3632
          %v3691 = vadd.f32 %v3620, %v3632
          %v3692 = vadd.f32 %v3621, %v3632
          %v3693 = vadd.f32 %v3622, %v3632
          %v3694 = vadd.f32 %v3623, %v3632
          %v3695 = vadd.f32 %v3624, %v3632
          %v3696 = vadd.f32 %v3625, %v3632
          %v3697 = vadd.f32 %v3626, %v3632
          %3698 = vst [vmem:[%s359] sm:$0xff] %v3634
          %3699 = vst [vmem:[%s359 + $0x8] sm:$0xff] %v3635
          %3700 = vst [vmem:[%s359 + $0x10] sm:$0xff] %v3636
          %3701 = vst [vmem:[%s359 + $0x18] sm:$0xff] %v3637
          %3702 = vst [vmem:[%s359 + $0x20] sm:$0xff] %v3638
          %3703 = vst [vmem:[%s359 + $0x28] sm:$0xff] %v3639
          %3704 = vst [vmem:[%s359 + $0x30] sm:$0xff] %v3640
          %3705 = vst [vmem:[%s359 + $0x38] sm:$0xff] %v3641
          %3706 = vst [vmem:[%s359 + $0x40] sm:$0xff] %v3642
          %3707 = vst [vmem:[%s359 + $0x48] sm:$0xff] %v3643
          %3708 = vst [vmem:[%s359 + $0x50] sm:$0xff] %v3644
          %3709 = vst [vmem:[%s359 + $0x58] sm:$0xff] %v3645
          %3710 = vst [vmem:[%s359 + $0x60] sm:$0xff] %v3646
          %3711 = vst [vmem:[%s359 + $0x68] sm:$0xff] %v3647
          %3712 = vst [vmem:[%s359 + $0x70] sm:$0xff] %v3648
          %3713 = vst [vmem:[%s359 + $0x78] sm:$0xff] %v3649
          %3714 = vst [vmem:[%s359 + $0x80] sm:$0xff] %v3650
          %3715 = vst [vmem:[%s359 + $0x88] sm:$0xff] %v3651
          %3716 = vst [vmem:[%s359 + $0x90] sm:$0xff] %v3652
          %3717 = vst [vmem:[%s359 + $0x98] sm:$0xff] %v3653
          %3718 = vst [vmem:[%s359 + $0xa0] sm:$0xff] %v3654
          %3719 = vst [vmem:[%s359 + $0xa8] sm:$0xff] %v3655
          %3720 = vst [vmem:[%s359 + $0xb0] sm:$0xff] %v3656
          %3721 = vst [vmem:[%s359 + $0xb8] sm:$0xff] %v3657
          %3722 = vst [vmem:[%s359 + $0xc0] sm:$0xff] %v3658
          %3723 = vst [vmem:[%s359 + $0xc8] sm:$0xff] %v3659
          %3724 = vst [vmem:[%s359 + $0xd0] sm:$0xff] %v3660
          %3725 = vst [vmem:[%s359 + $0xd8] sm:$0xff] %v3661
          %3726 = vst [vmem:[%s359 + $0xe0] sm:$0xff] %v3662
          %3727 = vst [vmem:[%s359 + $0xe8] sm:$0xff] %v3663
          %3728 = vst [vmem:[%s359 + $0xf0] sm:$0xff] %v3664
          %3729 = vst [vmem:[%s359 + $0xf8] sm:$0xff] %v3665
          %3730 = vst [vmem:[%s359 + $0x100] sm:$0xff] %v3666
          %3731 = vst [vmem:[%s359 + $0x108] sm:$0xff] %v3667
          %3732 = vst [vmem:[%s359 + $0x110] sm:$0xff] %v3668
          %3733 = vst [vmem:[%s359 + $0x118] sm:$0xff] %v3669
          %3734 = vst [vmem:[%s359 + $0x120] sm:$0xff] %v3670
          %3735 = vst [vmem:[%s359 + $0x128] sm:$0xff] %v3671
          %3736 = vst [vmem:[%s359 + $0x130] sm:$0xff] %v3672
          %3737 = vst [vmem:[%s359 + $0x138] sm:$0xff] %v3673
          %3738 = vst [vmem:[%s359 + $0x140] sm:$0xff] %v3674
          %3739 = vst [vmem:[%s359 + $0x148] sm:$0xff] %v3675
          %3740 = vst [vmem:[%s359 + $0x150] sm:$0xff] %v3676
          %3741 = vst [vmem:[%s359 + $0x158] sm:$0xff] %v3677
          %3742 = vst [vmem:[%s359 + $0x160] sm:$0xff] %v3678
          %3743 = vst [vmem:[%s359 + $0x168] sm:$0xff] %v3679
          %3744 = vst [vmem:[%s359 + $0x170] sm:$0xff] %v3680
          %3745 = vst [vmem:[%s359 + $0x178] sm:$0xff] %v3681
          %3746 = vst [vmem:[%s359 + $0x180] sm:$0xff] %v3682
          %3747 = vst [vmem:[%s359 + $0x188] sm:$0xff] %v3683
          %3748 = vst [vmem:[%s359 + $0x190] sm:$0xff] %v3684
          %3749 = vst [vmem:[%s359 + $0x198] sm:$0xff] %v3685
          %3750 = vst [vmem:[%s359 + $0x1a0] sm:$0xff] %v3686
          %3751 = vst [vmem:[%s359 + $0x1a8] sm:$0xff] %v3687
          %3752 = vst [vmem:[%s359 + $0x1b0] sm:$0xff] %v3688
          %3753 = vst [vmem:[%s359 + $0x1b8] sm:$0xff] %v3689
          %3754 = vst [vmem:[%s359 + $0x1c0] sm:$0xff] %v3690
          %3755 = vst [vmem:[%s359 + $0x1c8] sm:$0xff] %v3691
          %3756 = vst [vmem:[%s359 + $0x1d0] sm:$0xff] %v3692
          %3757 = vst [vmem:[%s359 + $0x1d8] sm:$0xff] %v3693
          %3758 = vst [vmem:[%s359 + $0x1e0] sm:$0xff] %v3694
          %3759 = vst [vmem:[%s359 + $0x1e8] sm:$0xff] %v3695
          %3760 = vst [vmem:[%s359 + $0x1f0] sm:$0xff] %v3696
          %3761 = vst [vmem:[%s359 + $0x1f8] sm:$0xff] %v3697
        $region64: #{tpu_custom_call.1} parent=43 // pred_fallthru
          _
        %s3762 = sand.u32 %s192, 1
        %s3763 = scalar_lea.sflag [#allocation4], %s3762
        %s3764 = sand.u32 %s192, 1
        %s3765 = smul.addr %s3764, 512
        %s3766 = scalar_lea.vmem [#allocation8], %s3765
        // Predicated region
        $region65: #{tpu_custom_call.1} parent=43 // pred_check
          %p3767 = pneg %p202
        $region66: #{tpu_custom_call.1} parent=43 // pred_check_branch
          %3769 = sbr.rel (%p3767) target = $region68
        $region67: #{tpu_custom_call.1} parent=43 // pred_region
          %s3770 = smul.u32 64, %s28
          %s3772 = ssub.s32 8192, 8192
          %3773 = vsyncadd %s3763, %s3772
          %s3774 = smul.addr %s3770, 128
          %s3775 = scalar_lea.hbm %s6, %s3774
          %s3776 = sshll.u32 %s3766, 4
          %s3777 = int_to_ptr.vmem [resolvable:$true] %s3776
          %3782 = dma.vmem_to_hbm [thread:$0]  %s3777, 8192, %s3775, %s3763, 128, 128, 8
        $region68: #{tpu_custom_call.1} parent=43 // pred_fallthru
          _
      $region44: #{tpu_custom_call.1} parent=5 // pred_fallthru
        _
      %p3783 = scmp.le.s32.totalorder 2, %s19
      // Predicated region
      $region69: #{tpu_custom_call.1} parent=5 // pred_check
        %p3784 = pneg %p3783
      $region70: #{tpu_custom_call.1} parent=5 // pred_check_branch
        %3786 = sbr.rel (%p3784) target = $region72
      $region71: #{tpu_custom_call.1} parent=5 // pred_region
        %s3787 = ssub.s32 %s19, 2
        // Predicated region
        $region73: #{tpu_custom_call.1} parent=71 // pred_check
          %p3788 = pneg %p208
        $region74: #{tpu_custom_call.1} parent=71 // pred_check_branch
          %3790 = sbr.rel (%p3788) target = $region76
        $region75: #{tpu_custom_call.1} parent=71 // pred_region
          %s3791 = sand.u32 %s193, 1
          %s3792 = scalar_lea.sflag [#allocation4], %s3791
          %s3793 = sand.u32 %s193, 1
          %s3794 = smul.addr %s3793, 512
          %s3795 = scalar_lea.vmem [#allocation8], %s3794
          %3796 = dma.done %s3792, 8192
        $region76: #{tpu_custom_call.1} parent=71 // pred_fallthru
          _
      $region72: #{tpu_custom_call.1} parent=5 // pred_fallthru
        _
    $region6: #{tpu_custom_call.1} parent=1 // loop_footer
      %s23 = sadd.s32 1, %s19
    $region7: #{tpu_custom_call.1} parent=1 // loop_footer_branch
      %18 = sbr.rel target = $region3
    $region8: #{tpu_custom_call.1} parent=1 // loop_exit
      _
    %3797 = vsyncpa [#allocation3], 1
    %s3798 = scalar_lea.sflag [#allocation3], 1
    %3799 = vsyncpa %s3798, 1
    %3800 = vsyncpa [#allocation6], 1
    %3801 = vsyncpa [#allocation4], 1
    %s3802 = scalar_lea.sflag [#allocation4], 1
    %3803 = vsyncpa %s3802, 1

</llo_original>
